<compile_context>
chip_gen: v7x
topology: tpu7x:2x2x1
jax: 0.10.0
libtpu: 0.0.40
codegen_flags: <defaults>
</compile_context>

<pallas_src>
import numpy as np

import jax
import jax.numpy as jnp
from jax import lax
from jax.experimental import pallas as pl
from jax.experimental.pallas import tpu as pltpu


# ----------------------------------------------------------------------------
# Pallas kernel: entire forward pass (3 convs + trunk + fused dueling head)
# ----------------------------------------------------------------------------
def _fused_dqn_kernel(x_ref,
                      w1, b1, w2, b2, w3, b3, w4, b4, wh1, bh1, wq, bq,
                      q_ref):
    def mm(a, w_ref, b_ref):
        return jnp.dot(a, w_ref[...], preferred_element_type=jnp.float32) + b_ref[...]

    def mm_relu(a, w_ref, b_ref):
        return jnp.maximum(mm(a, w_ref, b_ref), 0.0).astype(jnp.bfloat16)

    # In-kernel f32 -> bf16 cast (VPU, hidden under DMA/MXU slack).
    t = x_ref[...].astype(jnp.bfloat16)   # (bm, C*H*W)
    t = mm_relu(t, w1, b1)                # conv1 (unfolded, padded)  -> (bm, 896)
    t = mm_relu(t, w2, b2)                # conv2 (unfolded, padded)  -> (bm, 384)
    t = mm_relu(t, w3, b3)                # conv3 (unfolded, padded)  -> (bm, 128)
    t = mm_relu(t, w4, b4)                # trunk linear              -> (bm, 256)
    h = mm_relu(t, wh1, bh1)              # [adv_hidden | val_hidden] -> (bm, 1024)
    # Dueling combine is baked into (wq, bq): this single matmul IS
    # q = v + a - mean(a).  Tail = one MXU op + store.
    q_ref[...] = mm(h, wq, bq)            # (bm, n_actions) f32


def _pick_bm(batch):
    """Batch tile: whole batch for tiny B; >=2 grid steps once B > 64 so the
    'parallel' grid axis shards across both v7x TensorCores; cap at 256 rows."""
    if batch <= 64:
        return batch
    bm = ((pl.cdiv(batch, 2) + 7) // 8) * 8
    return min(bm, 256)


def dueling_dqn_forward(packed, state_t):
    """state_t: (B, C, H, W) float32 NCHW -> qvalues (B, n_actions) float32."""
    B = state_t.shape[0]
    x = state_t.reshape(B, -1)                      # f32; cast happens in-kernel
    weights, biases = packed["weights"], packed["biases"]
    n_actions = weights[-1].shape[1]
    k0 = x.shape[1]

    bm = _pick_bm(B)
    grid = (pl.cdiv(B, bm),)

    in_specs = [pl.BlockSpec((bm, k0), lambda i: (i, 0))]
    args = [x]
    for w, b in zip(weights, biases):
        # Constant index_map: weights/biases stay VMEM-resident across steps.
        in_specs.append(pl.BlockSpec(w.shape, lambda i: (0, 0)))
        in_specs.append(pl.BlockSpec(b.shape, lambda i: (0, 0)))
        args.append(w)
        args.append(b)
    out_spec = pl.BlockSpec((bm, n_actions), lambda i: (i, 0))

    macs = sum(int(w.shape[0]) * int(w.shape[1]) for w in weights)
    cost = pl.CostEstimate(
        flops=2 * B * macs,                       # advisory (counts unfolded MACs)
        transcendentals=0,
        bytes_accessed=2 * macs + x.size * 4 + B * n_actions * 4,
    )

    return pl.pallas_call(
        _fused_dqn_kernel,
        out_shape=jax.ShapeDtypeStruct((B, n_actions), jnp.float32),
        grid=grid,
        in_specs=in_specs,
        out_specs=out_spec,
        compiler_params=pltpu.CompilerParams(
            dimension_semantics=("parallel",),
            vmem_limit_bytes=32 * 1024 * 1024,    # headroom for big bm on v5e
        ),
        cost_estimate=cost,
    )(*args)


# ----------------------------------------------------------------------------
# Parameter init (PyTorch-like) and matmul-ready packing
# ----------------------------------------------------------------------------
def conv2d_size_out(size, kernel_size, stride):
    return (size - (kernel_size - 1) - 1) // stride + 1


def _unfold_conv(w, b, h_in, w_in, stride):
    """Exact dense equivalent of a VALID stride-`stride` conv.

    Returns (Wd, bd, h_out, w_out) with Wd of shape (Cin*H*W, Cout*Ho*Wo) such
    that conv(x).reshape(B,-1) == x.reshape(B,-1) @ Wd + bd  (NCHW flattening
    on both sides, matching PyTorch's .view).
    """
    w = np.asarray(w, np.float32)
    b = np.asarray(b, np.float32)
    cout, cin, k, _ = w.shape
    h_out = conv2d_size_out(h_in, k, stride)
    w_out = conv2d_size_out(w_in, k, stride)
    m = np.zeros((cin, h_in, w_in, cout, h_out, w_out), np.float32)
    for ho in range(h_out):
        for wo in range(w_out):
            for kh in range(k):
                for kw in range(k):
                    m[:, ho * stride + kh, wo * stride + kw, :, ho, wo] += w[:, :, kh, kw].T
    wd = m.reshape(cin * h_in * w_in, cout * h_out * w_out)
    bd = np.repeat(b, h_out * w_out)
    return wd, bd, h_out, w_out


def _round_up(n, m=128):
    return ((n + m - 1) // m) * m


def _pad2d(w, rows, cols):
    out = np.zeros((rows, cols), np.float32)
    out[: w.shape[0], : w.shape[1]] = w
    return out


def _pad1d(b, n):
    out = np.zeros((n,), np.float32)
    out[: b.shape[0]] = b
    return out


def init_conv(key, cout, cin, k):
    kw, kb = jax.random.split(key)
    bound = 1.0 / (cin * k * k) ** 0.5
    w = jax.random.uniform(kw, (cout, cin, k, k), jnp.float32, -bound, bound)
    b = jax.random.uniform(kb, (cout,), jnp.float32, -bound, bound)
    return w, b


def init_linear(key, fan_in, fan_out):
    kw, kb = jax.random.split(key)
    bound = 1.0 / fan_in ** 0.5
    w = jax.random.uniform(kw, (fan_in, fan_out), jnp.float32, -bound, bound)
    b = jax.random.uniform(kb, (fan_out,), jnp.float32, -bound, bound)
    return w, b


def init_params(key, state_shape, n_actions):
    k = 3
    keys = jax.random.split(key, 8)
    c, h, w = state_shape
    p = {}
    p["cw1"], p["cb1"] = init_conv(keys[0], 16, c, k)
    h1, w1 = conv2d_size_out(h, k, 2), conv2d_size_out(w, k, 2)
    p["cw2"], p["cb2"] = init_conv(keys[1], 32, 16, k)
    h2, w2 = conv2d_size_out(h1, k, 2), conv2d_size_out(w1, k, 2)
    p["cw3"], p["cb3"] = init_conv(keys[2], 64, 32, k)
    h3, w3 = conv2d_size_out(h2, k, 2), conv2d_size_out(w2, k, 2)
    flat_dim = 64 * h3 * w3
    p["w4"], p["b4"] = init_linear(keys[3], flat_dim, 256)
    p["wa1"], p["ba1"] = init_linear(keys[4], 256, 512)
    p["wa2"], p["ba2"] = init_linear(keys[5], 512, n_actions)
    p["wv1"], p["bv1"] = init_linear(keys[6], 256, 512)
    p["wv2"], p["bv2"] = init_linear(keys[7], 512, 1)
    return p


def pack_params(p, state_shape, n_actions):
    """One-time packing into the fused kernel's matmul-ready bf16 layout:
    unfolded convs, 128-aligned widths, fused hidden heads, and the dueling
    combine folded into the last weight matrix."""
    _, h, w = state_shape
    w1u, b1u, h, w = _unfold_conv(p["cw1"], p["cb1"], h, w, 2)
    w2u, b2u, h, w = _unfold_conv(p["cw2"], p["cb2"], h, w, 2)
    w3u, b3u, h, w = _unfold_conv(p["cw3"], p["cb3"], h, w, 2)
    w4 = np.asarray(p["w4"], np.float32)
    b4 = np.asarray(p["b4"], np.float32)

    # Lane-align the unfolded conv widths (784->896, 288->384, 64->128): zero
    # columns + zero bias entries, and zero rows in the consumer's K dim keep
    # the result exact (ReLU(0) = 0, zero rows contribute nothing).
    k0 = w1u.shape[0]                       # C*H*W (1024, already 128-aligned)
    n1 = _round_up(w1u.shape[1])
    n2 = _round_up(w2u.shape[1])
    n3 = _round_up(w3u.shape[1])
    w1p, b1p = _pad2d(w1u, k0, n1), _pad1d(b1u, n1)
    w2p, b2p = _pad2d(w2u, n1, n2), _pad1d(b2u, n2)
    w3p, b3p = _pad2d(w3u, n2, n3), _pad1d(b3u, n3)
    w4p, b4p = _pad2d(w4, n3, w4.shape[1]), b4

    # Fused dueling hidden layer: hidden = [adv_hidden | val_hidden].
    wa1, ba1 = np.asarray(p["wa1"], np.float32), np.asarray(p["ba1"], np.float32)
    wv1, bv1 = np.asarray(p["wv1"], np.float32), np.asarray(p["bv1"], np.float32)
    wa2, ba2 = np.asarray(p["wa2"], np.float32), np.asarray(p["ba2"], np.float32)
    wv2, bv2 = np.asarray(p["wv2"], np.float32), np.asarray(p["bv2"], np.float32)
    wh1 = np.concatenate([wa1, wv1], axis=1)            # (256, 1024)
    bh1 = np.concatenate([ba1, bv1])                     # (1024,)

    # Folded dueling combine:  q = v + a - mean(a)  ==  h @ Wq + bq
    #   Wq[:512, j] = wa2[:, j] - mean_k wa2[:, k]
    #   Wq[512:, j] = wv2[:, 0]
    #   bq[j]       = ba2[j] - mean(ba2) + bv2[0]
    wa2c = wa2 - wa2.mean(axis=1, keepdims=True)         # (512, A)
    wv2b = np.tile(wv2, (1, n_actions))                  # (512, A)
    wq = np.concatenate([wa2c, wv2b], axis=0)            # (1024, A)
    bq = ba2 - ba2.mean() + bv2[0]                       # (A,)

    weights = [w1p, w2p, w3p, w4p, wh1, wq]
    biases = [b1p, b2p, b3p, b4p, bh1, bq]
    return {
        "weights": tuple(jnp.asarray(wt, jnp.bfloat16) for wt in weights),
        "biases": tuple(jnp.asarray(bs, jnp.float32).reshape(1, -1) for bs in biases),
    }


# ----------------------------------------------------------------------------
# Pure-JAX f32 reference of the original PyTorch module (for validation only)
# ----------------------------------------------------------------------------
def reference_forward(p, x):
    t = x
    for i in (1, 2, 3):
        cw, cb = p[f"cw{i}"], p[f"cb{i}"]
        t = lax.conv_general_dilated(t, cw, (2, 2), "VALID",
                                     dimension_numbers=("NCHW", "OIHW", "NCHW"))
        t = jnp.maximum(t + cb[None, :, None, None], 0.0)
    t = t.reshape(x.shape[0], -1)
    t = jnp.maximum(t @ p["w4"] + p["b4"], 0.0)
    ha = jnp.maximum(t @ p["wa1"] + p["ba1"], 0.0)
    adv = ha @ p["wa2"] + p["ba2"]
    hv = jnp.maximum(t @ p["wv1"] + p["bv1"], 0.0)
    val = hv @ p["wv2"] + p["bv2"]
    return val + adv - adv.mean(axis=1, keepdims=True)


if __name__ == "__main__":
    # Small shapes consistent with the module: 4 stacked frames, 16x16 spatial.
    batch = 2
    n_actions = 4                         # Breakout action count
    state_shape = (4, 16, 16)

    key = jax.random.PRNGKey(0)
    k_param, k_x = jax.random.split(key)
    params = init_params(k_param, state_shape, n_actions)
    packed = pack_params(params, state_shape, n_actions)
    x = jax.random.uniform(k_x, (batch,) + state_shape, jnp.float32)  # obs in [0,1)

    qvalues = jax.block_until_ready(jax.jit(dueling_dqn_forward)(packed, x))

    assert qvalues.shape == (batch, n_actions), qvalues.shape
    assert qvalues.dtype == jnp.float32

    # Validate against the pure-JAX f32 reference (kernel uses bf16 operands).
    q_ref = jax.block_until_ready(jax.jit(reference_forward)(params, x))
    max_err = float(jnp.max(jnp.abs(qvalues - q_ref)))
    assert max_err < 5e-2, f"max abs err vs reference: {max_err}"

    print("KERNEL_OK")
</pallas_src>

<mosaic_0001>
module attributes {stable_mosaic.version = 11 : i64} {
  func.func @_fused_dqn_kernel(%arg0: i32, %arg1: memref<2x1024xf32, #tpu.memory_space<vmem>>, %arg2: memref<1024x896xbf16, #tpu.memory_space<vmem>>, %arg3: memref<1x896xf32, #tpu.memory_space<vmem>>, %arg4: memref<896x384xbf16, #tpu.memory_space<vmem>>, %arg5: memref<1x384xf32, #tpu.memory_space<vmem>>, %arg6: memref<384x128xbf16, #tpu.memory_space<vmem>>, %arg7: memref<1x128xf32, #tpu.memory_space<vmem>>, %arg8: memref<128x256xbf16, #tpu.memory_space<vmem>>, %arg9: memref<1x256xf32, #tpu.memory_space<vmem>>, %arg10: memref<256x1024xbf16, #tpu.memory_space<vmem>>, %arg11: memref<1x1024xf32, #tpu.memory_space<vmem>>, %arg12: memref<1024x4xbf16, #tpu.memory_space<vmem>>, %arg13: memref<1x4xf32, #tpu.memory_space<vmem>>, %arg14: memref<2x4xf32, #tpu.memory_space<vmem>>) attributes {dimension_semantics = [#tpu.dimension_semantics<parallel>], iteration_bounds = array<i64: 1>, scalar_prefetch = 0 : i64, scratch_operands = 0 : i64, tpu.core_type = #tpu.core_type<tc>, window_params = [{transform_indices = @transform_0, window_bounds = array<i64: 2, 1024>}, {pipeline_mode = #tpu.pipeline_mode<synchronous>, transform_indices = @transform_1, window_bounds = array<i64: 1024, 896>}, {pipeline_mode = #tpu.pipeline_mode<synchronous>, transform_indices = @transform_2, window_bounds = array<i64: 1, 896>}, {pipeline_mode = #tpu.pipeline_mode<synchronous>, transform_indices = @transform_3, window_bounds = array<i64: 896, 384>}, {pipeline_mode = #tpu.pipeline_mode<synchronous>, transform_indices = @transform_4, window_bounds = array<i64: 1, 384>}, {pipeline_mode = #tpu.pipeline_mode<synchronous>, transform_indices = @transform_5, window_bounds = array<i64: 384, 128>}, {pipeline_mode = #tpu.pipeline_mode<synchronous>, transform_indices = @transform_6, window_bounds = array<i64: 1, 128>}, {pipeline_mode = #tpu.pipeline_mode<synchronous>, transform_indices = @transform_7, window_bounds = array<i64: 128, 256>}, {pipeline_mode = #tpu.pipeline_mode<synchronous>, transform_indices = @transform_8, window_bounds = array<i64: 1, 256>}, {pipeline_mode = #tpu.pipeline_mode<synchronous>, transform_indices = @transform_9, window_bounds = array<i64: 256, 1024>}, {pipeline_mode = #tpu.pipeline_mode<synchronous>, transform_indices = @transform_10, window_bounds = array<i64: 1, 1024>}, {pipeline_mode = #tpu.pipeline_mode<synchronous>, transform_indices = @transform_11, window_bounds = array<i64: 1024, 4>}, {pipeline_mode = #tpu.pipeline_mode<synchronous>, transform_indices = @transform_12, window_bounds = array<i64: 1, 4>}, {transform_indices = @transform_13, window_bounds = array<i64: 2, 4>}]} {
    %c0 = arith.constant 0 : index
    %c0_0 = arith.constant 0 : index
    %0 = vector.load %arg1[%c0, %c0_0] : memref<2x1024xf32, #tpu.memory_space<vmem>>, vector<2x1024xf32>
    %1 = arith.truncf %0 : vector<2x1024xf32> to vector<2x1024xbf16>
    %c0_1 = arith.constant 0 : index
    %c0_2 = arith.constant 0 : index
    %2 = vector.load %arg2[%c0_1, %c0_2] : memref<1024x896xbf16, #tpu.memory_space<vmem>>, vector<1024x896xbf16>
    %cst = arith.constant dense<0.000000e+00> : vector<2x896xf32>
    %3 = tpu.matmul %1, %2, %cst {dimension_numbers = #tpu.dot_dimension_numbers<[1], [0], [0], [1], [0, 0, 1, 1], [], []>} : vector<2x1024xbf16>, vector<1024x896xbf16>, vector<2x896xf32> -> vector<2x896xf32>
    %c0_3 = arith.constant 0 : index
    %c0_4 = arith.constant 0 : index
    %4 = vector.load %arg3[%c0_3, %c0_4] : memref<1x896xf32, #tpu.memory_space<vmem>>, vector<1x896xf32>
    %5 = vector.broadcast %4 : vector<1x896xf32> to vector<2x896xf32>
    %6 = arith.addf %3, %5 : vector<2x896xf32>
    %cst_5 = arith.constant 0.000000e+00 : f32
    %7 = vector.broadcast %cst_5 : f32 to vector<2x896xf32>
    %8 = arith.maximumf %6, %7 : vector<2x896xf32>
    %9 = arith.truncf %8 : vector<2x896xf32> to vector<2x896xbf16>
    %c0_6 = arith.constant 0 : index
    %c0_7 = arith.constant 0 : index
    %10 = vector.load %arg4[%c0_6, %c0_7] : memref<896x384xbf16, #tpu.memory_space<vmem>>, vector<896x384xbf16>
    %cst_8 = arith.constant dense<0.000000e+00> : vector<2x384xf32>
    %11 = tpu.matmul %9, %10, %cst_8 {dimension_numbers = #tpu.dot_dimension_numbers<[1], [0], [0], [1], [0, 0, 1, 1], [], []>} : vector<2x896xbf16>, vector<896x384xbf16>, vector<2x384xf32> -> vector<2x384xf32>
    %c0_9 = arith.constant 0 : index
    %c0_10 = arith.constant 0 : index
    %12 = vector.load %arg5[%c0_9, %c0_10] : memref<1x384xf32, #tpu.memory_space<vmem>>, vector<1x384xf32>
    %13 = vector.broadcast %12 : vector<1x384xf32> to vector<2x384xf32>
    %14 = arith.addf %11, %13 : vector<2x384xf32>
    %cst_11 = arith.constant 0.000000e+00 : f32
    %15 = vector.broadcast %cst_11 : f32 to vector<2x384xf32>
    %16 = arith.maximumf %14, %15 : vector<2x384xf32>
    %17 = arith.truncf %16 : vector<2x384xf32> to vector<2x384xbf16>
    %c0_12 = arith.constant 0 : index
    %c0_13 = arith.constant 0 : index
    %18 = vector.load %arg6[%c0_12, %c0_13] : memref<384x128xbf16, #tpu.memory_space<vmem>>, vector<384x128xbf16>
    %cst_14 = arith.constant dense<0.000000e+00> : vector<2x128xf32>
    %19 = tpu.matmul %17, %18, %cst_14 {dimension_numbers = #tpu.dot_dimension_numbers<[1], [0], [0], [1], [0, 0, 1, 1], [], []>} : vector<2x384xbf16>, vector<384x128xbf16>, vector<2x128xf32> -> vector<2x128xf32>
    %c0_15 = arith.constant 0 : index
    %c0_16 = arith.constant 0 : index
    %20 = vector.load %arg7[%c0_15, %c0_16] : memref<1x128xf32, #tpu.memory_space<vmem>>, vector<1x128xf32>
    %21 = vector.broadcast %20 : vector<1x128xf32> to vector<2x128xf32>
    %22 = arith.addf %19, %21 : vector<2x128xf32>
    %cst_17 = arith.constant 0.000000e+00 : f32
    %23 = vector.broadcast %cst_17 : f32 to vector<2x128xf32>
    %24 = arith.maximumf %22, %23 : vector<2x128xf32>
    %25 = arith.truncf %24 : vector<2x128xf32> to vector<2x128xbf16>
    %c0_18 = arith.constant 0 : index
    %c0_19 = arith.constant 0 : index
    %26 = vector.load %arg8[%c0_18, %c0_19] : memref<128x256xbf16, #tpu.memory_space<vmem>>, vector<128x256xbf16>
    %cst_20 = arith.constant dense<0.000000e+00> : vector<2x256xf32>
    %27 = tpu.matmul %25, %26, %cst_20 {dimension_numbers = #tpu.dot_dimension_numbers<[1], [0], [0], [1], [0, 0, 1, 1], [], []>} : vector<2x128xbf16>, vector<128x256xbf16>, vector<2x256xf32> -> vector<2x256xf32>
    %c0_21 = arith.constant 0 : index
    %c0_22 = arith.constant 0 : index
    %28 = vector.load %arg9[%c0_21, %c0_22] : memref<1x256xf32, #tpu.memory_space<vmem>>, vector<1x256xf32>
    %29 = vector.broadcast %28 : vector<1x256xf32> to vector<2x256xf32>
    %30 = arith.addf %27, %29 : vector<2x256xf32>
    %cst_23 = arith.constant 0.000000e+00 : f32
    %31 = vector.broadcast %cst_23 : f32 to vector<2x256xf32>
    %32 = arith.maximumf %30, %31 : vector<2x256xf32>
    %33 = arith.truncf %32 : vector<2x256xf32> to vector<2x256xbf16>
    %c0_24 = arith.constant 0 : index
    %c0_25 = arith.constant 0 : index
    %34 = vector.load %arg10[%c0_24, %c0_25] : memref<256x1024xbf16, #tpu.memory_space<vmem>>, vector<256x1024xbf16>
    %cst_26 = arith.constant dense<0.000000e+00> : vector<2x1024xf32>
    %35 = tpu.matmul %33, %34, %cst_26 {dimension_numbers = #tpu.dot_dimension_numbers<[1], [0], [0], [1], [0, 0, 1, 1], [], []>} : vector<2x256xbf16>, vector<256x1024xbf16>, vector<2x1024xf32> -> vector<2x1024xf32>
    %c0_27 = arith.constant 0 : index
    %c0_28 = arith.constant 0 : index
    %36 = vector.load %arg11[%c0_27, %c0_28] : memref<1x1024xf32, #tpu.memory_space<vmem>>, vector<1x1024xf32>
    %37 = vector.broadcast %36 : vector<1x1024xf32> to vector<2x1024xf32>
    %38 = arith.addf %35, %37 : vector<2x1024xf32>
    %cst_29 = arith.constant 0.000000e+00 : f32
    %39 = vector.broadcast %cst_29 : f32 to vector<2x1024xf32>
    %40 = arith.maximumf %38, %39 : vector<2x1024xf32>
    %41 = arith.truncf %40 : vector<2x1024xf32> to vector<2x1024xbf16>
    %c0_30 = arith.constant 0 : index
    %c0_31 = arith.constant 0 : index
    %42 = vector.load %arg12[%c0_30, %c0_31] : memref<1024x4xbf16, #tpu.memory_space<vmem>>, vector<1024x4xbf16>
    %cst_32 = arith.constant dense<0.000000e+00> : vector<2x4xf32>
    %43 = tpu.matmul %41, %42, %cst_32 {dimension_numbers = #tpu.dot_dimension_numbers<[1], [0], [0], [1], [0, 0, 1, 1], [], []>} : vector<2x1024xbf16>, vector<1024x4xbf16>, vector<2x4xf32> -> vector<2x4xf32>
    %c0_33 = arith.constant 0 : index
    %c0_34 = arith.constant 0 : index
    %44 = vector.load %arg13[%c0_33, %c0_34] : memref<1x4xf32, #tpu.memory_space<vmem>>, vector<1x4xf32>
    %45 = vector.broadcast %44 : vector<1x4xf32> to vector<2x4xf32>
    %46 = arith.addf %43, %45 : vector<2x4xf32>
    %c0_35 = arith.constant 0 : index
    %c0_36 = arith.constant 0 : index
    %47 = vector.load %arg14[%c0_35, %c0_36] : memref<2x4xf32, #tpu.memory_space<vmem>>, vector<2x4xf32>
    tpu.vector_store %arg14[%c0_35, %c0_36], %46 {strides = array<i32>} : memref<2x4xf32, #tpu.memory_space<vmem>>, vector<2x4xf32>,
    return
  }
  func.func @transform_0(%arg0: i32) -> (i32, i32) {
    %c0_i32 = arith.constant 0 : i32
    %c0_i32_0 = arith.constant 0 : i32
    return %arg0, %c0_i32 : i32, i32
  }
  func.func @transform_1(%arg0: i32) -> (i32, i32) {
    %c0_i32 = arith.constant 0 : i32
    %c0_i32_0 = arith.constant 0 : i32
    %c0_i32_1 = arith.constant 0 : i32
    return %c0_i32, %c0_i32_0 : i32, i32
  }
  func.func @transform_2(%arg0: i32) -> (i32, i32) {
    %c0_i32 = arith.constant 0 : i32
    %c0_i32_0 = arith.constant 0 : i32
    %c0_i32_1 = arith.constant 0 : i32
    return %c0_i32, %c0_i32_0 : i32, i32
  }
  func.func @transform_3(%arg0: i32) -> (i32, i32) {
    %c0_i32 = arith.constant 0 : i32
    %c0_i32_0 = arith.constant 0 : i32
    %c0_i32_1 = arith.constant 0 : i32
    return %c0_i32, %c0_i32_0 : i32, i32
  }
  func.func @transform_4(%arg0: i32) -> (i32, i32) {
    %c0_i32 = arith.constant 0 : i32
    %c0_i32_0 = arith.constant 0 : i32
    %c0_i32_1 = arith.constant 0 : i32
    return %c0_i32, %c0_i32_0 : i32, i32
  }
  func.func @transform_5(%arg0: i32) -> (i32, i32) {
    %c0_i32 = arith.constant 0 : i32
    %c0_i32_0 = arith.constant 0 : i32
    %c0_i32_1 = arith.constant 0 : i32
    return %c0_i32, %c0_i32_0 : i32, i32
  }
  func.func @transform_6(%arg0: i32) -> (i32, i32) {
    %c0_i32 = arith.constant 0 : i32
    %c0_i32_0 = arith.constant 0 : i32
    %c0_i32_1 = arith.constant 0 : i32
    return %c0_i32, %c0_i32_0 : i32, i32
  }
  func.func @transform_7(%arg0: i32) -> (i32, i32) {
    %c0_i32 = arith.constant 0 : i32
    %c0_i32_0 = arith.constant 0 : i32
    %c0_i32_1 = arith.constant 0 : i32
    return %c0_i32, %c0_i32_0 : i32, i32
  }
  func.func @transform_8(%arg0: i32) -> (i32, i32) {
    %c0_i32 = arith.constant 0 : i32
    %c0_i32_0 = arith.constant 0 : i32
    %c0_i32_1 = arith.constant 0 : i32
    return %c0_i32, %c0_i32_0 : i32, i32
  }
  func.func @transform_9(%arg0: i32) -> (i32, i32) {
    %c0_i32 = arith.constant 0 : i32
    %c0_i32_0 = arith.constant 0 : i32
    %c0_i32_1 = arith.constant 0 : i32
    return %c0_i32, %c0_i32_0 : i32, i32
  }
  func.func @transform_10(%arg0: i32) -> (i32, i32) {
    %c0_i32 = arith.constant 0 : i32
    %c0_i32_0 = arith.constant 0 : i32
    %c0_i32_1 = arith.constant 0 : i32
    return %c0_i32, %c0_i32_0 : i32, i32
  }
  func.func @transform_11(%arg0: i32) -> (i32, i32) {
    %c0_i32 = arith.constant 0 : i32
    %c0_i32_0 = arith.constant 0 : i32
    %c0_i32_1 = arith.constant 0 : i32
    return %c0_i32, %c0_i32_0 : i32, i32
  }
  func.func @transform_12(%arg0: i32) -> (i32, i32) {
    %c0_i32 = arith.constant 0 : i32
    %c0_i32_0 = arith.constant 0 : i32
    %c0_i32_1 = arith.constant 0 : i32
    return %c0_i32, %c0_i32_0 : i32, i32
  }
  func.func @transform_13(%arg0: i32) -> (i32, i32) {
    %c0_i32 = arith.constant 0 : i32
    %c0_i32_0 = arith.constant 0 : i32
    return %arg0, %c0_i32 : i32, i32
  }
}

</mosaic_0001>

<llo_original>
// kernel: dueling_dqn_forward.1
$region0: #{dueling_dqn_forward.1}
  #allocation0 [shape = 'u32[]', space=smem, size = 0x4, offset = 0x4, fixed_abs, tag = 'smem constant byte address 0x4 - core index']
  #allocation1 [shape = 'u32[144,128]{1,0:T(1,128)}', space=vmem, size = 0x12000, scoped, tag = 'internal scratch']
  %s0 = inlined_call_operand.vmem [shape: f32[2,1024], index: 0, kind: input, shape index: {}]
  %s1 = inlined_call_operand.hbm [shape: bf16[1024,896], index: 1, kind: input, shape index: {}]
  %s2 = inlined_call_operand.hbm [shape: f32[1,896], index: 2, kind: input, shape index: {}]
  %s3 = inlined_call_operand.hbm [shape: bf16[896,384], index: 3, kind: input, shape index: {}]
  %s4 = inlined_call_operand.hbm [shape: f32[1,384], index: 4, kind: input, shape index: {}]
  %s5 = inlined_call_operand.hbm [shape: bf16[384,128], index: 5, kind: input, shape index: {}]
  %s6 = inlined_call_operand.hbm [shape: f32[1,128], index: 6, kind: input, shape index: {}]
  %s7 = inlined_call_operand.hbm [shape: bf16[128,256], index: 7, kind: input, shape index: {}]
  %s8 = inlined_call_operand.hbm [shape: f32[1,256], index: 8, kind: input, shape index: {}]
  %s9 = inlined_call_operand.hbm [shape: bf16[256,1024], index: 9, kind: input, shape index: {}]
  %s10 = inlined_call_operand.hbm [shape: f32[1,1024], index: 10, kind: input, shape index: {}]
  %s11 = inlined_call_operand.vmem [shape: bf16[1024,4], index: 11, kind: input, shape index: {}]
  %s12 = inlined_call_operand.hbm [shape: f32[1,4], index: 12, kind: input, shape index: {}]
  %s13 = inlined_call_operand.hbm [shape: f32[2,4], index: 13, kind: output, shape index: {}]
  %s14 = sld [smem:[#allocation0]]
  $region106: #{dueling_dqn_forward.1} parent=0
    _
  %s16 = ssub.s32 1, %s14
  %s17 = scalar_select 0, %s16, %s14
  $region1: #{dueling_dqn_forward.1} parent=0
    #allocation2 [shape = 'u8[1835008]{0}', space=vmem, size = 0x1c0000, scoped, tag = 'input window, operand 1, single buffered']
    #allocation3 [shape = 's32[1]{0}', space=sflag, size = 0x4, scoped, tag = 'scoped memory for dueling_dqn_forward.1']
    #allocation4 [shape = 's32[1]{0}', space=sflag, size = 0x4, scoped, tag = 'scoped memory for dueling_dqn_forward.1']
    #allocation5 [shape = 'u8[3584]{0}', space=vmem, size = 0x1000, scoped, tag = 'input window, operand 2, single buffered']
    #allocation6 [shape = 's32[1]{0}', space=sflag, size = 0x4, scoped, tag = 'scoped memory for dueling_dqn_forward.1']
    #allocation7 [shape = 'u8[688128]{0}', space=vmem, size = 0xa8000, scoped, tag = 'input window, operand 3, single buffered']
    #allocation8 [shape = 'u8[1536]{0}', space=vmem, size = 0x800, scoped, tag = 'input window, operand 4, single buffered']
    #allocation9 [shape = 's32[1]{0}', space=sflag, size = 0x4, scoped, tag = 'scoped memory for dueling_dqn_forward.1']
    #allocation10 [shape = 'u8[98304]{0}', space=vmem, size = 0x18000, scoped, tag = 'input window, operand 5, single buffered']
    #allocation11 [shape = 'u8[512]{0}', space=vmem, size = 0x400, scoped, tag = 'input window, operand 6, single buffered']
    #allocation12 [shape = 's32[1]{0}', space=sflag, size = 0x4, scoped, tag = 'scoped memory for dueling_dqn_forward.1']
    #allocation13 [shape = 'u8[65536]{0}', space=vmem, size = 0x10000, scoped, tag = 'input window, operand 7, single buffered']
    #allocation14 [shape = 'u8[1024]{0}', space=vmem, size = 0x400, scoped, tag = 'input window, operand 8, single buffered']
    #allocation15 [shape = 's32[1]{0}', space=sflag, size = 0x4, scoped, tag = 'scoped memory for dueling_dqn_forward.1']
    #allocation16 [shape = 'u8[524288]{0}', space=vmem, size = 0x80000, scoped, tag = 'input window, operand 9, single buffered']
    #allocation17 [shape = 'u8[4096]{0}', space=vmem, size = 0x1000, scoped, tag = 'input window, operand 10, single buffered']
    #allocation18 [shape = 's32[1]{0}', space=sflag, size = 0x4, scoped, tag = 'scoped memory for dueling_dqn_forward.1']
    #allocation19 [shape = 'u8[512]{0}', space=vmem, size = 0x400, scoped, tag = 'input window, operand 12, single buffered']
    #allocation20 [shape = 'u8[1024]{0}', space=vmem, size = 0x400, scoped, tag = 'output window, operand 0, single buffered']
    %18 = vsyncpa [#allocation3], 0
    %19 = vsyncpa [#allocation6], 0
    %20 = vsyncpa [#allocation9], 0
    %21 = vsyncpa [#allocation12], 0
    %22 = vsyncpa [#allocation15], 0
    %23 = vsyncpa [#allocation18], 0
    %24 = vsyncpa [#allocation4], 0
    // Predicated region
    $region2: #{dueling_dqn_forward.1} parent=1 // pred_check
      _
    $region3: #{dueling_dqn_forward.1} parent=1 // pred_check_branch
      %26 = sbr.rel (0) target = $region5
    $region4: #{dueling_dqn_forward.1} parent=1 // pred_region
      _
    $region5: #{dueling_dqn_forward.1} parent=1 // pred_fallthru
      _
    // Predicated region
    $region6: #{dueling_dqn_forward.1} parent=1 // pred_check
      _
    $region7: #{dueling_dqn_forward.1} parent=1 // pred_check_branch
      %28 = sbr.rel (0) target = $region9
    $region8: #{dueling_dqn_forward.1} parent=1 // pred_region
      %s30 = ssub.s32 57344, 57344
      %31 = vsyncadd [#allocation3], %s30
      %s32 = sshll.u32 [#allocation2], 4
      %s33 = int_to_ptr.vmem [resolvable:$true] %s32
      %38 = dma.hbm_to_vmem [thread:$0]  %s1, 57344, %s33, [#allocation3], 448, 448, 28
    $region9: #{dueling_dqn_forward.1} parent=1 // pred_fallthru
      _
    // Predicated region
    $region10: #{dueling_dqn_forward.1} parent=1 // pred_check
      _
    $region11: #{dueling_dqn_forward.1} parent=1 // pred_check_branch
      %40 = sbr.rel (0) target = $region13
    $region12: #{dueling_dqn_forward.1} parent=1 // pred_region
      %s42 = ssub.s32 112, 112
      %43 = vsyncadd [#allocation6], %s42
      %s45 = sshll.u32 [#allocation5], 4
      %s46 = int_to_ptr.vmem [resolvable:$true] %s45
      %48 = dma.hbm_to_vmem [thread:$0]  %s2, 112, %s46, [#allocation6]
    $region13: #{dueling_dqn_forward.1} parent=1 // pred_fallthru
      _
    // Predicated region
    $region14: #{dueling_dqn_forward.1} parent=1 // pred_check
      _
    $region15: #{dueling_dqn_forward.1} parent=1 // pred_check_branch
      %50 = sbr.rel (0) target = $region17
    $region16: #{dueling_dqn_forward.1} parent=1 // pred_region
      %s52 = ssub.s32 21504, 21504
      %53 = vsyncadd [#allocation6], %s52
      %s54 = sshll.u32 [#allocation7], 4
      %s55 = int_to_ptr.vmem [resolvable:$true] %s54
      %60 = dma.hbm_to_vmem [thread:$0]  %s3, 21504, %s55, [#allocation6], 192, 192, 12
    $region17: #{dueling_dqn_forward.1} parent=1 // pred_fallthru
      _
    // Predicated region
    $region18: #{dueling_dqn_forward.1} parent=1 // pred_check
      _
    $region19: #{dueling_dqn_forward.1} parent=1 // pred_check_branch
      %62 = sbr.rel (0) target = $region21
    $region20: #{dueling_dqn_forward.1} parent=1 // pred_region
      %s64 = ssub.s32 48, 48
      %65 = vsyncadd [#allocation9], %s64
      %s67 = sshll.u32 [#allocation8], 4
      %s68 = int_to_ptr.vmem [resolvable:$true] %s67
      %70 = dma.hbm_to_vmem [thread:$0]  %s4, 48, %s68, [#allocation9]
    $region21: #{dueling_dqn_forward.1} parent=1 // pred_fallthru
      _
    // Predicated region
    $region22: #{dueling_dqn_forward.1} parent=1 // pred_check
      _
    $region23: #{dueling_dqn_forward.1} parent=1 // pred_check_branch
      %72 = sbr.rel (0) target = $region25
    $region24: #{dueling_dqn_forward.1} parent=1 // pred_region
      %s74 = ssub.s32 3072, 3072
      %75 = vsyncadd [#allocation9], %s74
      %s76 = sshll.u32 [#allocation10], 4
      %s77 = int_to_ptr.vmem [resolvable:$true] %s76
      %82 = dma.hbm_to_vmem [thread:$0]  %s5, 3072, %s77, [#allocation9], 64, 64, 4
    $region25: #{dueling_dqn_forward.1} parent=1 // pred_fallthru
      _
    // Predicated region
    $region26: #{dueling_dqn_forward.1} parent=1 // pred_check
      _
    $region27: #{dueling_dqn_forward.1} parent=1 // pred_check_branch
      %84 = sbr.rel (0) target = $region29
    $region28: #{dueling_dqn_forward.1} parent=1 // pred_region
      %s86 = ssub.s32 16, 16
      %87 = vsyncadd [#allocation12], %s86
      %s89 = sshll.u32 [#allocation11], 4
      %s90 = int_to_ptr.vmem [resolvable:$true] %s89
      %92 = dma.hbm_to_vmem [thread:$0]  %s6, 16, %s90, [#allocation12]
    $region29: #{dueling_dqn_forward.1} parent=1 // pred_fallthru
      _
    // Predicated region
    $region30: #{dueling_dqn_forward.1} parent=1 // pred_check
      _
    $region31: #{dueling_dqn_forward.1} parent=1 // pred_check_branch
      %94 = sbr.rel (0) target = $region33
    $region32: #{dueling_dqn_forward.1} parent=1 // pred_region
      %s96 = ssub.s32 2048, 2048
      %97 = vsyncadd [#allocation12], %s96
      %s98 = sshll.u32 [#allocation13], 4
      %s99 = int_to_ptr.vmem [resolvable:$true] %s98
      %104 = dma.hbm_to_vmem [thread:$0]  %s7, 2048, %s99, [#allocation12], 128, 128, 8
    $region33: #{dueling_dqn_forward.1} parent=1 // pred_fallthru
      _
    // Predicated region
    $region34: #{dueling_dqn_forward.1} parent=1 // pred_check
      _
    $region35: #{dueling_dqn_forward.1} parent=1 // pred_check_branch
      %106 = sbr.rel (0) target = $region37
    $region36: #{dueling_dqn_forward.1} parent=1 // pred_region
      %s108 = ssub.s32 32, 32
      %109 = vsyncadd [#allocation15], %s108
      %s111 = sshll.u32 [#allocation14], 4
      %s112 = int_to_ptr.vmem [resolvable:$true] %s111
      %114 = dma.hbm_to_vmem [thread:$0]  %s8, 32, %s112, [#allocation15]
    $region37: #{dueling_dqn_forward.1} parent=1 // pred_fallthru
      _
    // Predicated region
    $region38: #{dueling_dqn_forward.1} parent=1 // pred_check
      _
    $region39: #{dueling_dqn_forward.1} parent=1 // pred_check_branch
      %116 = sbr.rel (0) target = $region41
    $region40: #{dueling_dqn_forward.1} parent=1 // pred_region
      %s118 = ssub.s32 16384, 16384
      %119 = vsyncadd [#allocation15], %s118
      %s120 = sshll.u32 [#allocation16], 4
      %s121 = int_to_ptr.vmem [resolvable:$true] %s120
      %126 = dma.hbm_to_vmem [thread:$0]  %s9, 16384, %s121, [#allocation15], 512, 512, 32
    $region41: #{dueling_dqn_forward.1} parent=1 // pred_fallthru
      _
    // Predicated region
    $region42: #{dueling_dqn_forward.1} parent=1 // pred_check
      _
    $region43: #{dueling_dqn_forward.1} parent=1 // pred_check_branch
      %128 = sbr.rel (0) target = $region45
    $region44: #{dueling_dqn_forward.1} parent=1 // pred_region
      %s130 = ssub.s32 128, 128
      %131 = vsyncadd [#allocation18], %s130
      %s133 = sshll.u32 [#allocation17], 4
      %s134 = int_to_ptr.vmem [resolvable:$true] %s133
      %136 = dma.hbm_to_vmem [thread:$0]  %s10, 128, %s134, [#allocation18]
    $region45: #{dueling_dqn_forward.1} parent=1 // pred_fallthru
      _
    // Predicated region
    $region46: #{dueling_dqn_forward.1} parent=1 // pred_check
      _
    $region47: #{dueling_dqn_forward.1} parent=1 // pred_check_branch
      %138 = sbr.rel (0) target = $region49
    $region48: #{dueling_dqn_forward.1} parent=1 // pred_region
      _
    $region49: #{dueling_dqn_forward.1} parent=1 // pred_fallthru
      _
    // Predicated region
    $region50: #{dueling_dqn_forward.1} parent=1 // pred_check
      _
    $region51: #{dueling_dqn_forward.1} parent=1 // pred_check_branch
      %140 = sbr.rel (0) target = $region53
    $region52: #{dueling_dqn_forward.1} parent=1 // pred_region
      %s142 = ssub.s32 16, 16
      %143 = vsyncadd [#allocation18], %s142
      %s145 = sshll.u32 [#allocation19], 4
      %s146 = int_to_ptr.vmem [resolvable:$true] %s145
      %148 = dma.hbm_to_vmem [thread:$0]  %s12, 16, %s146, [#allocation18]
    $region53: #{dueling_dqn_forward.1} parent=1 // pred_fallthru
      _
    // Predicated region
    $region54: #{dueling_dqn_forward.1} parent=1 // pred_check
      _
    $region55: #{dueling_dqn_forward.1} parent=1 // pred_check_branch
      %150 = sbr.rel (0) target = $region57
    $region56: #{dueling_dqn_forward.1} parent=1 // pred_region
      %151 = dma.done [#allocation3], 57344
    $region57: #{dueling_dqn_forward.1} parent=1 // pred_fallthru
      _
    // Predicated region
    $region58: #{dueling_dqn_forward.1} parent=1 // pred_check
      _
    $region59: #{dueling_dqn_forward.1} parent=1 // pred_check_branch
      %153 = sbr.rel (0) target = $region61
    $region60: #{dueling_dqn_forward.1} parent=1 // pred_region
      %154 = dma.done [#allocation6], 112
    $region61: #{dueling_dqn_forward.1} parent=1 // pred_fallthru
      _
    // Predicated region
    $region62: #{dueling_dqn_forward.1} parent=1 // pred_check
      _
    $region63: #{dueling_dqn_forward.1} parent=1 // pred_check_branch
      %156 = sbr.rel (0) target = $region65
    $region64: #{dueling_dqn_forward.1} parent=1 // pred_region
      %157 = dma.done [#allocation6], 21504
    $region65: #{dueling_dqn_forward.1} parent=1 // pred_fallthru
      _
    // Predicated region
    $region66: #{dueling_dqn_forward.1} parent=1 // pred_check
      _
    $region67: #{dueling_dqn_forward.1} parent=1 // pred_check_branch
      %159 = sbr.rel (0) target = $region69
    $region68: #{dueling_dqn_forward.1} parent=1 // pred_region
      %160 = dma.done [#allocation9], 48
    $region69: #{dueling_dqn_forward.1} parent=1 // pred_fallthru
      _
    // Predicated region
    $region70: #{dueling_dqn_forward.1} parent=1 // pred_check
      _
    $region71: #{dueling_dqn_forward.1} parent=1 // pred_check_branch
      %162 = sbr.rel (0) target = $region73
    $region72: #{dueling_dqn_forward.1} parent=1 // pred_region
      %163 = dma.done [#allocation9], 3072
    $region73: #{dueling_dqn_forward.1} parent=1 // pred_fallthru
      _
    // Predicated region
    $region74: #{dueling_dqn_forward.1} parent=1 // pred_check
      _
    $region75: #{dueling_dqn_forward.1} parent=1 // pred_check_branch
      %165 = sbr.rel (0) target = $region77
    $region76: #{dueling_dqn_forward.1} parent=1 // pred_region
      %166 = dma.done [#allocation12], 16
    $region77: #{dueling_dqn_forward.1} parent=1 // pred_fallthru
      _
    // Predicated region
    $region78: #{dueling_dqn_forward.1} parent=1 // pred_check
      _
    $region79: #{dueling_dqn_forward.1} parent=1 // pred_check_branch
      %168 = sbr.rel (0) target = $region81
    $region80: #{dueling_dqn_forward.1} parent=1 // pred_region
      %169 = dma.done [#allocation12], 2048
    $region81: #{dueling_dqn_forward.1} parent=1 // pred_fallthru
      _
    // Predicated region
    $region82: #{dueling_dqn_forward.1} parent=1 // pred_check
      _
    $region83: #{dueling_dqn_forward.1} parent=1 // pred_check_branch
      %171 = sbr.rel (0) target = $region85
    $region84: #{dueling_dqn_forward.1} parent=1 // pred_region
      %172 = dma.done [#allocation15], 32
    $region85: #{dueling_dqn_forward.1} parent=1 // pred_fallthru
      _
    // Predicated region
    $region86: #{dueling_dqn_forward.1} parent=1 // pred_check
      _
    $region87: #{dueling_dqn_forward.1} parent=1 // pred_check_branch
      %174 = sbr.rel (0) target = $region89
    $region88: #{dueling_dqn_forward.1} parent=1 // pred_region
      %175 = dma.done [#allocation15], 16384
    $region89: #{dueling_dqn_forward.1} parent=1 // pred_fallthru
      _
    // Predicated region
    $region90: #{dueling_dqn_forward.1} parent=1 // pred_check
      _
    $region91: #{dueling_dqn_forward.1} parent=1 // pred_check_branch
      %177 = sbr.rel (0) target = $region93
    $region92: #{dueling_dqn_forward.1} parent=1 // pred_region
      %178 = dma.done [#allocation18], 128
    $region93: #{dueling_dqn_forward.1} parent=1 // pred_fallthru
      _
    // Predicated region
    $region94: #{dueling_dqn_forward.1} parent=1 // pred_check
      _
    $region95: #{dueling_dqn_forward.1} parent=1 // pred_check_branch
      %180 = sbr.rel (0) target = $region97
    $region96: #{dueling_dqn_forward.1} parent=1 // pred_region
      %181 = dma.done [#allocation18], 16
    $region97: #{dueling_dqn_forward.1} parent=1 // pred_fallthru
      _
    %v183 = vld [vmem:[%s0] sm:$0xff]
    %v184 = vld [vmem:[%s0 + $0x8] sm:$0xff]
    %v187 = vcombine.high %v183, %v183
    %v189 = vunpack.c.l.s4 1983009808
    %v190 = vunpack.c.0.s8 %v189
    %v191 = vlaneseq
    %v192 = vshrl.u32 %v191, 7
    %v193 = vsub.s32 %v190, %v192
    %v194 = vrot.slane %v183, %v193
    %v196 = vunpack.c.l.s4 1983009808
    %v197 = vunpack.c.0.s8 %v196
    %v198 = vlaneseq
    %v199 = vshrl.u32 %v198, 7
    %v200 = vsub.s32 %v197, %v199
    %v201 = vrot.slane %v187, %v200
    %v202 = vcombine.high %v194, %v194
    %v203 = vcombine.high %v201, %v201
    %v204 = vcombine.high %v184, %v184
    %v206 = vunpack.c.l.s4 1983009808
    %v207 = vunpack.c.0.s8 %v206
    %v208 = vlaneseq
    %v209 = vshrl.u32 %v208, 7
    %v210 = vsub.s32 %v207, %v209
    %v211 = vrot.slane %v184, %v210
    %v213 = vunpack.c.l.s4 1983009808
    %v214 = vunpack.c.0.s8 %v213
    %v215 = vlaneseq
    %v216 = vshrl.u32 %v215, 7
    %v217 = vsub.s32 %v214, %v216
    %v218 = vrot.slane %v204, %v217
    %v219 = vcombine.high %v211, %v211
    %v220 = vcombine.high %v218, %v218
    %v229 = vpack.c.bf16 %v194, %v194
    %v230 = vpack.c.bf16 %v202, %v202
    %v231 = vpack.c.bf16 %v201, %v201
    %v232 = vpack.c.bf16 %v203, %v203
    %v233 = vpack.c.bf16 %v211, %v211
    %v234 = vpack.c.bf16 %v219, %v219
    %v235 = vpack.c.bf16 %v218, %v218
    %v236 = vpack.c.bf16 %v220, %v220
    %v237 = vld [vmem:[#allocation2] sm:$0xff]
    %v238 = vld [vmem:[#allocation2 + $0x8] sm:$0xff]
    %v239 = vld [vmem:[#allocation2 + $0x10] sm:$0xff]
    %v240 = vld [vmem:[#allocation2 + $0x18] sm:$0xf]
    %v241 = vld [vmem:[#allocation2 + $0x1c] sm:$0xff]
    %v242 = vld [vmem:[#allocation2 + $0x24] sm:$0xff]
    %v243 = vld [vmem:[#allocation2 + $0x2c] sm:$0xff]
    %v244 = vld [vmem:[#allocation2 + $0x34] sm:$0xf]
    %v245 = vld [vmem:[#allocation2 + $0x38] sm:$0xff]
    %v246 = vld [vmem:[#allocation2 + $0x40] sm:$0xff]
    %v247 = vld [vmem:[#allocation2 + $0x48] sm:$0xff]
    %v248 = vld [vmem:[#allocation2 + $0x50] sm:$0xf]
    %v249 = vld [vmem:[#allocation2 + $0x54] sm:$0xff]
    %v250 = vld [vmem:[#allocation2 + $0x5c] sm:$0xff]
    %v251 = vld [vmem:[#allocation2 + $0x64] sm:$0xff]
    %v252 = vld [vmem:[#allocation2 + $0x6c] sm:$0xf]
    %v253 = vld [vmem:[#allocation2 + $0x70] sm:$0xff]
    %v254 = vld [vmem:[#allocation2 + $0x78] sm:$0xff]
    %v255 = vld [vmem:[#allocation2 + $0x80] sm:$0xff]
    %v256 = vld [vmem:[#allocation2 + $0x88] sm:$0xf]
    %v257 = vld [vmem:[#allocation2 + $0x8c] sm:$0xff]
    %v258 = vld [vmem:[#allocation2 + $0x94] sm:$0xff]
    %v259 = vld [vmem:[#allocation2 + $0x9c] sm:$0xff]
    %v260 = vld [vmem:[#allocation2 + $0xa4] sm:$0xf]
    %v261 = vld [vmem:[#allocation2 + $0xa8] sm:$0xff]
    %v262 = vld [vmem:[#allocation2 + $0xb0] sm:$0xff]
    %v263 = vld [vmem:[#allocation2 + $0xb8] sm:$0xff]
    %v264 = vld [vmem:[#allocation2 + $0xc0] sm:$0xf]
    %v265 = vld [vmem:[#allocation2 + $0xc4] sm:$0xff]
    %v266 = vld [vmem:[#allocation2 + $0xcc] sm:$0xff]
    %v267 = vld [vmem:[#allocation2 + $0xd4] sm:$0xff]
    %v268 = vld [vmem:[#allocation2 + $0xdc] sm:$0xf]
    %v269 = vld [vmem:[#allocation2 + $0xe0] sm:$0xff]
    %v270 = vld [vmem:[#allocation2 + $0xe8] sm:$0xff]
    %v271 = vld [vmem:[#allocation2 + $0xf0] sm:$0xff]
    %v272 = vld [vmem:[#allocation2 + $0xf8] sm:$0xf]
    %v273 = vld [vmem:[#allocation2 + $0xfc] sm:$0xff]
    %v274 = vld [vmem:[#allocation2 + $0x104] sm:$0xff]
    %v275 = vld [vmem:[#allocation2 + $0x10c] sm:$0xff]
    %v276 = vld [vmem:[#allocation2 + $0x114] sm:$0xf]
    %v277 = vld [vmem:[#allocation2 + $0x118] sm:$0xff]
    %v278 = vld [vmem:[#allocation2 + $0x120] sm:$0xff]
    %v279 = vld [vmem:[#allocation2 + $0x128] sm:$0xff]
    %v280 = vld [vmem:[#allocation2 + $0x130] sm:$0xf]
    %v281 = vld [vmem:[#allocation2 + $0x134] sm:$0xff]
    %v282 = vld [vmem:[#allocation2 + $0x13c] sm:$0xff]
    %v283 = vld [vmem:[#allocation2 + $0x144] sm:$0xff]
    %v284 = vld [vmem:[#allocation2 + $0x14c] sm:$0xf]
    %v285 = vld [vmem:[#allocation2 + $0x150] sm:$0xff]
    %v286 = vld [vmem:[#allocation2 + $0x158] sm:$0xff]
    %v287 = vld [vmem:[#allocation2 + $0x160] sm:$0xff]
    %v288 = vld [vmem:[#allocation2 + $0x168] sm:$0xf]
    %v289 = vld [vmem:[#allocation2 + $0x16c] sm:$0xff]
    %v290 = vld [vmem:[#allocation2 + $0x174] sm:$0xff]
    %v291 = vld [vmem:[#allocation2 + $0x17c] sm:$0xff]
    %v292 = vld [vmem:[#allocation2 + $0x184] sm:$0xf]
    %v293 = vld [vmem:[#allocation2 + $0x188] sm:$0xff]
    %v294 = vld [vmem:[#allocation2 + $0x190] sm:$0xff]
    %v295 = vld [vmem:[#allocation2 + $0x198] sm:$0xff]
    %v296 = vld [vmem:[#allocation2 + $0x1a0] sm:$0xf]
    %v297 = vld [vmem:[#allocation2 + $0x1a4] sm:$0xff]
    %v298 = vld [vmem:[#allocation2 + $0x1ac] sm:$0xff]
    %v299 = vld [vmem:[#allocation2 + $0x1b4] sm:$0xff]
    %v300 = vld [vmem:[#allocation2 + $0x1bc] sm:$0xf]
    %v301 = vld [vmem:[#allocation2 + $0x1c0] sm:$0xff]
    %v302 = vld [vmem:[#allocation2 + $0x1c8] sm:$0xff]
    %v303 = vld [vmem:[#allocation2 + $0x1d0] sm:$0xff]
    %v304 = vld [vmem:[#allocation2 + $0x1d8] sm:$0xf]
    %v305 = vld [vmem:[#allocation2 + $0x1dc] sm:$0xff]
    %v306 = vld [vmem:[#allocation2 + $0x1e4] sm:$0xff]
    %v307 = vld [vmem:[#allocation2 + $0x1ec] sm:$0xff]
    %v308 = vld [vmem:[#allocation2 + $0x1f4] sm:$0xf]
    %v309 = vld [vmem:[#allocation2 + $0x1f8] sm:$0xff]
    %v310 = vld [vmem:[#allocation2 + $0x200] sm:$0xff]
    %v311 = vld [vmem:[#allocation2 + $0x208] sm:$0xff]
    %v312 = vld [vmem:[#allocation2 + $0x210] sm:$0xf]
    %v313 = vld [vmem:[#allocation2 + $0x214] sm:$0xff]
    %v314 = vld [vmem:[#allocation2 + $0x21c] sm:$0xff]
    %v315 = vld [vmem:[#allocation2 + $0x224] sm:$0xff]
    %v316 = vld [vmem:[#allocation2 + $0x22c] sm:$0xf]
    %v317 = vld [vmem:[#allocation2 + $0x230] sm:$0xff]
    %v318 = vld [vmem:[#allocation2 + $0x238] sm:$0xff]
    %v319 = vld [vmem:[#allocation2 + $0x240] sm:$0xff]
    %v320 = vld [vmem:[#allocation2 + $0x248] sm:$0xf]
    %v321 = vld [vmem:[#allocation2 + $0x24c] sm:$0xff]
    %v322 = vld [vmem:[#allocation2 + $0x254] sm:$0xff]
    %v323 = vld [vmem:[#allocation2 + $0x25c] sm:$0xff]
    %v324 = vld [vmem:[#allocation2 + $0x264] sm:$0xf]
    %v325 = vld [vmem:[#allocation2 + $0x268] sm:$0xff]
    %v326 = vld [vmem:[#allocation2 + $0x270] sm:$0xff]
    %v327 = vld [vmem:[#allocation2 + $0x278] sm:$0xff]
    %v328 = vld [vmem:[#allocation2 + $0x280] sm:$0xf]
    %v329 = vld [vmem:[#allocation2 + $0x284] sm:$0xff]
    %v330 = vld [vmem:[#allocation2 + $0x28c] sm:$0xff]
    %v331 = vld [vmem:[#allocation2 + $0x294] sm:$0xff]
    %v332 = vld [vmem:[#allocation2 + $0x29c] sm:$0xf]
    %v333 = vld [vmem:[#allocation2 + $0x2a0] sm:$0xff]
    %v334 = vld [vmem:[#allocation2 + $0x2a8] sm:$0xff]
    %v335 = vld [vmem:[#allocation2 + $0x2b0] sm:$0xff]
    %v336 = vld [vmem:[#allocation2 + $0x2b8] sm:$0xf]
    %v337 = vld [vmem:[#allocation2 + $0x2bc] sm:$0xff]
    %v338 = vld [vmem:[#allocation2 + $0x2c4] sm:$0xff]
    %v339 = vld [vmem:[#allocation2 + $0x2cc] sm:$0xff]
    %v340 = vld [vmem:[#allocation2 + $0x2d4] sm:$0xf]
    %v341 = vld [vmem:[#allocation2 + $0x2d8] sm:$0xff]
    %v342 = vld [vmem:[#allocation2 + $0x2e0] sm:$0xff]
    %v343 = vld [vmem:[#allocation2 + $0x2e8] sm:$0xff]
    %v344 = vld [vmem:[#allocation2 + $0x2f0] sm:$0xf]
    %v345 = vld [vmem:[#allocation2 + $0x2f4] sm:$0xff]
    %v346 = vld [vmem:[#allocation2 + $0x2fc] sm:$0xff]
    %v347 = vld [vmem:[#allocation2 + $0x304] sm:$0xff]
    %v348 = vld [vmem:[#allocation2 + $0x30c] sm:$0xf]
    %v349 = vld [vmem:[#allocation2 + $0x310] sm:$0xff]
    %v350 = vld [vmem:[#allocation2 + $0x318] sm:$0xff]
    %v351 = vld [vmem:[#allocation2 + $0x320] sm:$0xff]
    %v352 = vld [vmem:[#allocation2 + $0x328] sm:$0xf]
    %v353 = vld [vmem:[#allocation2 + $0x32c] sm:$0xff]
    %v354 = vld [vmem:[#allocation2 + $0x334] sm:$0xff]
    %v355 = vld [vmem:[#allocation2 + $0x33c] sm:$0xff]
    %v356 = vld [vmem:[#allocation2 + $0x344] sm:$0xf]
    %v357 = vld [vmem:[#allocation2 + $0x348] sm:$0xff]
    %v358 = vld [vmem:[#allocation2 + $0x350] sm:$0xff]
    %v359 = vld [vmem:[#allocation2 + $0x358] sm:$0xff]
    %v360 = vld [vmem:[#allocation2 + $0x360] sm:$0xf]
    %v361 = vld [vmem:[#allocation2 + $0x364] sm:$0xff]
    %v362 = vld [vmem:[#allocation2 + $0x36c] sm:$0xff]
    %v363 = vld [vmem:[#allocation2 + $0x374] sm:$0xff]
    %v364 = vld [vmem:[#allocation2 + $0x37c] sm:$0xf]
    %v365 = vld [vmem:[#allocation2 + $0x380] sm:$0xff]
    %v366 = vld [vmem:[#allocation2 + $0x388] sm:$0xff]
    %v367 = vld [vmem:[#allocation2 + $0x390] sm:$0xff]
    %v368 = vld [vmem:[#allocation2 + $0x398] sm:$0xf]
    %v369 = vld [vmem:[#allocation2 + $0x39c] sm:$0xff]
    %v370 = vld [vmem:[#allocation2 + $0x3a4] sm:$0xff]
    %v371 = vld [vmem:[#allocation2 + $0x3ac] sm:$0xff]
    %v372 = vld [vmem:[#allocation2 + $0x3b4] sm:$0xf]
    %v373 = vld [vmem:[#allocation2 + $0x3b8] sm:$0xff]
    %v374 = vld [vmem:[#allocation2 + $0x3c0] sm:$0xff]
    %v375 = vld [vmem:[#allocation2 + $0x3c8] sm:$0xff]
    %v376 = vld [vmem:[#allocation2 + $0x3d0] sm:$0xf]
    %v377 = vld [vmem:[#allocation2 + $0x3d4] sm:$0xff]
    %v378 = vld [vmem:[#allocation2 + $0x3dc] sm:$0xff]
    %v379 = vld [vmem:[#allocation2 + $0x3e4] sm:$0xff]
    %v380 = vld [vmem:[#allocation2 + $0x3ec] sm:$0xf]
    %v381 = vld [vmem:[#allocation2 + $0x3f0] sm:$0xff]
    %v382 = vld [vmem:[#allocation2 + $0x3f8] sm:$0xff]
    %v383 = vld [vmem:[#allocation2 + $0x400] sm:$0xff]
    %v384 = vld [vmem:[#allocation2 + $0x408] sm:$0xf]
    %v385 = vld [vmem:[#allocation2 + $0x40c] sm:$0xff]
    %v386 = vld [vmem:[#allocation2 + $0x414] sm:$0xff]
    %v387 = vld [vmem:[#allocation2 + $0x41c] sm:$0xff]
    %v388 = vld [vmem:[#allocation2 + $0x424] sm:$0xf]
    %v389 = vld [vmem:[#allocation2 + $0x428] sm:$0xff]
    %v390 = vld [vmem:[#allocation2 + $0x430] sm:$0xff]
    %v391 = vld [vmem:[#allocation2 + $0x438] sm:$0xff]
    %v392 = vld [vmem:[#allocation2 + $0x440] sm:$0xf]
    %v393 = vld [vmem:[#allocation2 + $0x444] sm:$0xff]
    %v394 = vld [vmem:[#allocation2 + $0x44c] sm:$0xff]
    %v395 = vld [vmem:[#allocation2 + $0x454] sm:$0xff]
    %v396 = vld [vmem:[#allocation2 + $0x45c] sm:$0xf]
    %v397 = vld [vmem:[#allocation2 + $0x460] sm:$0xff]
    %v398 = vld [vmem:[#allocation2 + $0x468] sm:$0xff]
    %v399 = vld [vmem:[#allocation2 + $0x470] sm:$0xff]
    %v400 = vld [vmem:[#allocation2 + $0x478] sm:$0xf]
    %v401 = vld [vmem:[#allocation2 + $0x47c] sm:$0xff]
    %v402 = vld [vmem:[#allocation2 + $0x484] sm:$0xff]
    %v403 = vld [vmem:[#allocation2 + $0x48c] sm:$0xff]
    %v404 = vld [vmem:[#allocation2 + $0x494] sm:$0xf]
    %v405 = vld [vmem:[#allocation2 + $0x498] sm:$0xff]
    %v406 = vld [vmem:[#allocation2 + $0x4a0] sm:$0xff]
    %v407 = vld [vmem:[#allocation2 + $0x4a8] sm:$0xff]
    %v408 = vld [vmem:[#allocation2 + $0x4b0] sm:$0xf]
    %v409 = vld [vmem:[#allocation2 + $0x4b4] sm:$0xff]
    %v410 = vld [vmem:[#allocation2 + $0x4bc] sm:$0xff]
    %v411 = vld [vmem:[#allocation2 + $0x4c4] sm:$0xff]
    %v412 = vld [vmem:[#allocation2 + $0x4cc] sm:$0xf]
    %v413 = vld [vmem:[#allocation2 + $0x4d0] sm:$0xff]
    %v414 = vld [vmem:[#allocation2 + $0x4d8] sm:$0xff]
    %v415 = vld [vmem:[#allocation2 + $0x4e0] sm:$0xff]
    %v416 = vld [vmem:[#allocation2 + $0x4e8] sm:$0xf]
    %v417 = vld [vmem:[#allocation2 + $0x4ec] sm:$0xff]
    %v418 = vld [vmem:[#allocation2 + $0x4f4] sm:$0xff]
    %v419 = vld [vmem:[#allocation2 + $0x4fc] sm:$0xff]
    %v420 = vld [vmem:[#allocation2 + $0x504] sm:$0xf]
    %v421 = vld [vmem:[#allocation2 + $0x508] sm:$0xff]
    %v422 = vld [vmem:[#allocation2 + $0x510] sm:$0xff]
    %v423 = vld [vmem:[#allocation2 + $0x518] sm:$0xff]
    %v424 = vld [vmem:[#allocation2 + $0x520] sm:$0xf]
    %v425 = vld [vmem:[#allocation2 + $0x524] sm:$0xff]
    %v426 = vld [vmem:[#allocation2 + $0x52c] sm:$0xff]
    %v427 = vld [vmem:[#allocation2 + $0x534] sm:$0xff]
    %v428 = vld [vmem:[#allocation2 + $0x53c] sm:$0xf]
    %v429 = vld [vmem:[#allocation2 + $0x540] sm:$0xff]
    %v430 = vld [vmem:[#allocation2 + $0x548] sm:$0xff]
    %v431 = vld [vmem:[#allocation2 + $0x550] sm:$0xff]
    %v432 = vld [vmem:[#allocation2 + $0x558] sm:$0xf]
    %v433 = vld [vmem:[#allocation2 + $0x55c] sm:$0xff]
    %v434 = vld [vmem:[#allocation2 + $0x564] sm:$0xff]
    %v435 = vld [vmem:[#allocation2 + $0x56c] sm:$0xff]
    %v436 = vld [vmem:[#allocation2 + $0x574] sm:$0xf]
    %v437 = vld [vmem:[#allocation2 + $0x578] sm:$0xff]
    %v438 = vld [vmem:[#allocation2 + $0x580] sm:$0xff]
    %v439 = vld [vmem:[#allocation2 + $0x588] sm:$0xff]
    %v440 = vld [vmem:[#allocation2 + $0x590] sm:$0xf]
    %v441 = vld [vmem:[#allocation2 + $0x594] sm:$0xff]
    %v442 = vld [vmem:[#allocation2 + $0x59c] sm:$0xff]
    %v443 = vld [vmem:[#allocation2 + $0x5a4] sm:$0xff]
    %v444 = vld [vmem:[#allocation2 + $0x5ac] sm:$0xf]
    %v445 = vld [vmem:[#allocation2 + $0x5b0] sm:$0xff]
    %v446 = vld [vmem:[#allocation2 + $0x5b8] sm:$0xff]
    %v447 = vld [vmem:[#allocation2 + $0x5c0] sm:$0xff]
    %v448 = vld [vmem:[#allocation2 + $0x5c8] sm:$0xf]
    %v449 = vld [vmem:[#allocation2 + $0x5cc] sm:$0xff]
    %v450 = vld [vmem:[#allocation2 + $0x5d4] sm:$0xff]
    %v451 = vld [vmem:[#allocation2 + $0x5dc] sm:$0xff]
    %v452 = vld [vmem:[#allocation2 + $0x5e4] sm:$0xf]
    %v453 = vld [vmem:[#allocation2 + $0x5e8] sm:$0xff]
    %v454 = vld [vmem:[#allocation2 + $0x5f0] sm:$0xff]
    %v455 = vld [vmem:[#allocation2 + $0x5f8] sm:$0xff]
    %v456 = vld [vmem:[#allocation2 + $0x600] sm:$0xf]
    %v457 = vld [vmem:[#allocation2 + $0x604] sm:$0xff]
    %v458 = vld [vmem:[#allocation2 + $0x60c] sm:$0xff]
    %v459 = vld [vmem:[#allocation2 + $0x614] sm:$0xff]
    %v460 = vld [vmem:[#allocation2 + $0x61c] sm:$0xf]
    %v461 = vld [vmem:[#allocation2 + $0x620] sm:$0xff]
    %v462 = vld [vmem:[#allocation2 + $0x628] sm:$0xff]
    %v463 = vld [vmem:[#allocation2 + $0x630] sm:$0xff]
    %v464 = vld [vmem:[#allocation2 + $0x638] sm:$0xf]
    %v465 = vld [vmem:[#allocation2 + $0x63c] sm:$0xff]
    %v466 = vld [vmem:[#allocation2 + $0x644] sm:$0xff]
    %v467 = vld [vmem:[#allocation2 + $0x64c] sm:$0xff]
    %v468 = vld [vmem:[#allocation2 + $0x654] sm:$0xf]
    %v469 = vld [vmem:[#allocation2 + $0x658] sm:$0xff]
    %v470 = vld [vmem:[#allocation2 + $0x660] sm:$0xff]
    %v471 = vld [vmem:[#allocation2 + $0x668] sm:$0xff]
    %v472 = vld [vmem:[#allocation2 + $0x670] sm:$0xf]
    %v473 = vld [vmem:[#allocation2 + $0x674] sm:$0xff]
    %v474 = vld [vmem:[#allocation2 + $0x67c] sm:$0xff]
    %v475 = vld [vmem:[#allocation2 + $0x684] sm:$0xff]
    %v476 = vld [vmem:[#allocation2 + $0x68c] sm:$0xf]
    %v477 = vld [vmem:[#allocation2 + $0x690] sm:$0xff]
    %v478 = vld [vmem:[#allocation2 + $0x698] sm:$0xff]
    %v479 = vld [vmem:[#allocation2 + $0x6a0] sm:$0xff]
    %v480 = vld [vmem:[#allocation2 + $0x6a8] sm:$0xf]
    %v481 = vld [vmem:[#allocation2 + $0x6ac] sm:$0xff]
    %v482 = vld [vmem:[#allocation2 + $0x6b4] sm:$0xff]
    %v483 = vld [vmem:[#allocation2 + $0x6bc] sm:$0xff]
    %v484 = vld [vmem:[#allocation2 + $0x6c4] sm:$0xf]
    %v485 = vld [vmem:[#allocation2 + $0x6c8] sm:$0xff]
    %v486 = vld [vmem:[#allocation2 + $0x6d0] sm:$0xff]
    %v487 = vld [vmem:[#allocation2 + $0x6d8] sm:$0xff]
    %v488 = vld [vmem:[#allocation2 + $0x6e0] sm:$0xf]
    %v489 = vld [vmem:[#allocation2 + $0x6e4] sm:$0xff]
    %v490 = vld [vmem:[#allocation2 + $0x6ec] sm:$0xff]
    %v491 = vld [vmem:[#allocation2 + $0x6f4] sm:$0xff]
    %v492 = vld [vmem:[#allocation2 + $0x6fc] sm:$0xf]
    %v493 = vld [vmem:[#allocation2 + $0x700] sm:$0xff]
    %v494 = vld [vmem:[#allocation2 + $0x708] sm:$0xff]
    %v495 = vld [vmem:[#allocation2 + $0x710] sm:$0xff]
    %v496 = vld [vmem:[#allocation2 + $0x718] sm:$0xf]
    %v497 = vld [vmem:[#allocation2 + $0x71c] sm:$0xff]
    %v498 = vld [vmem:[#allocation2 + $0x724] sm:$0xff]
    %v499 = vld [vmem:[#allocation2 + $0x72c] sm:$0xff]
    %v500 = vld [vmem:[#allocation2 + $0x734] sm:$0xf]
    %v501 = vld [vmem:[#allocation2 + $0x738] sm:$0xff]
    %v502 = vld [vmem:[#allocation2 + $0x740] sm:$0xff]
    %v503 = vld [vmem:[#allocation2 + $0x748] sm:$0xff]
    %v504 = vld [vmem:[#allocation2 + $0x750] sm:$0xf]
    %v505 = vld [vmem:[#allocation2 + $0x754] sm:$0xff]
    %v506 = vld [vmem:[#allocation2 + $0x75c] sm:$0xff]
    %v507 = vld [vmem:[#allocation2 + $0x764] sm:$0xff]
    %v508 = vld [vmem:[#allocation2 + $0x76c] sm:$0xf]
    %v509 = vld [vmem:[#allocation2 + $0x770] sm:$0xff]
    %v510 = vld [vmem:[#allocation2 + $0x778] sm:$0xff]
    %v511 = vld [vmem:[#allocation2 + $0x780] sm:$0xff]
    %v512 = vld [vmem:[#allocation2 + $0x788] sm:$0xf]
    %v513 = vld [vmem:[#allocation2 + $0x78c] sm:$0xff]
    %v514 = vld [vmem:[#allocation2 + $0x794] sm:$0xff]
    %v515 = vld [vmem:[#allocation2 + $0x79c] sm:$0xff]
    %v516 = vld [vmem:[#allocation2 + $0x7a4] sm:$0xf]
    %v517 = vld [vmem:[#allocation2 + $0x7a8] sm:$0xff]
    %v518 = vld [vmem:[#allocation2 + $0x7b0] sm:$0xff]
    %v519 = vld [vmem:[#allocation2 + $0x7b8] sm:$0xff]
    %v520 = vld [vmem:[#allocation2 + $0x7c0] sm:$0xf]
    %v521 = vld [vmem:[#allocation2 + $0x7c4] sm:$0xff]
    %v522 = vld [vmem:[#allocation2 + $0x7cc] sm:$0xff]
    %v523 = vld [vmem:[#allocation2 + $0x7d4] sm:$0xff]
    %v524 = vld [vmem:[#allocation2 + $0x7dc] sm:$0xf]
    %v525 = vld [vmem:[#allocation2 + $0x7e0] sm:$0xff]
    %v526 = vld [vmem:[#allocation2 + $0x7e8] sm:$0xff]
    %v527 = vld [vmem:[#allocation2 + $0x7f0] sm:$0xff]
    %v528 = vld [vmem:[#allocation2 + $0x7f8] sm:$0xf]
    %v529 = vld [vmem:[#allocation2 + $0x7fc] sm:$0xff]
    %v530 = vld [vmem:[#allocation2 + $0x804] sm:$0xff]
    %v531 = vld [vmem:[#allocation2 + $0x80c] sm:$0xff]
    %v532 = vld [vmem:[#allocation2 + $0x814] sm:$0xf]
    %v533 = vld [vmem:[#allocation2 + $0x818] sm:$0xff]
    %v534 = vld [vmem:[#allocation2 + $0x820] sm:$0xff]
    %v535 = vld [vmem:[#allocation2 + $0x828] sm:$0xff]
    %v536 = vld [vmem:[#allocation2 + $0x830] sm:$0xf]
    %v537 = vld [vmem:[#allocation2 + $0x834] sm:$0xff]
    %v538 = vld [vmem:[#allocation2 + $0x83c] sm:$0xff]
    %v539 = vld [vmem:[#allocation2 + $0x844] sm:$0xff]
    %v540 = vld [vmem:[#allocation2 + $0x84c] sm:$0xf]
    %v541 = vld [vmem:[#allocation2 + $0x850] sm:$0xff]
    %v542 = vld [vmem:[#allocation2 + $0x858] sm:$0xff]
    %v543 = vld [vmem:[#allocation2 + $0x860] sm:$0xff]
    %v544 = vld [vmem:[#allocation2 + $0x868] sm:$0xf]
    %v545 = vld [vmem:[#allocation2 + $0x86c] sm:$0xff]
    %v546 = vld [vmem:[#allocation2 + $0x874] sm:$0xff]
    %v547 = vld [vmem:[#allocation2 + $0x87c] sm:$0xff]
    %v548 = vld [vmem:[#allocation2 + $0x884] sm:$0xf]
    %v549 = vld [vmem:[#allocation2 + $0x888] sm:$0xff]
    %v550 = vld [vmem:[#allocation2 + $0x890] sm:$0xff]
    %v551 = vld [vmem:[#allocation2 + $0x898] sm:$0xff]
    %v552 = vld [vmem:[#allocation2 + $0x8a0] sm:$0xf]
    %v553 = vld [vmem:[#allocation2 + $0x8a4] sm:$0xff]
    %v554 = vld [vmem:[#allocation2 + $0x8ac] sm:$0xff]
    %v555 = vld [vmem:[#allocation2 + $0x8b4] sm:$0xff]
    %v556 = vld [vmem:[#allocation2 + $0x8bc] sm:$0xf]
    %v557 = vld [vmem:[#allocation2 + $0x8c0] sm:$0xff]
    %v558 = vld [vmem:[#allocation2 + $0x8c8] sm:$0xff]
    %v559 = vld [vmem:[#allocation2 + $0x8d0] sm:$0xff]
    %v560 = vld [vmem:[#allocation2 + $0x8d8] sm:$0xf]
    %v561 = vld [vmem:[#allocation2 + $0x8dc] sm:$0xff]
    %v562 = vld [vmem:[#allocation2 + $0x8e4] sm:$0xff]
    %v563 = vld [vmem:[#allocation2 + $0x8ec] sm:$0xff]
    %v564 = vld [vmem:[#allocation2 + $0x8f4] sm:$0xf]
    %v565 = vld [vmem:[#allocation2 + $0x8f8] sm:$0xff]
    %v566 = vld [vmem:[#allocation2 + $0x900] sm:$0xff]
    %v567 = vld [vmem:[#allocation2 + $0x908] sm:$0xff]
    %v568 = vld [vmem:[#allocation2 + $0x910] sm:$0xf]
    %v569 = vld [vmem:[#allocation2 + $0x914] sm:$0xff]
    %v570 = vld [vmem:[#allocation2 + $0x91c] sm:$0xff]
    %v571 = vld [vmem:[#allocation2 + $0x924] sm:$0xff]
    %v572 = vld [vmem:[#allocation2 + $0x92c] sm:$0xf]
    %v573 = vld [vmem:[#allocation2 + $0x930] sm:$0xff]
    %v574 = vld [vmem:[#allocation2 + $0x938] sm:$0xff]
    %v575 = vld [vmem:[#allocation2 + $0x940] sm:$0xff]
    %v576 = vld [vmem:[#allocation2 + $0x948] sm:$0xf]
    %v577 = vld [vmem:[#allocation2 + $0x94c] sm:$0xff]
    %v578 = vld [vmem:[#allocation2 + $0x954] sm:$0xff]
    %v579 = vld [vmem:[#allocation2 + $0x95c] sm:$0xff]
    %v580 = vld [vmem:[#allocation2 + $0x964] sm:$0xf]
    %v581 = vld [vmem:[#allocation2 + $0x968] sm:$0xff]
    %v582 = vld [vmem:[#allocation2 + $0x970] sm:$0xff]
    %v583 = vld [vmem:[#allocation2 + $0x978] sm:$0xff]
    %v584 = vld [vmem:[#allocation2 + $0x980] sm:$0xf]
    %v585 = vld [vmem:[#allocation2 + $0x984] sm:$0xff]
    %v586 = vld [vmem:[#allocation2 + $0x98c] sm:$0xff]
    %v587 = vld [vmem:[#allocation2 + $0x994] sm:$0xff]
    %v588 = vld [vmem:[#allocation2 + $0x99c] sm:$0xf]
    %v589 = vld [vmem:[#allocation2 + $0x9a0] sm:$0xff]
    %v590 = vld [vmem:[#allocation2 + $0x9a8] sm:$0xff]
    %v591 = vld [vmem:[#allocation2 + $0x9b0] sm:$0xff]
    %v592 = vld [vmem:[#allocation2 + $0x9b8] sm:$0xf]
    %v593 = vld [vmem:[#allocation2 + $0x9bc] sm:$0xff]
    %v594 = vld [vmem:[#allocation2 + $0x9c4] sm:$0xff]
    %v595 = vld [vmem:[#allocation2 + $0x9cc] sm:$0xff]
    %v596 = vld [vmem:[#allocation2 + $0x9d4] sm:$0xf]
    %v597 = vld [vmem:[#allocation2 + $0x9d8] sm:$0xff]
    %v598 = vld [vmem:[#allocation2 + $0x9e0] sm:$0xff]
    %v599 = vld [vmem:[#allocation2 + $0x9e8] sm:$0xff]
    %v600 = vld [vmem:[#allocation2 + $0x9f0] sm:$0xf]
    %v601 = vld [vmem:[#allocation2 + $0x9f4] sm:$0xff]
    %v602 = vld [vmem:[#allocation2 + $0x9fc] sm:$0xff]
    %v603 = vld [vmem:[#allocation2 + $0xa04] sm:$0xff]
    %v604 = vld [vmem:[#allocation2 + $0xa0c] sm:$0xf]
    %v605 = vld [vmem:[#allocation2 + $0xa10] sm:$0xff]
    %v606 = vld [vmem:[#allocation2 + $0xa18] sm:$0xff]
    %v607 = vld [vmem:[#allocation2 + $0xa20] sm:$0xff]
    %v608 = vld [vmem:[#allocation2 + $0xa28] sm:$0xf]
    %v609 = vld [vmem:[#allocation2 + $0xa2c] sm:$0xff]
    %v610 = vld [vmem:[#allocation2 + $0xa34] sm:$0xff]
    %v611 = vld [vmem:[#allocation2 + $0xa3c] sm:$0xff]
    %v612 = vld [vmem:[#allocation2 + $0xa44] sm:$0xf]
    %v613 = vld [vmem:[#allocation2 + $0xa48] sm:$0xff]
    %v614 = vld [vmem:[#allocation2 + $0xa50] sm:$0xff]
    %v615 = vld [vmem:[#allocation2 + $0xa58] sm:$0xff]
    %v616 = vld [vmem:[#allocation2 + $0xa60] sm:$0xf]
    %v617 = vld [vmem:[#allocation2 + $0xa64] sm:$0xff]
    %v618 = vld [vmem:[#allocation2 + $0xa6c] sm:$0xff]
    %v619 = vld [vmem:[#allocation2 + $0xa74] sm:$0xff]
    %v620 = vld [vmem:[#allocation2 + $0xa7c] sm:$0xf]
    %v621 = vld [vmem:[#allocation2 + $0xa80] sm:$0xff]
    %v622 = vld [vmem:[#allocation2 + $0xa88] sm:$0xff]
    %v623 = vld [vmem:[#allocation2 + $0xa90] sm:$0xff]
    %v624 = vld [vmem:[#allocation2 + $0xa98] sm:$0xf]
    %v625 = vld [vmem:[#allocation2 + $0xa9c] sm:$0xff]
    %v626 = vld [vmem:[#allocation2 + $0xaa4] sm:$0xff]
    %v627 = vld [vmem:[#allocation2 + $0xaac] sm:$0xff]
    %v628 = vld [vmem:[#allocation2 + $0xab4] sm:$0xf]
    %v629 = vld [vmem:[#allocation2 + $0xab8] sm:$0xff]
    %v630 = vld [vmem:[#allocation2 + $0xac0] sm:$0xff]
    %v631 = vld [vmem:[#allocation2 + $0xac8] sm:$0xff]
    %v632 = vld [vmem:[#allocation2 + $0xad0] sm:$0xf]
    %v633 = vld [vmem:[#allocation2 + $0xad4] sm:$0xff]
    %v634 = vld [vmem:[#allocation2 + $0xadc] sm:$0xff]
    %v635 = vld [vmem:[#allocation2 + $0xae4] sm:$0xff]
    %v636 = vld [vmem:[#allocation2 + $0xaec] sm:$0xf]
    %v637 = vld [vmem:[#allocation2 + $0xaf0] sm:$0xff]
    %v638 = vld [vmem:[#allocation2 + $0xaf8] sm:$0xff]
    %v639 = vld [vmem:[#allocation2 + $0xb00] sm:$0xff]
    %v640 = vld [vmem:[#allocation2 + $0xb08] sm:$0xf]
    %v641 = vld [vmem:[#allocation2 + $0xb0c] sm:$0xff]
    %v642 = vld [vmem:[#allocation2 + $0xb14] sm:$0xff]
    %v643 = vld [vmem:[#allocation2 + $0xb1c] sm:$0xff]
    %v644 = vld [vmem:[#allocation2 + $0xb24] sm:$0xf]
    %v645 = vld [vmem:[#allocation2 + $0xb28] sm:$0xff]
    %v646 = vld [vmem:[#allocation2 + $0xb30] sm:$0xff]
    %v647 = vld [vmem:[#allocation2 + $0xb38] sm:$0xff]
    %v648 = vld [vmem:[#allocation2 + $0xb40] sm:$0xf]
    %v649 = vld [vmem:[#allocation2 + $0xb44] sm:$0xff]
    %v650 = vld [vmem:[#allocation2 + $0xb4c] sm:$0xff]
    %v651 = vld [vmem:[#allocation2 + $0xb54] sm:$0xff]
    %v652 = vld [vmem:[#allocation2 + $0xb5c] sm:$0xf]
    %v653 = vld [vmem:[#allocation2 + $0xb60] sm:$0xff]
    %v654 = vld [vmem:[#allocation2 + $0xb68] sm:$0xff]
    %v655 = vld [vmem:[#allocation2 + $0xb70] sm:$0xff]
    %v656 = vld [vmem:[#allocation2 + $0xb78] sm:$0xf]
    %v657 = vld [vmem:[#allocation2 + $0xb7c] sm:$0xff]
    %v658 = vld [vmem:[#allocation2 + $0xb84] sm:$0xff]
    %v659 = vld [vmem:[#allocation2 + $0xb8c] sm:$0xff]
    %v660 = vld [vmem:[#allocation2 + $0xb94] sm:$0xf]
    %v661 = vld [vmem:[#allocation2 + $0xb98] sm:$0xff]
    %v662 = vld [vmem:[#allocation2 + $0xba0] sm:$0xff]
    %v663 = vld [vmem:[#allocation2 + $0xba8] sm:$0xff]
    %v664 = vld [vmem:[#allocation2 + $0xbb0] sm:$0xf]
    %v665 = vld [vmem:[#allocation2 + $0xbb4] sm:$0xff]
    %v666 = vld [vmem:[#allocation2 + $0xbbc] sm:$0xff]
    %v667 = vld [vmem:[#allocation2 + $0xbc4] sm:$0xff]
    %v668 = vld [vmem:[#allocation2 + $0xbcc] sm:$0xf]
    %v669 = vld [vmem:[#allocation2 + $0xbd0] sm:$0xff]
    %v670 = vld [vmem:[#allocation2 + $0xbd8] sm:$0xff]
    %v671 = vld [vmem:[#allocation2 + $0xbe0] sm:$0xff]
    %v672 = vld [vmem:[#allocation2 + $0xbe8] sm:$0xf]
    %v673 = vld [vmem:[#allocation2 + $0xbec] sm:$0xff]
    %v674 = vld [vmem:[#allocation2 + $0xbf4] sm:$0xff]
    %v675 = vld [vmem:[#allocation2 + $0xbfc] sm:$0xff]
    %v676 = vld [vmem:[#allocation2 + $0xc04] sm:$0xf]
    %v677 = vld [vmem:[#allocation2 + $0xc08] sm:$0xff]
    %v678 = vld [vmem:[#allocation2 + $0xc10] sm:$0xff]
    %v679 = vld [vmem:[#allocation2 + $0xc18] sm:$0xff]
    %v680 = vld [vmem:[#allocation2 + $0xc20] sm:$0xf]
    %v681 = vld [vmem:[#allocation2 + $0xc24] sm:$0xff]
    %v682 = vld [vmem:[#allocation2 + $0xc2c] sm:$0xff]
    %v683 = vld [vmem:[#allocation2 + $0xc34] sm:$0xff]
    %v684 = vld [vmem:[#allocation2 + $0xc3c] sm:$0xf]
    %v685 = vld [vmem:[#allocation2 + $0xc40] sm:$0xff]
    %v686 = vld [vmem:[#allocation2 + $0xc48] sm:$0xff]
    %v687 = vld [vmem:[#allocation2 + $0xc50] sm:$0xff]
    %v688 = vld [vmem:[#allocation2 + $0xc58] sm:$0xf]
    %v689 = vld [vmem:[#allocation2 + $0xc5c] sm:$0xff]
    %v690 = vld [vmem:[#allocation2 + $0xc64] sm:$0xff]
    %v691 = vld [vmem:[#allocation2 + $0xc6c] sm:$0xff]
    %v692 = vld [vmem:[#allocation2 + $0xc74] sm:$0xf]
    %v693 = vld [vmem:[#allocation2 + $0xc78] sm:$0xff]
    %v694 = vld [vmem:[#allocation2 + $0xc80] sm:$0xff]
    %v695 = vld [vmem:[#allocation2 + $0xc88] sm:$0xff]
    %v696 = vld [vmem:[#allocation2 + $0xc90] sm:$0xf]
    %v697 = vld [vmem:[#allocation2 + $0xc94] sm:$0xff]
    %v698 = vld [vmem:[#allocation2 + $0xc9c] sm:$0xff]
    %v699 = vld [vmem:[#allocation2 + $0xca4] sm:$0xff]
    %v700 = vld [vmem:[#allocation2 + $0xcac] sm:$0xf]
    %v701 = vld [vmem:[#allocation2 + $0xcb0] sm:$0xff]
    %v702 = vld [vmem:[#allocation2 + $0xcb8] sm:$0xff]
    %v703 = vld [vmem:[#allocation2 + $0xcc0] sm:$0xff]
    %v704 = vld [vmem:[#allocation2 + $0xcc8] sm:$0xf]
    %v705 = vld [vmem:[#allocation2 + $0xccc] sm:$0xff]
    %v706 = vld [vmem:[#allocation2 + $0xcd4] sm:$0xff]
    %v707 = vld [vmem:[#allocation2 + $0xcdc] sm:$0xff]
    %v708 = vld [vmem:[#allocation2 + $0xce4] sm:$0xf]
    %v709 = vld [vmem:[#allocation2 + $0xce8] sm:$0xff]
    %v710 = vld [vmem:[#allocation2 + $0xcf0] sm:$0xff]
    %v711 = vld [vmem:[#allocation2 + $0xcf8] sm:$0xff]
    %v712 = vld [vmem:[#allocation2 + $0xd00] sm:$0xf]
    %v713 = vld [vmem:[#allocation2 + $0xd04] sm:$0xff]
    %v714 = vld [vmem:[#allocation2 + $0xd0c] sm:$0xff]
    %v715 = vld [vmem:[#allocation2 + $0xd14] sm:$0xff]
    %v716 = vld [vmem:[#allocation2 + $0xd1c] sm:$0xf]
    %v717 = vld [vmem:[#allocation2 + $0xd20] sm:$0xff]
    %v718 = vld [vmem:[#allocation2 + $0xd28] sm:$0xff]
    %v719 = vld [vmem:[#allocation2 + $0xd30] sm:$0xff]
    %v720 = vld [vmem:[#allocation2 + $0xd38] sm:$0xf]
    %v721 = vld [vmem:[#allocation2 + $0xd3c] sm:$0xff]
    %v722 = vld [vmem:[#allocation2 + $0xd44] sm:$0xff]
    %v723 = vld [vmem:[#allocation2 + $0xd4c] sm:$0xff]
    %v724 = vld [vmem:[#allocation2 + $0xd54] sm:$0xf]
    %v725 = vld [vmem:[#allocation2 + $0xd58] sm:$0xff]
    %v726 = vld [vmem:[#allocation2 + $0xd60] sm:$0xff]
    %v727 = vld [vmem:[#allocation2 + $0xd68] sm:$0xff]
    %v728 = vld [vmem:[#allocation2 + $0xd70] sm:$0xf]
    %v729 = vld [vmem:[#allocation2 + $0xd74] sm:$0xff]
    %v730 = vld [vmem:[#allocation2 + $0xd7c] sm:$0xff]
    %v731 = vld [vmem:[#allocation2 + $0xd84] sm:$0xff]
    %v732 = vld [vmem:[#allocation2 + $0xd8c] sm:$0xf]
    %v733 = vld [vmem:[#allocation2 + $0xd90] sm:$0xff]
    %v734 = vld [vmem:[#allocation2 + $0xd98] sm:$0xff]
    %v735 = vld [vmem:[#allocation2 + $0xda0] sm:$0xff]
    %v736 = vld [vmem:[#allocation2 + $0xda8] sm:$0xf]
    %v737 = vld [vmem:[#allocation2 + $0xdac] sm:$0xff]
    %v738 = vld [vmem:[#allocation2 + $0xdb4] sm:$0xff]
    %v739 = vld [vmem:[#allocation2 + $0xdbc] sm:$0xff]
    %v740 = vld [vmem:[#allocation2 + $0xdc4] sm:$0xf]
    %v741 = vld [vmem:[#allocation2 + $0xdc8] sm:$0xff]
    %v742 = vld [vmem:[#allocation2 + $0xdd0] sm:$0xff]
    %v743 = vld [vmem:[#allocation2 + $0xdd8] sm:$0xff]
    %v744 = vld [vmem:[#allocation2 + $0xde0] sm:$0xf]
    %v745 = vld [vmem:[#allocation2 + $0xde4] sm:$0xff]
    %v746 = vld [vmem:[#allocation2 + $0xdec] sm:$0xff]
    %v747 = vld [vmem:[#allocation2 + $0xdf4] sm:$0xff]
    %v748 = vld [vmem:[#allocation2 + $0xdfc] sm:$0xf]
    %v749 = vld [vmem:[#allocation5] sm:$0xff]
    %v751 = vlaneseq
    %v752 = vshrl.u32 %v751, 7
    %v753 = vsub.s32 0, %v752
    %v754 = vrot.slane %v749, %v753
    %v755 = vlaneseq
    %v756 = vshrl.u32 %v755, 7
    %v757 = vsub.s32 1, %v756
    %v758 = vrot.slane %v749, %v757
    %v759 = vlaneseq
    %v760 = vshrl.u32 %v759, 7
    %v761 = vsub.s32 2, %v760
    %v762 = vrot.slane %v749, %v761
    %v763 = vlaneseq
    %v764 = vshrl.u32 %v763, 7
    %v765 = vsub.s32 3, %v764
    %v766 = vrot.slane %v749, %v765
    %v767 = vlaneseq
    %v768 = vshrl.u32 %v767, 7
    %v769 = vsub.s32 4, %v768
    %v770 = vrot.slane %v749, %v769
    %v771 = vlaneseq
    %v772 = vshrl.u32 %v771, 7
    %v773 = vsub.s32 5, %v772
    %v774 = vrot.slane %v749, %v773
    %v775 = vlaneseq
    %v776 = vshrl.u32 %v775, 7
    %v777 = vsub.s32 6, %v776
    %v778 = vrot.slane %v749, %v777
    %v1298 = vunpack.c.l.b16 %v237
    %v1299 = vunpack.c.h.b16 %v237
    %v1300 = vunpack.c.l.b16 %v238
    %v1301 = vunpack.c.h.b16 %v238
    %v1302 = vunpack.c.l.b16 %v239
    %v1303 = vunpack.c.h.b16 %v239
    %v1304 = vunpack.c.l.b16 %v240
    %v1305 = vunpack.c.l.b16 %v241
    %v1306 = vunpack.c.h.b16 %v241
    %v1307 = vunpack.c.l.b16 %v242
    %v1308 = vunpack.c.h.b16 %v242
    %v1309 = vunpack.c.l.b16 %v243
    %v1310 = vunpack.c.h.b16 %v243
    %v1311 = vunpack.c.l.b16 %v244
    %v1312 = vunpack.c.l.b16 %v245
    %v1313 = vunpack.c.h.b16 %v245
    %v1314 = vunpack.c.l.b16 %v246
    %v1315 = vunpack.c.h.b16 %v246
    %v1316 = vunpack.c.l.b16 %v247
    %v1317 = vunpack.c.h.b16 %v247
    %v1318 = vunpack.c.l.b16 %v248
    %v1319 = vunpack.c.l.b16 %v249
    %v1320 = vunpack.c.h.b16 %v249
    %v1321 = vunpack.c.l.b16 %v250
    %v1322 = vunpack.c.h.b16 %v250
    %v1323 = vunpack.c.l.b16 %v251
    %v1324 = vunpack.c.h.b16 %v251
    %v1325 = vunpack.c.l.b16 %v252
    %v1326 = vunpack.c.l.b16 %v253
    %v1327 = vunpack.c.h.b16 %v253
    %v1328 = vunpack.c.l.b16 %v254
    %v1329 = vunpack.c.h.b16 %v254
    %v1330 = vunpack.c.l.b16 %v255
    %v1331 = vunpack.c.h.b16 %v255
    %v1332 = vunpack.c.l.b16 %v256
    %v1333 = vunpack.c.l.b16 %v257
    %v1334 = vunpack.c.h.b16 %v257
    %v1335 = vunpack.c.l.b16 %v258
    %v1336 = vunpack.c.h.b16 %v258
    %v1337 = vunpack.c.l.b16 %v259
    %v1338 = vunpack.c.h.b16 %v259
    %v1339 = vunpack.c.l.b16 %v260
    %v1340 = vunpack.c.l.b16 %v261
    %v1341 = vunpack.c.h.b16 %v261
    %v1342 = vunpack.c.l.b16 %v262
    %v1343 = vunpack.c.h.b16 %v262
    %v1344 = vunpack.c.l.b16 %v263
    %v1345 = vunpack.c.h.b16 %v263
    %v1346 = vunpack.c.l.b16 %v264
    %v1347 = vunpack.c.l.b16 %v265
    %v1348 = vunpack.c.h.b16 %v265
    %v1349 = vunpack.c.l.b16 %v266
    %v1350 = vunpack.c.h.b16 %v266
    %v1351 = vunpack.c.l.b16 %v267
    %v1352 = vunpack.c.h.b16 %v267
    %v1353 = vunpack.c.l.b16 %v268
    %v1354 = vunpack.c.l.b16 %v269
    %v1355 = vunpack.c.h.b16 %v269
    %v1356 = vunpack.c.l.b16 %v270
    %v1357 = vunpack.c.h.b16 %v270
    %v1358 = vunpack.c.l.b16 %v271
    %v1359 = vunpack.c.h.b16 %v271
    %v1360 = vunpack.c.l.b16 %v272
    %v1361 = vunpack.c.l.b16 %v273
    %v1362 = vunpack.c.h.b16 %v273
    %v1363 = vunpack.c.l.b16 %v274
    %v1364 = vunpack.c.h.b16 %v274
    %v1365 = vunpack.c.l.b16 %v275
    %v1366 = vunpack.c.h.b16 %v275
    %v1367 = vunpack.c.l.b16 %v276
    %v1368 = vunpack.c.l.b16 %v277
    %v1369 = vunpack.c.h.b16 %v277
    %v1370 = vunpack.c.l.b16 %v278
    %v1371 = vunpack.c.h.b16 %v278
    %v1372 = vunpack.c.l.b16 %v279
    %v1373 = vunpack.c.h.b16 %v279
    %v1374 = vunpack.c.l.b16 %v280
    %v1375 = vunpack.c.l.b16 %v281
    %v1376 = vunpack.c.h.b16 %v281
    %v1377 = vunpack.c.l.b16 %v282
    %v1378 = vunpack.c.h.b16 %v282
    %v1379 = vunpack.c.l.b16 %v283
    %v1380 = vunpack.c.h.b16 %v283
    %v1381 = vunpack.c.l.b16 %v284
    %v1382 = vunpack.c.l.b16 %v285
    %v1383 = vunpack.c.h.b16 %v285
    %v1384 = vunpack.c.l.b16 %v286
    %v1385 = vunpack.c.h.b16 %v286
    %v1386 = vunpack.c.l.b16 %v287
    %v1387 = vunpack.c.h.b16 %v287
    %v1388 = vunpack.c.l.b16 %v288
    %v1389 = vunpack.c.l.b16 %v289
    %v1390 = vunpack.c.h.b16 %v289
    %v1391 = vunpack.c.l.b16 %v290
    %v1392 = vunpack.c.h.b16 %v290
    %v1393 = vunpack.c.l.b16 %v291
    %v1394 = vunpack.c.h.b16 %v291
    %v1395 = vunpack.c.l.b16 %v292
    %v1396 = vunpack.c.l.b16 %v293
    %v1397 = vunpack.c.h.b16 %v293
    %v1398 = vunpack.c.l.b16 %v294
    %v1399 = vunpack.c.h.b16 %v294
    %v1400 = vunpack.c.l.b16 %v295
    %v1401 = vunpack.c.h.b16 %v295
    %v1402 = vunpack.c.l.b16 %v296
    %v1403 = vunpack.c.l.b16 %v297
    %v1404 = vunpack.c.h.b16 %v297
    %v1405 = vunpack.c.l.b16 %v298
    %v1406 = vunpack.c.h.b16 %v298
    %v1407 = vunpack.c.l.b16 %v299
    %v1408 = vunpack.c.h.b16 %v299
    %v1409 = vunpack.c.l.b16 %v300
    %v1410 = vunpack.c.l.b16 %v301
    %v1411 = vunpack.c.h.b16 %v301
    %v1412 = vunpack.c.l.b16 %v302
    %v1413 = vunpack.c.h.b16 %v302
    %v1414 = vunpack.c.l.b16 %v303
    %v1415 = vunpack.c.h.b16 %v303
    %v1416 = vunpack.c.l.b16 %v304
    %v1417 = vunpack.c.l.b16 %v305
    %v1418 = vunpack.c.h.b16 %v305
    %v1419 = vunpack.c.l.b16 %v306
    %v1420 = vunpack.c.h.b16 %v306
    %v1421 = vunpack.c.l.b16 %v307
    %v1422 = vunpack.c.h.b16 %v307
    %v1423 = vunpack.c.l.b16 %v308
    %v1424 = vunpack.c.l.b16 %v309
    %v1425 = vunpack.c.h.b16 %v309
    %v1426 = vunpack.c.l.b16 %v310
    %v1427 = vunpack.c.h.b16 %v310
    %v1428 = vunpack.c.l.b16 %v311
    %v1429 = vunpack.c.h.b16 %v311
    %v1430 = vunpack.c.l.b16 %v312
    %v1431 = vunpack.c.l.b16 %v313
    %v1432 = vunpack.c.h.b16 %v313
    %v1433 = vunpack.c.l.b16 %v314
    %v1434 = vunpack.c.h.b16 %v314
    %v1435 = vunpack.c.l.b16 %v315
    %v1436 = vunpack.c.h.b16 %v315
    %v1437 = vunpack.c.l.b16 %v316
    %v1438 = vunpack.c.l.b16 %v317
    %v1439 = vunpack.c.h.b16 %v317
    %v1440 = vunpack.c.l.b16 %v318
    %v1441 = vunpack.c.h.b16 %v318
    %v1442 = vunpack.c.l.b16 %v319
    %v1443 = vunpack.c.h.b16 %v319
    %v1444 = vunpack.c.l.b16 %v320
    %v1445 = vunpack.c.l.b16 %v321
    %v1446 = vunpack.c.h.b16 %v321
    %v1447 = vunpack.c.l.b16 %v322
    %v1448 = vunpack.c.h.b16 %v322
    %v1449 = vunpack.c.l.b16 %v323
    %v1450 = vunpack.c.h.b16 %v323
    %v1451 = vunpack.c.l.b16 %v324
    %v1452 = vunpack.c.l.b16 %v325
    %v1453 = vunpack.c.h.b16 %v325
    %v1454 = vunpack.c.l.b16 %v326
    %v1455 = vunpack.c.h.b16 %v326
    %v1456 = vunpack.c.l.b16 %v327
    %v1457 = vunpack.c.h.b16 %v327
    %v1458 = vunpack.c.l.b16 %v328
    %v1459 = vunpack.c.l.b16 %v329
    %v1460 = vunpack.c.h.b16 %v329
    %v1461 = vunpack.c.l.b16 %v330
    %v1462 = vunpack.c.h.b16 %v330
    %v1463 = vunpack.c.l.b16 %v331
    %v1464 = vunpack.c.h.b16 %v331
    %v1465 = vunpack.c.l.b16 %v332
    %v1466 = vunpack.c.l.b16 %v333
    %v1467 = vunpack.c.h.b16 %v333
    %v1468 = vunpack.c.l.b16 %v334
    %v1469 = vunpack.c.h.b16 %v334
    %v1470 = vunpack.c.l.b16 %v335
    %v1471 = vunpack.c.h.b16 %v335
    %v1472 = vunpack.c.l.b16 %v336
    %v1473 = vunpack.c.l.b16 %v337
    %v1474 = vunpack.c.h.b16 %v337
    %v1475 = vunpack.c.l.b16 %v338
    %v1476 = vunpack.c.h.b16 %v338
    %v1477 = vunpack.c.l.b16 %v339
    %v1478 = vunpack.c.h.b16 %v339
    %v1479 = vunpack.c.l.b16 %v340
    %v1480 = vunpack.c.l.b16 %v341
    %v1481 = vunpack.c.h.b16 %v341
    %v1482 = vunpack.c.l.b16 %v342
    %v1483 = vunpack.c.h.b16 %v342
    %v1484 = vunpack.c.l.b16 %v343
    %v1485 = vunpack.c.h.b16 %v343
    %v1486 = vunpack.c.l.b16 %v344
    %v1487 = vunpack.c.l.b16 %v345
    %v1488 = vunpack.c.h.b16 %v345
    %v1489 = vunpack.c.l.b16 %v346
    %v1490 = vunpack.c.h.b16 %v346
    %v1491 = vunpack.c.l.b16 %v347
    %v1492 = vunpack.c.h.b16 %v347
    %v1493 = vunpack.c.l.b16 %v348
    %v1494 = vunpack.c.l.b16 %v349
    %v1495 = vunpack.c.h.b16 %v349
    %v1496 = vunpack.c.l.b16 %v350
    %v1497 = vunpack.c.h.b16 %v350
    %v1498 = vunpack.c.l.b16 %v351
    %v1499 = vunpack.c.h.b16 %v351
    %v1500 = vunpack.c.l.b16 %v352
    %v1501 = vunpack.c.l.b16 %v353
    %v1502 = vunpack.c.h.b16 %v353
    %v1503 = vunpack.c.l.b16 %v354
    %v1504 = vunpack.c.h.b16 %v354
    %v1505 = vunpack.c.l.b16 %v355
    %v1506 = vunpack.c.h.b16 %v355
    %v1507 = vunpack.c.l.b16 %v356
    %v1508 = vunpack.c.l.b16 %v357
    %v1509 = vunpack.c.h.b16 %v357
    %v1510 = vunpack.c.l.b16 %v358
    %v1511 = vunpack.c.h.b16 %v358
    %v1512 = vunpack.c.l.b16 %v359
    %v1513 = vunpack.c.h.b16 %v359
    %v1514 = vunpack.c.l.b16 %v360
    %v1515 = vunpack.c.l.b16 %v361
    %v1516 = vunpack.c.h.b16 %v361
    %v1517 = vunpack.c.l.b16 %v362
    %v1518 = vunpack.c.h.b16 %v362
    %v1519 = vunpack.c.l.b16 %v363
    %v1520 = vunpack.c.h.b16 %v363
    %v1521 = vunpack.c.l.b16 %v364
    %v1522 = vunpack.c.l.b16 %v365
    %v1523 = vunpack.c.h.b16 %v365
    %v1524 = vunpack.c.l.b16 %v366
    %v1525 = vunpack.c.h.b16 %v366
    %v1526 = vunpack.c.l.b16 %v367
    %v1527 = vunpack.c.h.b16 %v367
    %v1528 = vunpack.c.l.b16 %v368
    %v1529 = vunpack.c.l.b16 %v369
    %v1530 = vunpack.c.h.b16 %v369
    %v1531 = vunpack.c.l.b16 %v370
    %v1532 = vunpack.c.h.b16 %v370
    %v1533 = vunpack.c.l.b16 %v371
    %v1534 = vunpack.c.h.b16 %v371
    %v1535 = vunpack.c.l.b16 %v372
    %v1536 = vunpack.c.l.b16 %v373
    %v1537 = vunpack.c.h.b16 %v373
    %v1538 = vunpack.c.l.b16 %v374
    %v1539 = vunpack.c.h.b16 %v374
    %v1540 = vunpack.c.l.b16 %v375
    %v1541 = vunpack.c.h.b16 %v375
    %v1542 = vunpack.c.l.b16 %v376
    %v1543 = vunpack.c.l.b16 %v377
    %v1544 = vunpack.c.h.b16 %v377
    %v1545 = vunpack.c.l.b16 %v378
    %v1546 = vunpack.c.h.b16 %v378
    %v1547 = vunpack.c.l.b16 %v379
    %v1548 = vunpack.c.h.b16 %v379
    %v1549 = vunpack.c.l.b16 %v380
    %v1550 = vunpack.c.l.b16 %v381
    %v1551 = vunpack.c.h.b16 %v381
    %v1552 = vunpack.c.l.b16 %v382
    %v1553 = vunpack.c.h.b16 %v382
    %v1554 = vunpack.c.l.b16 %v383
    %v1555 = vunpack.c.h.b16 %v383
    %v1556 = vunpack.c.l.b16 %v384
    %v1557 = vunpack.c.l.b16 %v385
    %v1558 = vunpack.c.h.b16 %v385
    %v1559 = vunpack.c.l.b16 %v386
    %v1560 = vunpack.c.h.b16 %v386
    %v1561 = vunpack.c.l.b16 %v387
    %v1562 = vunpack.c.h.b16 %v387
    %v1563 = vunpack.c.l.b16 %v388
    %v1564 = vunpack.c.l.b16 %v389
    %v1565 = vunpack.c.h.b16 %v389
    %v1566 = vunpack.c.l.b16 %v390
    %v1567 = vunpack.c.h.b16 %v390
    %v1568 = vunpack.c.l.b16 %v391
    %v1569 = vunpack.c.h.b16 %v391
    %v1570 = vunpack.c.l.b16 %v392
    %v1571 = vunpack.c.l.b16 %v393
    %v1572 = vunpack.c.h.b16 %v393
    %v1573 = vunpack.c.l.b16 %v394
    %v1574 = vunpack.c.h.b16 %v394
    %v1575 = vunpack.c.l.b16 %v395
    %v1576 = vunpack.c.h.b16 %v395
    %v1577 = vunpack.c.l.b16 %v396
    %v1578 = vunpack.c.l.b16 %v397
    %v1579 = vunpack.c.h.b16 %v397
    %v1580 = vunpack.c.l.b16 %v398
    %v1581 = vunpack.c.h.b16 %v398
    %v1582 = vunpack.c.l.b16 %v399
    %v1583 = vunpack.c.h.b16 %v399
    %v1584 = vunpack.c.l.b16 %v400
    %v1585 = vunpack.c.l.b16 %v401
    %v1586 = vunpack.c.h.b16 %v401
    %v1587 = vunpack.c.l.b16 %v402
    %v1588 = vunpack.c.h.b16 %v402
    %v1589 = vunpack.c.l.b16 %v403
    %v1590 = vunpack.c.h.b16 %v403
    %v1591 = vunpack.c.l.b16 %v404
    %v1592 = vunpack.c.l.b16 %v405
    %v1593 = vunpack.c.h.b16 %v405
    %v1594 = vunpack.c.l.b16 %v406
    %v1595 = vunpack.c.h.b16 %v406
    %v1596 = vunpack.c.l.b16 %v407
    %v1597 = vunpack.c.h.b16 %v407
    %v1598 = vunpack.c.l.b16 %v408
    %v1599 = vunpack.c.l.b16 %v409
    %v1600 = vunpack.c.h.b16 %v409
    %v1601 = vunpack.c.l.b16 %v410
    %v1602 = vunpack.c.h.b16 %v410
    %v1603 = vunpack.c.l.b16 %v411
    %v1604 = vunpack.c.h.b16 %v411
    %v1605 = vunpack.c.l.b16 %v412
    %v1606 = vunpack.c.l.b16 %v413
    %v1607 = vunpack.c.h.b16 %v413
    %v1608 = vunpack.c.l.b16 %v414
    %v1609 = vunpack.c.h.b16 %v414
    %v1610 = vunpack.c.l.b16 %v415
    %v1611 = vunpack.c.h.b16 %v415
    %v1612 = vunpack.c.l.b16 %v416
    %v1613 = vunpack.c.l.b16 %v417
    %v1614 = vunpack.c.h.b16 %v417
    %v1615 = vunpack.c.l.b16 %v418
    %v1616 = vunpack.c.h.b16 %v418
    %v1617 = vunpack.c.l.b16 %v419
    %v1618 = vunpack.c.h.b16 %v419
    %v1619 = vunpack.c.l.b16 %v420
    %v1620 = vunpack.c.l.b16 %v421
    %v1621 = vunpack.c.h.b16 %v421
    %v1622 = vunpack.c.l.b16 %v422
    %v1623 = vunpack.c.h.b16 %v422
    %v1624 = vunpack.c.l.b16 %v423
    %v1625 = vunpack.c.h.b16 %v423
    %v1626 = vunpack.c.l.b16 %v424
    %v1627 = vunpack.c.l.b16 %v425
    %v1628 = vunpack.c.h.b16 %v425
    %v1629 = vunpack.c.l.b16 %v426
    %v1630 = vunpack.c.h.b16 %v426
    %v1631 = vunpack.c.l.b16 %v427
    %v1632 = vunpack.c.h.b16 %v427
    %v1633 = vunpack.c.l.b16 %v428
    %v1634 = vunpack.c.l.b16 %v429
    %v1635 = vunpack.c.h.b16 %v429
    %v1636 = vunpack.c.l.b16 %v430
    %v1637 = vunpack.c.h.b16 %v430
    %v1638 = vunpack.c.l.b16 %v431
    %v1639 = vunpack.c.h.b16 %v431
    %v1640 = vunpack.c.l.b16 %v432
    %v1641 = vunpack.c.l.b16 %v433
    %v1642 = vunpack.c.h.b16 %v433
    %v1643 = vunpack.c.l.b16 %v434
    %v1644 = vunpack.c.h.b16 %v434
    %v1645 = vunpack.c.l.b16 %v435
    %v1646 = vunpack.c.h.b16 %v435
    %v1647 = vunpack.c.l.b16 %v436
    %v1648 = vunpack.c.l.b16 %v437
    %v1649 = vunpack.c.h.b16 %v437
    %v1650 = vunpack.c.l.b16 %v438
    %v1651 = vunpack.c.h.b16 %v438
    %v1652 = vunpack.c.l.b16 %v439
    %v1653 = vunpack.c.h.b16 %v439
    %v1654 = vunpack.c.l.b16 %v440
    %v1655 = vunpack.c.l.b16 %v441
    %v1656 = vunpack.c.h.b16 %v441
    %v1657 = vunpack.c.l.b16 %v442
    %v1658 = vunpack.c.h.b16 %v442
    %v1659 = vunpack.c.l.b16 %v443
    %v1660 = vunpack.c.h.b16 %v443
    %v1661 = vunpack.c.l.b16 %v444
    %v1662 = vunpack.c.l.b16 %v445
    %v1663 = vunpack.c.h.b16 %v445
    %v1664 = vunpack.c.l.b16 %v446
    %v1665 = vunpack.c.h.b16 %v446
    %v1666 = vunpack.c.l.b16 %v447
    %v1667 = vunpack.c.h.b16 %v447
    %v1668 = vunpack.c.l.b16 %v448
    %v1669 = vunpack.c.l.b16 %v449
    %v1670 = vunpack.c.h.b16 %v449
    %v1671 = vunpack.c.l.b16 %v450
    %v1672 = vunpack.c.h.b16 %v450
    %v1673 = vunpack.c.l.b16 %v451
    %v1674 = vunpack.c.h.b16 %v451
    %v1675 = vunpack.c.l.b16 %v452
    %v1676 = vunpack.c.l.b16 %v453
    %v1677 = vunpack.c.h.b16 %v453
    %v1678 = vunpack.c.l.b16 %v454
    %v1679 = vunpack.c.h.b16 %v454
    %v1680 = vunpack.c.l.b16 %v455
    %v1681 = vunpack.c.h.b16 %v455
    %v1682 = vunpack.c.l.b16 %v456
    %v1683 = vunpack.c.l.b16 %v457
    %v1684 = vunpack.c.h.b16 %v457
    %v1685 = vunpack.c.l.b16 %v458
    %v1686 = vunpack.c.h.b16 %v458
    %v1687 = vunpack.c.l.b16 %v459
    %v1688 = vunpack.c.h.b16 %v459
    %v1689 = vunpack.c.l.b16 %v460
    %v1690 = vunpack.c.l.b16 %v461
    %v1691 = vunpack.c.h.b16 %v461
    %v1692 = vunpack.c.l.b16 %v462
    %v1693 = vunpack.c.h.b16 %v462
    %v1694 = vunpack.c.l.b16 %v463
    %v1695 = vunpack.c.h.b16 %v463
    %v1696 = vunpack.c.l.b16 %v464
    %v1697 = vunpack.c.l.b16 %v465
    %v1698 = vunpack.c.h.b16 %v465
    %v1699 = vunpack.c.l.b16 %v466
    %v1700 = vunpack.c.h.b16 %v466
    %v1701 = vunpack.c.l.b16 %v467
    %v1702 = vunpack.c.h.b16 %v467
    %v1703 = vunpack.c.l.b16 %v468
    %v1704 = vunpack.c.l.b16 %v469
    %v1705 = vunpack.c.h.b16 %v469
    %v1706 = vunpack.c.l.b16 %v470
    %v1707 = vunpack.c.h.b16 %v470
    %v1708 = vunpack.c.l.b16 %v471
    %v1709 = vunpack.c.h.b16 %v471
    %v1710 = vunpack.c.l.b16 %v472
    %v1711 = vunpack.c.l.b16 %v473
    %v1712 = vunpack.c.h.b16 %v473
    %v1713 = vunpack.c.l.b16 %v474
    %v1714 = vunpack.c.h.b16 %v474
    %v1715 = vunpack.c.l.b16 %v475
    %v1716 = vunpack.c.h.b16 %v475
    %v1717 = vunpack.c.l.b16 %v476
    %v1718 = vunpack.c.l.b16 %v477
    %v1719 = vunpack.c.h.b16 %v477
    %v1720 = vunpack.c.l.b16 %v478
    %v1721 = vunpack.c.h.b16 %v478
    %v1722 = vunpack.c.l.b16 %v479
    %v1723 = vunpack.c.h.b16 %v479
    %v1724 = vunpack.c.l.b16 %v480
    %v1725 = vunpack.c.l.b16 %v481
    %v1726 = vunpack.c.h.b16 %v481
    %v1727 = vunpack.c.l.b16 %v482
    %v1728 = vunpack.c.h.b16 %v482
    %v1729 = vunpack.c.l.b16 %v483
    %v1730 = vunpack.c.h.b16 %v483
    %v1731 = vunpack.c.l.b16 %v484
    %v1732 = vunpack.c.l.b16 %v485
    %v1733 = vunpack.c.h.b16 %v485
    %v1734 = vunpack.c.l.b16 %v486
    %v1735 = vunpack.c.h.b16 %v486
    %v1736 = vunpack.c.l.b16 %v487
    %v1737 = vunpack.c.h.b16 %v487
    %v1738 = vunpack.c.l.b16 %v488
    %v1739 = vunpack.c.l.b16 %v489
    %v1740 = vunpack.c.h.b16 %v489
    %v1741 = vunpack.c.l.b16 %v490
    %v1742 = vunpack.c.h.b16 %v490
    %v1743 = vunpack.c.l.b16 %v491
    %v1744 = vunpack.c.h.b16 %v491
    %v1745 = vunpack.c.l.b16 %v492
    %v1746 = vunpack.c.l.b16 %v493
    %v1747 = vunpack.c.h.b16 %v493
    %v1748 = vunpack.c.l.b16 %v494
    %v1749 = vunpack.c.h.b16 %v494
    %v1750 = vunpack.c.l.b16 %v495
    %v1751 = vunpack.c.h.b16 %v495
    %v1752 = vunpack.c.l.b16 %v496
    %v1753 = vunpack.c.l.b16 %v497
    %v1754 = vunpack.c.h.b16 %v497
    %v1755 = vunpack.c.l.b16 %v498
    %v1756 = vunpack.c.h.b16 %v498
    %v1757 = vunpack.c.l.b16 %v499
    %v1758 = vunpack.c.h.b16 %v499
    %v1759 = vunpack.c.l.b16 %v500
    %v1760 = vunpack.c.l.b16 %v501
    %v1761 = vunpack.c.h.b16 %v501
    %v1762 = vunpack.c.l.b16 %v502
    %v1763 = vunpack.c.h.b16 %v502
    %v1764 = vunpack.c.l.b16 %v503
    %v1765 = vunpack.c.h.b16 %v503
    %v1766 = vunpack.c.l.b16 %v504
    %v1767 = vunpack.c.l.b16 %v505
    %v1768 = vunpack.c.h.b16 %v505
    %v1769 = vunpack.c.l.b16 %v506
    %v1770 = vunpack.c.h.b16 %v506
    %v1771 = vunpack.c.l.b16 %v507
    %v1772 = vunpack.c.h.b16 %v507
    %v1773 = vunpack.c.l.b16 %v508
    %v1774 = vunpack.c.l.b16 %v509
    %v1775 = vunpack.c.h.b16 %v509
    %v1776 = vunpack.c.l.b16 %v510
    %v1777 = vunpack.c.h.b16 %v510
    %v1778 = vunpack.c.l.b16 %v511
    %v1779 = vunpack.c.h.b16 %v511
    %v1780 = vunpack.c.l.b16 %v512
    %v1781 = vunpack.c.l.b16 %v513
    %v1782 = vunpack.c.h.b16 %v513
    %v1783 = vunpack.c.l.b16 %v514
    %v1784 = vunpack.c.h.b16 %v514
    %v1785 = vunpack.c.l.b16 %v515
    %v1786 = vunpack.c.h.b16 %v515
    %v1787 = vunpack.c.l.b16 %v516
    %v1788 = vunpack.c.l.b16 %v517
    %v1789 = vunpack.c.h.b16 %v517
    %v1790 = vunpack.c.l.b16 %v518
    %v1791 = vunpack.c.h.b16 %v518
    %v1792 = vunpack.c.l.b16 %v519
    %v1793 = vunpack.c.h.b16 %v519
    %v1794 = vunpack.c.l.b16 %v520
    %v1795 = vunpack.c.l.b16 %v521
    %v1796 = vunpack.c.h.b16 %v521
    %v1797 = vunpack.c.l.b16 %v522
    %v1798 = vunpack.c.h.b16 %v522
    %v1799 = vunpack.c.l.b16 %v523
    %v1800 = vunpack.c.h.b16 %v523
    %v1801 = vunpack.c.l.b16 %v524
    %v1802 = vunpack.c.l.b16 %v525
    %v1803 = vunpack.c.h.b16 %v525
    %v1804 = vunpack.c.l.b16 %v526
    %v1805 = vunpack.c.h.b16 %v526
    %v1806 = vunpack.c.l.b16 %v527
    %v1807 = vunpack.c.h.b16 %v527
    %v1808 = vunpack.c.l.b16 %v528
    %v1809 = vunpack.c.l.b16 %v529
    %v1810 = vunpack.c.h.b16 %v529
    %v1811 = vunpack.c.l.b16 %v530
    %v1812 = vunpack.c.h.b16 %v530
    %v1813 = vunpack.c.l.b16 %v531
    %v1814 = vunpack.c.h.b16 %v531
    %v1815 = vunpack.c.l.b16 %v532
    %v1816 = vunpack.c.l.b16 %v533
    %v1817 = vunpack.c.h.b16 %v533
    %v1818 = vunpack.c.l.b16 %v534
    %v1819 = vunpack.c.h.b16 %v534
    %v1820 = vunpack.c.l.b16 %v535
    %v1821 = vunpack.c.h.b16 %v535
    %v1822 = vunpack.c.l.b16 %v536
    %v1823 = vunpack.c.l.b16 %v537
    %v1824 = vunpack.c.h.b16 %v537
    %v1825 = vunpack.c.l.b16 %v538
    %v1826 = vunpack.c.h.b16 %v538
    %v1827 = vunpack.c.l.b16 %v539
    %v1828 = vunpack.c.h.b16 %v539
    %v1829 = vunpack.c.l.b16 %v540
    %v1830 = vunpack.c.l.b16 %v541
    %v1831 = vunpack.c.h.b16 %v541
    %v1832 = vunpack.c.l.b16 %v542
    %v1833 = vunpack.c.h.b16 %v542
    %v1834 = vunpack.c.l.b16 %v543
    %v1835 = vunpack.c.h.b16 %v543
    %v1836 = vunpack.c.l.b16 %v544
    %v1837 = vunpack.c.l.b16 %v545
    %v1838 = vunpack.c.h.b16 %v545
    %v1839 = vunpack.c.l.b16 %v546
    %v1840 = vunpack.c.h.b16 %v546
    %v1841 = vunpack.c.l.b16 %v547
    %v1842 = vunpack.c.h.b16 %v547
    %v1843 = vunpack.c.l.b16 %v548
    %v1844 = vunpack.c.l.b16 %v549
    %v1845 = vunpack.c.h.b16 %v549
    %v1846 = vunpack.c.l.b16 %v550
    %v1847 = vunpack.c.h.b16 %v550
    %v1848 = vunpack.c.l.b16 %v551
    %v1849 = vunpack.c.h.b16 %v551
    %v1850 = vunpack.c.l.b16 %v552
    %v1851 = vunpack.c.l.b16 %v553
    %v1852 = vunpack.c.h.b16 %v553
    %v1853 = vunpack.c.l.b16 %v554
    %v1854 = vunpack.c.h.b16 %v554
    %v1855 = vunpack.c.l.b16 %v555
    %v1856 = vunpack.c.h.b16 %v555
    %v1857 = vunpack.c.l.b16 %v556
    %v1858 = vunpack.c.l.b16 %v557
    %v1859 = vunpack.c.h.b16 %v557
    %v1860 = vunpack.c.l.b16 %v558
    %v1861 = vunpack.c.h.b16 %v558
    %v1862 = vunpack.c.l.b16 %v559
    %v1863 = vunpack.c.h.b16 %v559
    %v1864 = vunpack.c.l.b16 %v560
    %v1865 = vunpack.c.l.b16 %v561
    %v1866 = vunpack.c.h.b16 %v561
    %v1867 = vunpack.c.l.b16 %v562
    %v1868 = vunpack.c.h.b16 %v562
    %v1869 = vunpack.c.l.b16 %v563
    %v1870 = vunpack.c.h.b16 %v563
    %v1871 = vunpack.c.l.b16 %v564
    %v1872 = vunpack.c.l.b16 %v565
    %v1873 = vunpack.c.h.b16 %v565
    %v1874 = vunpack.c.l.b16 %v566
    %v1875 = vunpack.c.h.b16 %v566
    %v1876 = vunpack.c.l.b16 %v567
    %v1877 = vunpack.c.h.b16 %v567
    %v1878 = vunpack.c.l.b16 %v568
    %v1879 = vunpack.c.l.b16 %v569
    %v1880 = vunpack.c.h.b16 %v569
    %v1881 = vunpack.c.l.b16 %v570
    %v1882 = vunpack.c.h.b16 %v570
    %v1883 = vunpack.c.l.b16 %v571
    %v1884 = vunpack.c.h.b16 %v571
    %v1885 = vunpack.c.l.b16 %v572
    %v1886 = vunpack.c.l.b16 %v573
    %v1887 = vunpack.c.h.b16 %v573
    %v1888 = vunpack.c.l.b16 %v574
    %v1889 = vunpack.c.h.b16 %v574
    %v1890 = vunpack.c.l.b16 %v575
    %v1891 = vunpack.c.h.b16 %v575
    %v1892 = vunpack.c.l.b16 %v576
    %v1893 = vunpack.c.l.b16 %v577
    %v1894 = vunpack.c.h.b16 %v577
    %v1895 = vunpack.c.l.b16 %v578
    %v1896 = vunpack.c.h.b16 %v578
    %v1897 = vunpack.c.l.b16 %v579
    %v1898 = vunpack.c.h.b16 %v579
    %v1899 = vunpack.c.l.b16 %v580
    %v1900 = vunpack.c.l.b16 %v581
    %v1901 = vunpack.c.h.b16 %v581
    %v1902 = vunpack.c.l.b16 %v582
    %v1903 = vunpack.c.h.b16 %v582
    %v1904 = vunpack.c.l.b16 %v583
    %v1905 = vunpack.c.h.b16 %v583
    %v1906 = vunpack.c.l.b16 %v584
    %v1907 = vunpack.c.l.b16 %v585
    %v1908 = vunpack.c.h.b16 %v585
    %v1909 = vunpack.c.l.b16 %v586
    %v1910 = vunpack.c.h.b16 %v586
    %v1911 = vunpack.c.l.b16 %v587
    %v1912 = vunpack.c.h.b16 %v587
    %v1913 = vunpack.c.l.b16 %v588
    %v1914 = vunpack.c.l.b16 %v589
    %v1915 = vunpack.c.h.b16 %v589
    %v1916 = vunpack.c.l.b16 %v590
    %v1917 = vunpack.c.h.b16 %v590
    %v1918 = vunpack.c.l.b16 %v591
    %v1919 = vunpack.c.h.b16 %v591
    %v1920 = vunpack.c.l.b16 %v592
    %v1921 = vunpack.c.l.b16 %v593
    %v1922 = vunpack.c.h.b16 %v593
    %v1923 = vunpack.c.l.b16 %v594
    %v1924 = vunpack.c.h.b16 %v594
    %v1925 = vunpack.c.l.b16 %v595
    %v1926 = vunpack.c.h.b16 %v595
    %v1927 = vunpack.c.l.b16 %v596
    %v1928 = vunpack.c.l.b16 %v597
    %v1929 = vunpack.c.h.b16 %v597
    %v1930 = vunpack.c.l.b16 %v598
    %v1931 = vunpack.c.h.b16 %v598
    %v1932 = vunpack.c.l.b16 %v599
    %v1933 = vunpack.c.h.b16 %v599
    %v1934 = vunpack.c.l.b16 %v600
    %v1935 = vunpack.c.l.b16 %v601
    %v1936 = vunpack.c.h.b16 %v601
    %v1937 = vunpack.c.l.b16 %v602
    %v1938 = vunpack.c.h.b16 %v602
    %v1939 = vunpack.c.l.b16 %v603
    %v1940 = vunpack.c.h.b16 %v603
    %v1941 = vunpack.c.l.b16 %v604
    %v1942 = vunpack.c.l.b16 %v605
    %v1943 = vunpack.c.h.b16 %v605
    %v1944 = vunpack.c.l.b16 %v606
    %v1945 = vunpack.c.h.b16 %v606
    %v1946 = vunpack.c.l.b16 %v607
    %v1947 = vunpack.c.h.b16 %v607
    %v1948 = vunpack.c.l.b16 %v608
    %v1949 = vunpack.c.l.b16 %v609
    %v1950 = vunpack.c.h.b16 %v609
    %v1951 = vunpack.c.l.b16 %v610
    %v1952 = vunpack.c.h.b16 %v610
    %v1953 = vunpack.c.l.b16 %v611
    %v1954 = vunpack.c.h.b16 %v611
    %v1955 = vunpack.c.l.b16 %v612
    %v1956 = vunpack.c.l.b16 %v613
    %v1957 = vunpack.c.h.b16 %v613
    %v1958 = vunpack.c.l.b16 %v614
    %v1959 = vunpack.c.h.b16 %v614
    %v1960 = vunpack.c.l.b16 %v615
    %v1961 = vunpack.c.h.b16 %v615
    %v1962 = vunpack.c.l.b16 %v616
    %v1963 = vunpack.c.l.b16 %v617
    %v1964 = vunpack.c.h.b16 %v617
    %v1965 = vunpack.c.l.b16 %v618
    %v1966 = vunpack.c.h.b16 %v618
    %v1967 = vunpack.c.l.b16 %v619
    %v1968 = vunpack.c.h.b16 %v619
    %v1969 = vunpack.c.l.b16 %v620
    %v1970 = vunpack.c.l.b16 %v621
    %v1971 = vunpack.c.h.b16 %v621
    %v1972 = vunpack.c.l.b16 %v622
    %v1973 = vunpack.c.h.b16 %v622
    %v1974 = vunpack.c.l.b16 %v623
    %v1975 = vunpack.c.h.b16 %v623
    %v1976 = vunpack.c.l.b16 %v624
    %v1977 = vunpack.c.l.b16 %v625
    %v1978 = vunpack.c.h.b16 %v625
    %v1979 = vunpack.c.l.b16 %v626
    %v1980 = vunpack.c.h.b16 %v626
    %v1981 = vunpack.c.l.b16 %v627
    %v1982 = vunpack.c.h.b16 %v627
    %v1983 = vunpack.c.l.b16 %v628
    %v1984 = vunpack.c.l.b16 %v629
    %v1985 = vunpack.c.h.b16 %v629
    %v1986 = vunpack.c.l.b16 %v630
    %v1987 = vunpack.c.h.b16 %v630
    %v1988 = vunpack.c.l.b16 %v631
    %v1989 = vunpack.c.h.b16 %v631
    %v1990 = vunpack.c.l.b16 %v632
    %v1991 = vunpack.c.l.b16 %v633
    %v1992 = vunpack.c.h.b16 %v633
    %v1993 = vunpack.c.l.b16 %v634
    %v1994 = vunpack.c.h.b16 %v634
    %v1995 = vunpack.c.l.b16 %v635
    %v1996 = vunpack.c.h.b16 %v635
    %v1997 = vunpack.c.l.b16 %v636
    %v1998 = vunpack.c.l.b16 %v637
    %v1999 = vunpack.c.h.b16 %v637
    %v2000 = vunpack.c.l.b16 %v638
    %v2001 = vunpack.c.h.b16 %v638
    %v2002 = vunpack.c.l.b16 %v639
    %v2003 = vunpack.c.h.b16 %v639
    %v2004 = vunpack.c.l.b16 %v640
    %v2005 = vunpack.c.l.b16 %v641
    %v2006 = vunpack.c.h.b16 %v641
    %v2007 = vunpack.c.l.b16 %v642
    %v2008 = vunpack.c.h.b16 %v642
    %v2009 = vunpack.c.l.b16 %v643
    %v2010 = vunpack.c.h.b16 %v643
    %v2011 = vunpack.c.l.b16 %v644
    %v2012 = vunpack.c.l.b16 %v645
    %v2013 = vunpack.c.h.b16 %v645
    %v2014 = vunpack.c.l.b16 %v646
    %v2015 = vunpack.c.h.b16 %v646
    %v2016 = vunpack.c.l.b16 %v647
    %v2017 = vunpack.c.h.b16 %v647
    %v2018 = vunpack.c.l.b16 %v648
    %v2019 = vunpack.c.l.b16 %v649
    %v2020 = vunpack.c.h.b16 %v649
    %v2021 = vunpack.c.l.b16 %v650
    %v2022 = vunpack.c.h.b16 %v650
    %v2023 = vunpack.c.l.b16 %v651
    %v2024 = vunpack.c.h.b16 %v651
    %v2025 = vunpack.c.l.b16 %v652
    %v2026 = vunpack.c.l.b16 %v653
    %v2027 = vunpack.c.h.b16 %v653
    %v2028 = vunpack.c.l.b16 %v654
    %v2029 = vunpack.c.h.b16 %v654
    %v2030 = vunpack.c.l.b16 %v655
    %v2031 = vunpack.c.h.b16 %v655
    %v2032 = vunpack.c.l.b16 %v656
    %v2033 = vunpack.c.l.b16 %v657
    %v2034 = vunpack.c.h.b16 %v657
    %v2035 = vunpack.c.l.b16 %v658
    %v2036 = vunpack.c.h.b16 %v658
    %v2037 = vunpack.c.l.b16 %v659
    %v2038 = vunpack.c.h.b16 %v659
    %v2039 = vunpack.c.l.b16 %v660
    %v2040 = vunpack.c.l.b16 %v661
    %v2041 = vunpack.c.h.b16 %v661
    %v2042 = vunpack.c.l.b16 %v662
    %v2043 = vunpack.c.h.b16 %v662
    %v2044 = vunpack.c.l.b16 %v663
    %v2045 = vunpack.c.h.b16 %v663
    %v2046 = vunpack.c.l.b16 %v664
    %v2047 = vunpack.c.l.b16 %v665
    %v2048 = vunpack.c.h.b16 %v665
    %v2049 = vunpack.c.l.b16 %v666
    %v2050 = vunpack.c.h.b16 %v666
    %v2051 = vunpack.c.l.b16 %v667
    %v2052 = vunpack.c.h.b16 %v667
    %v2053 = vunpack.c.l.b16 %v668
    %v2054 = vunpack.c.l.b16 %v669
    %v2055 = vunpack.c.h.b16 %v669
    %v2056 = vunpack.c.l.b16 %v670
    %v2057 = vunpack.c.h.b16 %v670
    %v2058 = vunpack.c.l.b16 %v671
    %v2059 = vunpack.c.h.b16 %v671
    %v2060 = vunpack.c.l.b16 %v672
    %v2061 = vunpack.c.l.b16 %v673
    %v2062 = vunpack.c.h.b16 %v673
    %v2063 = vunpack.c.l.b16 %v674
    %v2064 = vunpack.c.h.b16 %v674
    %v2065 = vunpack.c.l.b16 %v675
    %v2066 = vunpack.c.h.b16 %v675
    %v2067 = vunpack.c.l.b16 %v676
    %v2068 = vunpack.c.l.b16 %v677
    %v2069 = vunpack.c.h.b16 %v677
    %v2070 = vunpack.c.l.b16 %v678
    %v2071 = vunpack.c.h.b16 %v678
    %v2072 = vunpack.c.l.b16 %v679
    %v2073 = vunpack.c.h.b16 %v679
    %v2074 = vunpack.c.l.b16 %v680
    %v2075 = vunpack.c.l.b16 %v681
    %v2076 = vunpack.c.h.b16 %v681
    %v2077 = vunpack.c.l.b16 %v682
    %v2078 = vunpack.c.h.b16 %v682
    %v2079 = vunpack.c.l.b16 %v683
    %v2080 = vunpack.c.h.b16 %v683
    %v2081 = vunpack.c.l.b16 %v684
    %v2082 = vunpack.c.l.b16 %v685
    %v2083 = vunpack.c.h.b16 %v685
    %v2084 = vunpack.c.l.b16 %v686
    %v2085 = vunpack.c.h.b16 %v686
    %v2086 = vunpack.c.l.b16 %v687
    %v2087 = vunpack.c.h.b16 %v687
    %v2088 = vunpack.c.l.b16 %v688
    %v2089 = vunpack.c.l.b16 %v689
    %v2090 = vunpack.c.h.b16 %v689
    %v2091 = vunpack.c.l.b16 %v690
    %v2092 = vunpack.c.h.b16 %v690
    %v2093 = vunpack.c.l.b16 %v691
    %v2094 = vunpack.c.h.b16 %v691
    %v2095 = vunpack.c.l.b16 %v692
    %v2096 = vunpack.c.l.b16 %v693
    %v2097 = vunpack.c.h.b16 %v693
    %v2098 = vunpack.c.l.b16 %v694
    %v2099 = vunpack.c.h.b16 %v694
    %v2100 = vunpack.c.l.b16 %v695
    %v2101 = vunpack.c.h.b16 %v695
    %v2102 = vunpack.c.l.b16 %v696
    %v2103 = vunpack.c.l.b16 %v697
    %v2104 = vunpack.c.h.b16 %v697
    %v2105 = vunpack.c.l.b16 %v698
    %v2106 = vunpack.c.h.b16 %v698
    %v2107 = vunpack.c.l.b16 %v699
    %v2108 = vunpack.c.h.b16 %v699
    %v2109 = vunpack.c.l.b16 %v700
    %v2110 = vunpack.c.l.b16 %v701
    %v2111 = vunpack.c.h.b16 %v701
    %v2112 = vunpack.c.l.b16 %v702
    %v2113 = vunpack.c.h.b16 %v702
    %v2114 = vunpack.c.l.b16 %v703
    %v2115 = vunpack.c.h.b16 %v703
    %v2116 = vunpack.c.l.b16 %v704
    %v2117 = vunpack.c.l.b16 %v705
    %v2118 = vunpack.c.h.b16 %v705
    %v2119 = vunpack.c.l.b16 %v706
    %v2120 = vunpack.c.h.b16 %v706
    %v2121 = vunpack.c.l.b16 %v707
    %v2122 = vunpack.c.h.b16 %v707
    %v2123 = vunpack.c.l.b16 %v708
    %v2124 = vunpack.c.l.b16 %v709
    %v2125 = vunpack.c.h.b16 %v709
    %v2126 = vunpack.c.l.b16 %v710
    %v2127 = vunpack.c.h.b16 %v710
    %v2128 = vunpack.c.l.b16 %v711
    %v2129 = vunpack.c.h.b16 %v711
    %v2130 = vunpack.c.l.b16 %v712
    %v2131 = vunpack.c.l.b16 %v713
    %v2132 = vunpack.c.h.b16 %v713
    %v2133 = vunpack.c.l.b16 %v714
    %v2134 = vunpack.c.h.b16 %v714
    %v2135 = vunpack.c.l.b16 %v715
    %v2136 = vunpack.c.h.b16 %v715
    %v2137 = vunpack.c.l.b16 %v716
    %v2138 = vunpack.c.l.b16 %v717
    %v2139 = vunpack.c.h.b16 %v717
    %v2140 = vunpack.c.l.b16 %v718
    %v2141 = vunpack.c.h.b16 %v718
    %v2142 = vunpack.c.l.b16 %v719
    %v2143 = vunpack.c.h.b16 %v719
    %v2144 = vunpack.c.l.b16 %v720
    %v2145 = vunpack.c.l.b16 %v721
    %v2146 = vunpack.c.h.b16 %v721
    %v2147 = vunpack.c.l.b16 %v722
    %v2148 = vunpack.c.h.b16 %v722
    %v2149 = vunpack.c.l.b16 %v723
    %v2150 = vunpack.c.h.b16 %v723
    %v2151 = vunpack.c.l.b16 %v724
    %v2152 = vunpack.c.l.b16 %v725
    %v2153 = vunpack.c.h.b16 %v725
    %v2154 = vunpack.c.l.b16 %v726
    %v2155 = vunpack.c.h.b16 %v726
    %v2156 = vunpack.c.l.b16 %v727
    %v2157 = vunpack.c.h.b16 %v727
    %v2158 = vunpack.c.l.b16 %v728
    %v2159 = vunpack.c.l.b16 %v729
    %v2160 = vunpack.c.h.b16 %v729
    %v2161 = vunpack.c.l.b16 %v730
    %v2162 = vunpack.c.h.b16 %v730
    %v2163 = vunpack.c.l.b16 %v731
    %v2164 = vunpack.c.h.b16 %v731
    %v2165 = vunpack.c.l.b16 %v732
    %v2166 = vunpack.c.l.b16 %v733
    %v2167 = vunpack.c.h.b16 %v733
    %v2168 = vunpack.c.l.b16 %v734
    %v2169 = vunpack.c.h.b16 %v734
    %v2170 = vunpack.c.l.b16 %v735
    %v2171 = vunpack.c.h.b16 %v735
    %v2172 = vunpack.c.l.b16 %v736
    %v2173 = vunpack.c.l.b16 %v737
    %v2174 = vunpack.c.h.b16 %v737
    %v2175 = vunpack.c.l.b16 %v738
    %v2176 = vunpack.c.h.b16 %v738
    %v2177 = vunpack.c.l.b16 %v739
    %v2178 = vunpack.c.h.b16 %v739
    %v2179 = vunpack.c.l.b16 %v740
    %v2180 = vunpack.c.l.b16 %v741
    %v2181 = vunpack.c.h.b16 %v741
    %v2182 = vunpack.c.l.b16 %v742
    %v2183 = vunpack.c.h.b16 %v742
    %v2184 = vunpack.c.l.b16 %v743
    %v2185 = vunpack.c.h.b16 %v743
    %v2186 = vunpack.c.l.b16 %v744
    %v2187 = vunpack.c.l.b16 %v745
    %v2188 = vunpack.c.h.b16 %v745
    %v2189 = vunpack.c.l.b16 %v746
    %v2190 = vunpack.c.h.b16 %v746
    %v2191 = vunpack.c.l.b16 %v747
    %v2192 = vunpack.c.h.b16 %v747
    %v2193 = vunpack.c.l.b16 %v748
    %v2194 = vpack.c.b16 %v1305, %v1298
    %v2195 = vpack.c.b16 %v1306, %v1299
    %v2196 = vpack.c.b16 %v1307, %v1300
    %v2197 = vpack.c.b16 %v1308, %v1301
    %v2198 = vpack.c.b16 %v1309, %v1302
    %v2199 = vpack.c.b16 %v1310, %v1303
    %v2200 = vpack.c.b16 %v1311, %v1304
    %v2201 = vpack.c.b16 %v1319, %v1312
    %v2202 = vpack.c.b16 %v1320, %v1313
    %v2203 = vpack.c.b16 %v1321, %v1314
    %v2204 = vpack.c.b16 %v1322, %v1315
    %v2205 = vpack.c.b16 %v1323, %v1316
    %v2206 = vpack.c.b16 %v1324, %v1317
    %v2207 = vpack.c.b16 %v1325, %v1318
    %v2208 = vpack.c.b16 %v1333, %v1326
    %v2209 = vpack.c.b16 %v1334, %v1327
    %v2210 = vpack.c.b16 %v1335, %v1328
    %v2211 = vpack.c.b16 %v1336, %v1329
    %v2212 = vpack.c.b16 %v1337, %v1330
    %v2213 = vpack.c.b16 %v1338, %v1331
    %v2214 = vpack.c.b16 %v1339, %v1332
    %v2215 = vpack.c.b16 %v1347, %v1340
    %v2216 = vpack.c.b16 %v1348, %v1341
    %v2217 = vpack.c.b16 %v1349, %v1342
    %v2218 = vpack.c.b16 %v1350, %v1343
    %v2219 = vpack.c.b16 %v1351, %v1344
    %v2220 = vpack.c.b16 %v1352, %v1345
    %v2221 = vpack.c.b16 %v1353, %v1346
    %v2222 = vpack.c.b16 %v1361, %v1354
    %v2223 = vpack.c.b16 %v1362, %v1355
    %v2224 = vpack.c.b16 %v1363, %v1356
    %v2225 = vpack.c.b16 %v1364, %v1357
    %v2226 = vpack.c.b16 %v1365, %v1358
    %v2227 = vpack.c.b16 %v1366, %v1359
    %v2228 = vpack.c.b16 %v1367, %v1360
    %v2229 = vpack.c.b16 %v1375, %v1368
    %v2230 = vpack.c.b16 %v1376, %v1369
    %v2231 = vpack.c.b16 %v1377, %v1370
    %v2232 = vpack.c.b16 %v1378, %v1371
    %v2233 = vpack.c.b16 %v1379, %v1372
    %v2234 = vpack.c.b16 %v1380, %v1373
    %v2235 = vpack.c.b16 %v1381, %v1374
    %v2236 = vpack.c.b16 %v1389, %v1382
    %v2237 = vpack.c.b16 %v1390, %v1383
    %v2238 = vpack.c.b16 %v1391, %v1384
    %v2239 = vpack.c.b16 %v1392, %v1385
    %v2240 = vpack.c.b16 %v1393, %v1386
    %v2241 = vpack.c.b16 %v1394, %v1387
    %v2242 = vpack.c.b16 %v1395, %v1388
    %v2243 = vpack.c.b16 %v1403, %v1396
    %v2244 = vpack.c.b16 %v1404, %v1397
    %v2245 = vpack.c.b16 %v1405, %v1398
    %v2246 = vpack.c.b16 %v1406, %v1399
    %v2247 = vpack.c.b16 %v1407, %v1400
    %v2248 = vpack.c.b16 %v1408, %v1401
    %v2249 = vpack.c.b16 %v1409, %v1402
    %v2250 = vpack.c.b16 %v1417, %v1410
    %v2251 = vpack.c.b16 %v1418, %v1411
    %v2252 = vpack.c.b16 %v1419, %v1412
    %v2253 = vpack.c.b16 %v1420, %v1413
    %v2254 = vpack.c.b16 %v1421, %v1414
    %v2255 = vpack.c.b16 %v1422, %v1415
    %v2256 = vpack.c.b16 %v1423, %v1416
    %v2257 = vpack.c.b16 %v1431, %v1424
    %v2258 = vpack.c.b16 %v1432, %v1425
    %v2259 = vpack.c.b16 %v1433, %v1426
    %v2260 = vpack.c.b16 %v1434, %v1427
    %v2261 = vpack.c.b16 %v1435, %v1428
    %v2262 = vpack.c.b16 %v1436, %v1429
    %v2263 = vpack.c.b16 %v1437, %v1430
    %v2264 = vpack.c.b16 %v1445, %v1438
    %v2265 = vpack.c.b16 %v1446, %v1439
    %v2266 = vpack.c.b16 %v1447, %v1440
    %v2267 = vpack.c.b16 %v1448, %v1441
    %v2268 = vpack.c.b16 %v1449, %v1442
    %v2269 = vpack.c.b16 %v1450, %v1443
    %v2270 = vpack.c.b16 %v1451, %v1444
    %v2271 = vpack.c.b16 %v1459, %v1452
    %v2272 = vpack.c.b16 %v1460, %v1453
    %v2273 = vpack.c.b16 %v1461, %v1454
    %v2274 = vpack.c.b16 %v1462, %v1455
    %v2275 = vpack.c.b16 %v1463, %v1456
    %v2276 = vpack.c.b16 %v1464, %v1457
    %v2277 = vpack.c.b16 %v1465, %v1458
    %v2278 = vpack.c.b16 %v1473, %v1466
    %v2279 = vpack.c.b16 %v1474, %v1467
    %v2280 = vpack.c.b16 %v1475, %v1468
    %v2281 = vpack.c.b16 %v1476, %v1469
    %v2282 = vpack.c.b16 %v1477, %v1470
    %v2283 = vpack.c.b16 %v1478, %v1471
    %v2284 = vpack.c.b16 %v1479, %v1472
    %v2285 = vpack.c.b16 %v1487, %v1480
    %v2286 = vpack.c.b16 %v1488, %v1481
    %v2287 = vpack.c.b16 %v1489, %v1482
    %v2288 = vpack.c.b16 %v1490, %v1483
    %v2289 = vpack.c.b16 %v1491, %v1484
    %v2290 = vpack.c.b16 %v1492, %v1485
    %v2291 = vpack.c.b16 %v1493, %v1486
    %v2292 = vpack.c.b16 %v1501, %v1494
    %v2293 = vpack.c.b16 %v1502, %v1495
    %v2294 = vpack.c.b16 %v1503, %v1496
    %v2295 = vpack.c.b16 %v1504, %v1497
    %v2296 = vpack.c.b16 %v1505, %v1498
    %v2297 = vpack.c.b16 %v1506, %v1499
    %v2298 = vpack.c.b16 %v1507, %v1500
    %v2299 = vpack.c.b16 %v1515, %v1508
    %v2300 = vpack.c.b16 %v1516, %v1509
    %v2301 = vpack.c.b16 %v1517, %v1510
    %v2302 = vpack.c.b16 %v1518, %v1511
    %v2303 = vpack.c.b16 %v1519, %v1512
    %v2304 = vpack.c.b16 %v1520, %v1513
    %v2305 = vpack.c.b16 %v1521, %v1514
    %v2306 = vpack.c.b16 %v1529, %v1522
    %v2307 = vpack.c.b16 %v1530, %v1523
    %v2308 = vpack.c.b16 %v1531, %v1524
    %v2309 = vpack.c.b16 %v1532, %v1525
    %v2310 = vpack.c.b16 %v1533, %v1526
    %v2311 = vpack.c.b16 %v1534, %v1527
    %v2312 = vpack.c.b16 %v1535, %v1528
    %v2313 = vpack.c.b16 %v1543, %v1536
    %v2314 = vpack.c.b16 %v1544, %v1537
    %v2315 = vpack.c.b16 %v1545, %v1538
    %v2316 = vpack.c.b16 %v1546, %v1539
    %v2317 = vpack.c.b16 %v1547, %v1540
    %v2318 = vpack.c.b16 %v1548, %v1541
    %v2319 = vpack.c.b16 %v1549, %v1542
    %v2320 = vpack.c.b16 %v1557, %v1550
    %v2321 = vpack.c.b16 %v1558, %v1551
    %v2322 = vpack.c.b16 %v1559, %v1552
    %v2323 = vpack.c.b16 %v1560, %v1553
    %v2324 = vpack.c.b16 %v1561, %v1554
    %v2325 = vpack.c.b16 %v1562, %v1555
    %v2326 = vpack.c.b16 %v1563, %v1556
    %v2327 = vpack.c.b16 %v1571, %v1564
    %v2328 = vpack.c.b16 %v1572, %v1565
    %v2329 = vpack.c.b16 %v1573, %v1566
    %v2330 = vpack.c.b16 %v1574, %v1567
    %v2331 = vpack.c.b16 %v1575, %v1568
    %v2332 = vpack.c.b16 %v1576, %v1569
    %v2333 = vpack.c.b16 %v1577, %v1570
    %v2334 = vpack.c.b16 %v1585, %v1578
    %v2335 = vpack.c.b16 %v1586, %v1579
    %v2336 = vpack.c.b16 %v1587, %v1580
    %v2337 = vpack.c.b16 %v1588, %v1581
    %v2338 = vpack.c.b16 %v1589, %v1582
    %v2339 = vpack.c.b16 %v1590, %v1583
    %v2340 = vpack.c.b16 %v1591, %v1584
    %v2341 = vpack.c.b16 %v1599, %v1592
    %v2342 = vpack.c.b16 %v1600, %v1593
    %v2343 = vpack.c.b16 %v1601, %v1594
    %v2344 = vpack.c.b16 %v1602, %v1595
    %v2345 = vpack.c.b16 %v1603, %v1596
    %v2346 = vpack.c.b16 %v1604, %v1597
    %v2347 = vpack.c.b16 %v1605, %v1598
    %v2348 = vpack.c.b16 %v1613, %v1606
    %v2349 = vpack.c.b16 %v1614, %v1607
    %v2350 = vpack.c.b16 %v1615, %v1608
    %v2351 = vpack.c.b16 %v1616, %v1609
    %v2352 = vpack.c.b16 %v1617, %v1610
    %v2353 = vpack.c.b16 %v1618, %v1611
    %v2354 = vpack.c.b16 %v1619, %v1612
    %v2355 = vpack.c.b16 %v1627, %v1620
    %v2356 = vpack.c.b16 %v1628, %v1621
    %v2357 = vpack.c.b16 %v1629, %v1622
    %v2358 = vpack.c.b16 %v1630, %v1623
    %v2359 = vpack.c.b16 %v1631, %v1624
    %v2360 = vpack.c.b16 %v1632, %v1625
    %v2361 = vpack.c.b16 %v1633, %v1626
    %v2362 = vpack.c.b16 %v1641, %v1634
    %v2363 = vpack.c.b16 %v1642, %v1635
    %v2364 = vpack.c.b16 %v1643, %v1636
    %v2365 = vpack.c.b16 %v1644, %v1637
    %v2366 = vpack.c.b16 %v1645, %v1638
    %v2367 = vpack.c.b16 %v1646, %v1639
    %v2368 = vpack.c.b16 %v1647, %v1640
    %v2369 = vpack.c.b16 %v1655, %v1648
    %v2370 = vpack.c.b16 %v1656, %v1649
    %v2371 = vpack.c.b16 %v1657, %v1650
    %v2372 = vpack.c.b16 %v1658, %v1651
    %v2373 = vpack.c.b16 %v1659, %v1652
    %v2374 = vpack.c.b16 %v1660, %v1653
    %v2375 = vpack.c.b16 %v1661, %v1654
    %v2376 = vpack.c.b16 %v1669, %v1662
    %v2377 = vpack.c.b16 %v1670, %v1663
    %v2378 = vpack.c.b16 %v1671, %v1664
    %v2379 = vpack.c.b16 %v1672, %v1665
    %v2380 = vpack.c.b16 %v1673, %v1666
    %v2381 = vpack.c.b16 %v1674, %v1667
    %v2382 = vpack.c.b16 %v1675, %v1668
    %v2383 = vpack.c.b16 %v1683, %v1676
    %v2384 = vpack.c.b16 %v1684, %v1677
    %v2385 = vpack.c.b16 %v1685, %v1678
    %v2386 = vpack.c.b16 %v1686, %v1679
    %v2387 = vpack.c.b16 %v1687, %v1680
    %v2388 = vpack.c.b16 %v1688, %v1681
    %v2389 = vpack.c.b16 %v1689, %v1682
    %v2390 = vpack.c.b16 %v1697, %v1690
    %v2391 = vpack.c.b16 %v1698, %v1691
    %v2392 = vpack.c.b16 %v1699, %v1692
    %v2393 = vpack.c.b16 %v1700, %v1693
    %v2394 = vpack.c.b16 %v1701, %v1694
    %v2395 = vpack.c.b16 %v1702, %v1695
    %v2396 = vpack.c.b16 %v1703, %v1696
    %v2397 = vpack.c.b16 %v1711, %v1704
    %v2398 = vpack.c.b16 %v1712, %v1705
    %v2399 = vpack.c.b16 %v1713, %v1706
    %v2400 = vpack.c.b16 %v1714, %v1707
    %v2401 = vpack.c.b16 %v1715, %v1708
    %v2402 = vpack.c.b16 %v1716, %v1709
    %v2403 = vpack.c.b16 %v1717, %v1710
    %v2404 = vpack.c.b16 %v1725, %v1718
    %v2405 = vpack.c.b16 %v1726, %v1719
    %v2406 = vpack.c.b16 %v1727, %v1720
    %v2407 = vpack.c.b16 %v1728, %v1721
    %v2408 = vpack.c.b16 %v1729, %v1722
    %v2409 = vpack.c.b16 %v1730, %v1723
    %v2410 = vpack.c.b16 %v1731, %v1724
    %v2411 = vpack.c.b16 %v1739, %v1732
    %v2412 = vpack.c.b16 %v1740, %v1733
    %v2413 = vpack.c.b16 %v1741, %v1734
    %v2414 = vpack.c.b16 %v1742, %v1735
    %v2415 = vpack.c.b16 %v1743, %v1736
    %v2416 = vpack.c.b16 %v1744, %v1737
    %v2417 = vpack.c.b16 %v1745, %v1738
    %v2418 = vpack.c.b16 %v1753, %v1746
    %v2419 = vpack.c.b16 %v1754, %v1747
    %v2420 = vpack.c.b16 %v1755, %v1748
    %v2421 = vpack.c.b16 %v1756, %v1749
    %v2422 = vpack.c.b16 %v1757, %v1750
    %v2423 = vpack.c.b16 %v1758, %v1751
    %v2424 = vpack.c.b16 %v1759, %v1752
    %v2425 = vpack.c.b16 %v1767, %v1760
    %v2426 = vpack.c.b16 %v1768, %v1761
    %v2427 = vpack.c.b16 %v1769, %v1762
    %v2428 = vpack.c.b16 %v1770, %v1763
    %v2429 = vpack.c.b16 %v1771, %v1764
    %v2430 = vpack.c.b16 %v1772, %v1765
    %v2431 = vpack.c.b16 %v1773, %v1766
    %v2432 = vpack.c.b16 %v1781, %v1774
    %v2433 = vpack.c.b16 %v1782, %v1775
    %v2434 = vpack.c.b16 %v1783, %v1776
    %v2435 = vpack.c.b16 %v1784, %v1777
    %v2436 = vpack.c.b16 %v1785, %v1778
    %v2437 = vpack.c.b16 %v1786, %v1779
    %v2438 = vpack.c.b16 %v1787, %v1780
    %v2439 = vpack.c.b16 %v1795, %v1788
    %v2440 = vpack.c.b16 %v1796, %v1789
    %v2441 = vpack.c.b16 %v1797, %v1790
    %v2442 = vpack.c.b16 %v1798, %v1791
    %v2443 = vpack.c.b16 %v1799, %v1792
    %v2444 = vpack.c.b16 %v1800, %v1793
    %v2445 = vpack.c.b16 %v1801, %v1794
    %v2446 = vpack.c.b16 %v1809, %v1802
    %v2447 = vpack.c.b16 %v1810, %v1803
    %v2448 = vpack.c.b16 %v1811, %v1804
    %v2449 = vpack.c.b16 %v1812, %v1805
    %v2450 = vpack.c.b16 %v1813, %v1806
    %v2451 = vpack.c.b16 %v1814, %v1807
    %v2452 = vpack.c.b16 %v1815, %v1808
    %v2453 = vpack.c.b16 %v1823, %v1816
    %v2454 = vpack.c.b16 %v1824, %v1817
    %v2455 = vpack.c.b16 %v1825, %v1818
    %v2456 = vpack.c.b16 %v1826, %v1819
    %v2457 = vpack.c.b16 %v1827, %v1820
    %v2458 = vpack.c.b16 %v1828, %v1821
    %v2459 = vpack.c.b16 %v1829, %v1822
    %v2460 = vpack.c.b16 %v1837, %v1830
    %v2461 = vpack.c.b16 %v1838, %v1831
    %v2462 = vpack.c.b16 %v1839, %v1832
    %v2463 = vpack.c.b16 %v1840, %v1833
    %v2464 = vpack.c.b16 %v1841, %v1834
    %v2465 = vpack.c.b16 %v1842, %v1835
    %v2466 = vpack.c.b16 %v1843, %v1836
    %v2467 = vpack.c.b16 %v1851, %v1844
    %v2468 = vpack.c.b16 %v1852, %v1845
    %v2469 = vpack.c.b16 %v1853, %v1846
    %v2470 = vpack.c.b16 %v1854, %v1847
    %v2471 = vpack.c.b16 %v1855, %v1848
    %v2472 = vpack.c.b16 %v1856, %v1849
    %v2473 = vpack.c.b16 %v1857, %v1850
    %v2474 = vpack.c.b16 %v1865, %v1858
    %v2475 = vpack.c.b16 %v1866, %v1859
    %v2476 = vpack.c.b16 %v1867, %v1860
    %v2477 = vpack.c.b16 %v1868, %v1861
    %v2478 = vpack.c.b16 %v1869, %v1862
    %v2479 = vpack.c.b16 %v1870, %v1863
    %v2480 = vpack.c.b16 %v1871, %v1864
    %v2481 = vpack.c.b16 %v1879, %v1872
    %v2482 = vpack.c.b16 %v1880, %v1873
    %v2483 = vpack.c.b16 %v1881, %v1874
    %v2484 = vpack.c.b16 %v1882, %v1875
    %v2485 = vpack.c.b16 %v1883, %v1876
    %v2486 = vpack.c.b16 %v1884, %v1877
    %v2487 = vpack.c.b16 %v1885, %v1878
    %v2488 = vpack.c.b16 %v1893, %v1886
    %v2489 = vpack.c.b16 %v1894, %v1887
    %v2490 = vpack.c.b16 %v1895, %v1888
    %v2491 = vpack.c.b16 %v1896, %v1889
    %v2492 = vpack.c.b16 %v1897, %v1890
    %v2493 = vpack.c.b16 %v1898, %v1891
    %v2494 = vpack.c.b16 %v1899, %v1892
    %v2495 = vpack.c.b16 %v1907, %v1900
    %v2496 = vpack.c.b16 %v1908, %v1901
    %v2497 = vpack.c.b16 %v1909, %v1902
    %v2498 = vpack.c.b16 %v1910, %v1903
    %v2499 = vpack.c.b16 %v1911, %v1904
    %v2500 = vpack.c.b16 %v1912, %v1905
    %v2501 = vpack.c.b16 %v1913, %v1906
    %v2502 = vpack.c.b16 %v1921, %v1914
    %v2503 = vpack.c.b16 %v1922, %v1915
    %v2504 = vpack.c.b16 %v1923, %v1916
    %v2505 = vpack.c.b16 %v1924, %v1917
    %v2506 = vpack.c.b16 %v1925, %v1918
    %v2507 = vpack.c.b16 %v1926, %v1919
    %v2508 = vpack.c.b16 %v1927, %v1920
    %v2509 = vpack.c.b16 %v1935, %v1928
    %v2510 = vpack.c.b16 %v1936, %v1929
    %v2511 = vpack.c.b16 %v1937, %v1930
    %v2512 = vpack.c.b16 %v1938, %v1931
    %v2513 = vpack.c.b16 %v1939, %v1932
    %v2514 = vpack.c.b16 %v1940, %v1933
    %v2515 = vpack.c.b16 %v1941, %v1934
    %v2516 = vpack.c.b16 %v1949, %v1942
    %v2517 = vpack.c.b16 %v1950, %v1943
    %v2518 = vpack.c.b16 %v1951, %v1944
    %v2519 = vpack.c.b16 %v1952, %v1945
    %v2520 = vpack.c.b16 %v1953, %v1946
    %v2521 = vpack.c.b16 %v1954, %v1947
    %v2522 = vpack.c.b16 %v1955, %v1948
    %v2523 = vpack.c.b16 %v1963, %v1956
    %v2524 = vpack.c.b16 %v1964, %v1957
    %v2525 = vpack.c.b16 %v1965, %v1958
    %v2526 = vpack.c.b16 %v1966, %v1959
    %v2527 = vpack.c.b16 %v1967, %v1960
    %v2528 = vpack.c.b16 %v1968, %v1961
    %v2529 = vpack.c.b16 %v1969, %v1962
    %v2530 = vpack.c.b16 %v1977, %v1970
    %v2531 = vpack.c.b16 %v1978, %v1971
    %v2532 = vpack.c.b16 %v1979, %v1972
    %v2533 = vpack.c.b16 %v1980, %v1973
    %v2534 = vpack.c.b16 %v1981, %v1974
    %v2535 = vpack.c.b16 %v1982, %v1975
    %v2536 = vpack.c.b16 %v1983, %v1976
    %v2537 = vpack.c.b16 %v1991, %v1984
    %v2538 = vpack.c.b16 %v1992, %v1985
    %v2539 = vpack.c.b16 %v1993, %v1986
    %v2540 = vpack.c.b16 %v1994, %v1987
    %v2541 = vpack.c.b16 %v1995, %v1988
    %v2542 = vpack.c.b16 %v1996, %v1989
    %v2543 = vpack.c.b16 %v1997, %v1990
    %v2544 = vpack.c.b16 %v2005, %v1998
    %v2545 = vpack.c.b16 %v2006, %v1999
    %v2546 = vpack.c.b16 %v2007, %v2000
    %v2547 = vpack.c.b16 %v2008, %v2001
    %v2548 = vpack.c.b16 %v2009, %v2002
    %v2549 = vpack.c.b16 %v2010, %v2003
    %v2550 = vpack.c.b16 %v2011, %v2004
    %v2551 = vpack.c.b16 %v2019, %v2012
    %v2552 = vpack.c.b16 %v2020, %v2013
    %v2553 = vpack.c.b16 %v2021, %v2014
    %v2554 = vpack.c.b16 %v2022, %v2015
    %v2555 = vpack.c.b16 %v2023, %v2016
    %v2556 = vpack.c.b16 %v2024, %v2017
    %v2557 = vpack.c.b16 %v2025, %v2018
    %v2558 = vpack.c.b16 %v2033, %v2026
    %v2559 = vpack.c.b16 %v2034, %v2027
    %v2560 = vpack.c.b16 %v2035, %v2028
    %v2561 = vpack.c.b16 %v2036, %v2029
    %v2562 = vpack.c.b16 %v2037, %v2030
    %v2563 = vpack.c.b16 %v2038, %v2031
    %v2564 = vpack.c.b16 %v2039, %v2032
    %v2565 = vpack.c.b16 %v2047, %v2040
    %v2566 = vpack.c.b16 %v2048, %v2041
    %v2567 = vpack.c.b16 %v2049, %v2042
    %v2568 = vpack.c.b16 %v2050, %v2043
    %v2569 = vpack.c.b16 %v2051, %v2044
    %v2570 = vpack.c.b16 %v2052, %v2045
    %v2571 = vpack.c.b16 %v2053, %v2046
    %v2572 = vpack.c.b16 %v2061, %v2054
    %v2573 = vpack.c.b16 %v2062, %v2055
    %v2574 = vpack.c.b16 %v2063, %v2056
    %v2575 = vpack.c.b16 %v2064, %v2057
    %v2576 = vpack.c.b16 %v2065, %v2058
    %v2577 = vpack.c.b16 %v2066, %v2059
    %v2578 = vpack.c.b16 %v2067, %v2060
    %v2579 = vpack.c.b16 %v2075, %v2068
    %v2580 = vpack.c.b16 %v2076, %v2069
    %v2581 = vpack.c.b16 %v2077, %v2070
    %v2582 = vpack.c.b16 %v2078, %v2071
    %v2583 = vpack.c.b16 %v2079, %v2072
    %v2584 = vpack.c.b16 %v2080, %v2073
    %v2585 = vpack.c.b16 %v2081, %v2074
    %v2586 = vpack.c.b16 %v2089, %v2082
    %v2587 = vpack.c.b16 %v2090, %v2083
    %v2588 = vpack.c.b16 %v2091, %v2084
    %v2589 = vpack.c.b16 %v2092, %v2085
    %v2590 = vpack.c.b16 %v2093, %v2086
    %v2591 = vpack.c.b16 %v2094, %v2087
    %v2592 = vpack.c.b16 %v2095, %v2088
    %v2593 = vpack.c.b16 %v2103, %v2096
    %v2594 = vpack.c.b16 %v2104, %v2097
    %v2595 = vpack.c.b16 %v2105, %v2098
    %v2596 = vpack.c.b16 %v2106, %v2099
    %v2597 = vpack.c.b16 %v2107, %v2100
    %v2598 = vpack.c.b16 %v2108, %v2101
    %v2599 = vpack.c.b16 %v2109, %v2102
    %v2600 = vpack.c.b16 %v2117, %v2110
    %v2601 = vpack.c.b16 %v2118, %v2111
    %v2602 = vpack.c.b16 %v2119, %v2112
    %v2603 = vpack.c.b16 %v2120, %v2113
    %v2604 = vpack.c.b16 %v2121, %v2114
    %v2605 = vpack.c.b16 %v2122, %v2115
    %v2606 = vpack.c.b16 %v2123, %v2116
    %v2607 = vpack.c.b16 %v2131, %v2124
    %v2608 = vpack.c.b16 %v2132, %v2125
    %v2609 = vpack.c.b16 %v2133, %v2126
    %v2610 = vpack.c.b16 %v2134, %v2127
    %v2611 = vpack.c.b16 %v2135, %v2128
    %v2612 = vpack.c.b16 %v2136, %v2129
    %v2613 = vpack.c.b16 %v2137, %v2130
    %v2614 = vpack.c.b16 %v2145, %v2138
    %v2615 = vpack.c.b16 %v2146, %v2139
    %v2616 = vpack.c.b16 %v2147, %v2140
    %v2617 = vpack.c.b16 %v2148, %v2141
    %v2618 = vpack.c.b16 %v2149, %v2142
    %v2619 = vpack.c.b16 %v2150, %v2143
    %v2620 = vpack.c.b16 %v2151, %v2144
    %v2621 = vpack.c.b16 %v2159, %v2152
    %v2622 = vpack.c.b16 %v2160, %v2153
    %v2623 = vpack.c.b16 %v2161, %v2154
    %v2624 = vpack.c.b16 %v2162, %v2155
    %v2625 = vpack.c.b16 %v2163, %v2156
    %v2626 = vpack.c.b16 %v2164, %v2157
    %v2627 = vpack.c.b16 %v2165, %v2158
    %v2628 = vpack.c.b16 %v2173, %v2166
    %v2629 = vpack.c.b16 %v2174, %v2167
    %v2630 = vpack.c.b16 %v2175, %v2168
    %v2631 = vpack.c.b16 %v2176, %v2169
    %v2632 = vpack.c.b16 %v2177, %v2170
    %v2633 = vpack.c.b16 %v2178, %v2171
    %v2634 = vpack.c.b16 %v2179, %v2172
    %v2635 = vpack.c.b16 %v2187, %v2180
    %v2636 = vpack.c.b16 %v2188, %v2181
    %v2637 = vpack.c.b16 %v2189, %v2182
    %v2638 = vpack.c.b16 %v2190, %v2183
    %v2639 = vpack.c.b16 %v2191, %v2184
    %v2640 = vpack.c.b16 %v2192, %v2185
    %v2641 = vpack.c.b16 %v2193, %v2186
    %3090 = vmatprep.subr.bf16.mxu0 %v2195
    %3091 = vmatpush1.bf16.msra.mxu0 %v2194
    %3092 = vmatprep.subr.bf16.mxu0 %v2202
    %3093 = vmatpush1.bf16.msra.mxu0 %v2201
    %3094 = vmatprep.subr.bf16.mxu0 %v2209
    %3095 = vmatpush1.bf16.msra.mxu0 %v2208
    %3096 = vmatprep.subr.bf16.mxu0 %v2216
    %3097 = vmatpush1.bf16.msra.mxu0 %v2215
    %3098 = vmatprep.subr.bf16.mxu0 %v2223
    %3099 = vmatpush1.bf16.msra.mxu0 %v2222
    %3100 = vmatprep.subr.bf16.mxu0 %v2230
    %3101 = vmatpush1.bf16.msra.mxu0 %v2229
    %3102 = vmatprep.subr.bf16.mxu0 %v2237
    %3103 = vmatpush1.bf16.msra.mxu0 %v2236
    %3104 = vmatprep.subr.bf16.mxu0 %v2244
    %3105 = vmatpush1.bf16.msra.mxu0 %v2243
    %3106 = vmatprep.subr.bf16.mxu0 %v2251
    %3107 = vmatpush1.bf16.msra.mxu0 %v2250
    %3108 = vmatprep.subr.bf16.mxu0 %v2258
    %3109 = vmatpush1.bf16.msra.mxu0 %v2257
    %3110 = vmatprep.subr.bf16.mxu0 %v2265
    %3111 = vmatpush1.bf16.msra.mxu0 %v2264
    %3112 = vmatprep.subr.bf16.mxu0 %v2272
    %3113 = vmatpush1.bf16.msra.mxu0 %v2271
    %3114 = vmatprep.subr.bf16.mxu0 %v2279
    %3115 = vmatpush1.bf16.msra.mxu0 %v2278
    %3116 = vmatprep.subr.bf16.mxu0 %v2286
    %3117 = vmatpush1.bf16.msra.mxu0 %v2285
    %3118 = vmatprep.subr.bf16.mxu0 %v2293
    %3119 = vmatpush1.bf16.msra.mxu0 %v2292
    %3120 = vmatprep.subr.bf16.mxu0 %v2300
    %3121 = vmatpush1.bf16.msra.mxu0 %v2299
    %3122 = vmatprep.mubr.bf16.mxu0 %v230
    %3123 = vmatmul.mubr.bf16.gmra.mrb[0].mxu0 %v229
    %v3124 = vpop.f32.mrb[0].mxu0
    %v3125 = vadd.f32 %v754, %v3124
    %v3126 = vpop.f32.mrb[0].mxu0
    %v3127 = vadd.f32 %v758, %v3126
    %v3128 = vpop.f32.mrb[0].mxu0
    %v3129 = vpop.f32.mrb[0].mxu0
    %3130 = vdwg.mxu0
    %3131 = vmatprep.subr.bf16.mxu0 %v2307
    %3132 = vmatpush1.bf16.msra.mxu0 %v2306
    %3133 = vmatprep.subr.bf16.mxu0 %v2314
    %3134 = vmatpush1.bf16.msra.mxu0 %v2313
    %3135 = vmatprep.subr.bf16.mxu0 %v2321
    %3136 = vmatpush1.bf16.msra.mxu0 %v2320
    %3137 = vmatprep.subr.bf16.mxu0 %v2328
    %3138 = vmatpush1.bf16.msra.mxu0 %v2327
    %3139 = vmatprep.subr.bf16.mxu0 %v2335
    %3140 = vmatpush1.bf16.msra.mxu0 %v2334
    %3141 = vmatprep.subr.bf16.mxu0 %v2342
    %3142 = vmatpush1.bf16.msra.mxu0 %v2341
    %3143 = vmatprep.subr.bf16.mxu0 %v2349
    %3144 = vmatpush1.bf16.msra.mxu0 %v2348
    %3145 = vmatprep.subr.bf16.mxu0 %v2356
    %3146 = vmatpush1.bf16.msra.mxu0 %v2355
    %3147 = vmatprep.subr.bf16.mxu0 %v2363
    %3148 = vmatpush1.bf16.msra.mxu0 %v2362
    %3149 = vmatprep.subr.bf16.mxu0 %v2370
    %3150 = vmatpush1.bf16.msra.mxu0 %v2369
    %3151 = vmatprep.subr.bf16.mxu0 %v2377
    %3152 = vmatpush1.bf16.msra.mxu0 %v2376
    %3153 = vmatprep.subr.bf16.mxu0 %v2384
    %3154 = vmatpush1.bf16.msra.mxu0 %v2383
    %3155 = vmatprep.subr.bf16.mxu0 %v2391
    %3156 = vmatpush1.bf16.msra.mxu0 %v2390
    %3157 = vmatprep.subr.bf16.mxu0 %v2398
    %3158 = vmatpush1.bf16.msra.mxu0 %v2397
    %3159 = vmatprep.subr.bf16.mxu0 %v2405
    %3160 = vmatpush1.bf16.msra.mxu0 %v2404
    %3161 = vmatprep.subr.bf16.mxu0 %v2412
    %3162 = vmatpush1.bf16.msra.mxu0 %v2411
    %3163 = vmatprep.mubr.bf16.mxu0 %v232
    %3164 = vmatmul.mubr.bf16.gmra.mrb[0].mxu0 %v231
    %v3165 = vpop.f32.mrb[0].mxu0
    %v3166 = vadd.f32 %v3125, %v3165
    %v3167 = vpop.f32.mrb[0].mxu0
    %v3168 = vadd.f32 %v3127, %v3167
    %v3169 = vpop.f32.mrb[0].mxu0
    %v3170 = vpop.f32.mrb[0].mxu0
    %3171 = vdwg.mxu0
    %3172 = vmatprep.subr.bf16.mxu0 %v2419
    %3173 = vmatpush1.bf16.msra.mxu0 %v2418
    %3174 = vmatprep.subr.bf16.mxu0 %v2426
    %3175 = vmatpush1.bf16.msra.mxu0 %v2425
    %3176 = vmatprep.subr.bf16.mxu0 %v2433
    %3177 = vmatpush1.bf16.msra.mxu0 %v2432
    %3178 = vmatprep.subr.bf16.mxu0 %v2440
    %3179 = vmatpush1.bf16.msra.mxu0 %v2439
    %3180 = vmatprep.subr.bf16.mxu0 %v2447
    %3181 = vmatpush1.bf16.msra.mxu0 %v2446
    %3182 = vmatprep.subr.bf16.mxu0 %v2454
    %3183 = vmatpush1.bf16.msra.mxu0 %v2453
    %3184 = vmatprep.subr.bf16.mxu0 %v2461
    %3185 = vmatpush1.bf16.msra.mxu0 %v2460
    %3186 = vmatprep.subr.bf16.mxu0 %v2468
    %3187 = vmatpush1.bf16.msra.mxu0 %v2467
    %3188 = vmatprep.subr.bf16.mxu0 %v2475
    %3189 = vmatpush1.bf16.msra.mxu0 %v2474
    %3190 = vmatprep.subr.bf16.mxu0 %v2482
    %3191 = vmatpush1.bf16.msra.mxu0 %v2481
    %3192 = vmatprep.subr.bf16.mxu0 %v2489
    %3193 = vmatpush1.bf16.msra.mxu0 %v2488
    %3194 = vmatprep.subr.bf16.mxu0 %v2496
    %3195 = vmatpush1.bf16.msra.mxu0 %v2495
    %3196 = vmatprep.subr.bf16.mxu0 %v2503
    %3197 = vmatpush1.bf16.msra.mxu0 %v2502
    %3198 = vmatprep.subr.bf16.mxu0 %v2510
    %3199 = vmatpush1.bf16.msra.mxu0 %v2509
    %3200 = vmatprep.subr.bf16.mxu0 %v2517
    %3201 = vmatpush1.bf16.msra.mxu0 %v2516
    %3202 = vmatprep.subr.bf16.mxu0 %v2524
    %3203 = vmatpush1.bf16.msra.mxu0 %v2523
    %3204 = vmatprep.mubr.bf16.mxu0 %v234
    %3205 = vmatmul.mubr.bf16.gmra.mrb[0].mxu0 %v233
    %v3206 = vpop.f32.mrb[0].mxu0
    %v3207 = vadd.f32 %v3166, %v3206
    %v3208 = vpop.f32.mrb[0].mxu0
    %v3209 = vadd.f32 %v3168, %v3208
    %v3210 = vpop.f32.mrb[0].mxu0
    %v3211 = vpop.f32.mrb[0].mxu0
    %3212 = vdwg.mxu0
    %3213 = vmatprep.subr.bf16.mxu0 %v2531
    %3214 = vmatpush1.bf16.msra.mxu0 %v2530
    %3215 = vmatprep.subr.bf16.mxu0 %v2538
    %3216 = vmatpush1.bf16.msra.mxu0 %v2537
    %3217 = vmatprep.subr.bf16.mxu0 %v2545
    %3218 = vmatpush1.bf16.msra.mxu0 %v2544
    %3219 = vmatprep.subr.bf16.mxu0 %v2552
    %3220 = vmatpush1.bf16.msra.mxu0 %v2551
    %3221 = vmatprep.subr.bf16.mxu0 %v2559
    %3222 = vmatpush1.bf16.msra.mxu0 %v2558
    %3223 = vmatprep.subr.bf16.mxu0 %v2566
    %3224 = vmatpush1.bf16.msra.mxu0 %v2565
    %3225 = vmatprep.subr.bf16.mxu0 %v2573
    %3226 = vmatpush1.bf16.msra.mxu0 %v2572
    %3227 = vmatprep.subr.bf16.mxu0 %v2580
    %3228 = vmatpush1.bf16.msra.mxu0 %v2579
    %3229 = vmatprep.subr.bf16.mxu0 %v2587
    %3230 = vmatpush1.bf16.msra.mxu0 %v2586
    %3231 = vmatprep.subr.bf16.mxu0 %v2594
    %3232 = vmatpush1.bf16.msra.mxu0 %v2593
    %3233 = vmatprep.subr.bf16.mxu0 %v2601
    %3234 = vmatpush1.bf16.msra.mxu0 %v2600
    %3235 = vmatprep.subr.bf16.mxu0 %v2608
    %3236 = vmatpush1.bf16.msra.mxu0 %v2607
    %3237 = vmatprep.subr.bf16.mxu0 %v2615
    %3238 = vmatpush1.bf16.msra.mxu0 %v2614
    %3239 = vmatprep.subr.bf16.mxu0 %v2622
    %3240 = vmatpush1.bf16.msra.mxu0 %v2621
    %3241 = vmatprep.subr.bf16.mxu0 %v2629
    %3242 = vmatpush1.bf16.msra.mxu0 %v2628
    %3243 = vmatprep.subr.bf16.mxu0 %v2636
    %3244 = vmatpush1.bf16.msra.mxu0 %v2635
    %3245 = vmatprep.mubr.bf16.mxu0 %v236
    %3246 = vmatmul.mubr.bf16.gmra.mrb[0].mxu0 %v235
    %v3247 = vpop.f32.mrb[0].mxu0
    %v3248 = vadd.f32 %v3207, %v3247
    %v3249 = vpop.f32.mrb[0].mxu0
    %v3250 = vadd.f32 %v3209, %v3249
    %v3251 = vpop.f32.mrb[0].mxu0
    %v3252 = vpop.f32.mrb[0].mxu0
    %3253 = vdwg.mxu0
    %3254 = vmatprep.subr.bf16.mxu0 %v2197
    %3255 = vmatpush1.bf16.msra.mxu0 %v2196
    %3256 = vmatprep.subr.bf16.mxu0 %v2204
    %3257 = vmatpush1.bf16.msra.mxu0 %v2203
    %3258 = vmatprep.subr.bf16.mxu0 %v2211
    %3259 = vmatpush1.bf16.msra.mxu0 %v2210
    %3260 = vmatprep.subr.bf16.mxu0 %v2218
    %3261 = vmatpush1.bf16.msra.mxu0 %v2217
    %3262 = vmatprep.subr.bf16.mxu0 %v2225
    %3263 = vmatpush1.bf16.msra.mxu0 %v2224
    %3264 = vmatprep.subr.bf16.mxu0 %v2232
    %3265 = vmatpush1.bf16.msra.mxu0 %v2231
    %3266 = vmatprep.subr.bf16.mxu0 %v2239
    %3267 = vmatpush1.bf16.msra.mxu0 %v2238
    %3268 = vmatprep.subr.bf16.mxu0 %v2246
    %3269 = vmatpush1.bf16.msra.mxu0 %v2245
    %3270 = vmatprep.subr.bf16.mxu0 %v2253
    %3271 = vmatpush1.bf16.msra.mxu0 %v2252
    %3272 = vmatprep.subr.bf16.mxu0 %v2260
    %3273 = vmatpush1.bf16.msra.mxu0 %v2259
    %3274 = vmatprep.subr.bf16.mxu0 %v2267
    %3275 = vmatpush1.bf16.msra.mxu0 %v2266
    %3276 = vmatprep.subr.bf16.mxu0 %v2274
    %3277 = vmatpush1.bf16.msra.mxu0 %v2273
    %3278 = vmatprep.subr.bf16.mxu0 %v2281
    %3279 = vmatpush1.bf16.msra.mxu0 %v2280
    %3280 = vmatprep.subr.bf16.mxu0 %v2288
    %3281 = vmatpush1.bf16.msra.mxu0 %v2287
    %3282 = vmatprep.subr.bf16.mxu0 %v2295
    %3283 = vmatpush1.bf16.msra.mxu0 %v2294
    %3284 = vmatprep.subr.bf16.mxu0 %v2302
    %3285 = vmatpush1.bf16.msra.mxu0 %v2301
    %3286 = vmatprep.mubr.bf16.mxu0 %v230
    %3287 = vmatmul.mubr.bf16.gmra.mrb[0].mxu0 %v229
    %v3288 = vpop.f32.mrb[0].mxu0
    %v3289 = vadd.f32 %v762, %v3288
    %v3290 = vpop.f32.mrb[0].mxu0
    %v3291 = vadd.f32 %v766, %v3290
    %v3292 = vpop.f32.mrb[0].mxu0
    %v3293 = vpop.f32.mrb[0].mxu0
    %3294 = vdwg.mxu0
    %3295 = vmatprep.subr.bf16.mxu0 %v2309
    %3296 = vmatpush1.bf16.msra.mxu0 %v2308
    %3297 = vmatprep.subr.bf16.mxu0 %v2316
    %3298 = vmatpush1.bf16.msra.mxu0 %v2315
    %3299 = vmatprep.subr.bf16.mxu0 %v2323
    %3300 = vmatpush1.bf16.msra.mxu0 %v2322
    %3301 = vmatprep.subr.bf16.mxu0 %v2330
    %3302 = vmatpush1.bf16.msra.mxu0 %v2329
    %3303 = vmatprep.subr.bf16.mxu0 %v2337
    %3304 = vmatpush1.bf16.msra.mxu0 %v2336
    %3305 = vmatprep.subr.bf16.mxu0 %v2344
    %3306 = vmatpush1.bf16.msra.mxu0 %v2343
    %3307 = vmatprep.subr.bf16.mxu0 %v2351
    %3308 = vmatpush1.bf16.msra.mxu0 %v2350
    %3309 = vmatprep.subr.bf16.mxu0 %v2358
    %3310 = vmatpush1.bf16.msra.mxu0 %v2357
    %3311 = vmatprep.subr.bf16.mxu0 %v2365
    %3312 = vmatpush1.bf16.msra.mxu0 %v2364
    %3313 = vmatprep.subr.bf16.mxu0 %v2372
    %3314 = vmatpush1.bf16.msra.mxu0 %v2371
    %3315 = vmatprep.subr.bf16.mxu0 %v2379
    %3316 = vmatpush1.bf16.msra.mxu0 %v2378
    %3317 = vmatprep.subr.bf16.mxu0 %v2386
    %3318 = vmatpush1.bf16.msra.mxu0 %v2385
    %3319 = vmatprep.subr.bf16.mxu0 %v2393
    %3320 = vmatpush1.bf16.msra.mxu0 %v2392
    %3321 = vmatprep.subr.bf16.mxu0 %v2400
    %3322 = vmatpush1.bf16.msra.mxu0 %v2399
    %3323 = vmatprep.subr.bf16.mxu0 %v2407
    %3324 = vmatpush1.bf16.msra.mxu0 %v2406
    %3325 = vmatprep.subr.bf16.mxu0 %v2414
    %3326 = vmatpush1.bf16.msra.mxu0 %v2413
    %3327 = vmatprep.mubr.bf16.mxu0 %v232
    %3328 = vmatmul.mubr.bf16.gmra.mrb[0].mxu0 %v231
    %v3329 = vpop.f32.mrb[0].mxu0
    %v3330 = vadd.f32 %v3289, %v3329
    %v3331 = vpop.f32.mrb[0].mxu0
    %v3332 = vadd.f32 %v3291, %v3331
    %v3333 = vpop.f32.mrb[0].mxu0
    %v3334 = vpop.f32.mrb[0].mxu0
    %3335 = vdwg.mxu0
    %3336 = vmatprep.subr.bf16.mxu0 %v2421
    %3337 = vmatpush1.bf16.msra.mxu0 %v2420
    %3338 = vmatprep.subr.bf16.mxu0 %v2428
    %3339 = vmatpush1.bf16.msra.mxu0 %v2427
    %3340 = vmatprep.subr.bf16.mxu0 %v2435
    %3341 = vmatpush1.bf16.msra.mxu0 %v2434
    %3342 = vmatprep.subr.bf16.mxu0 %v2442
    %3343 = vmatpush1.bf16.msra.mxu0 %v2441
    %3344 = vmatprep.subr.bf16.mxu0 %v2449
    %3345 = vmatpush1.bf16.msra.mxu0 %v2448
    %3346 = vmatprep.subr.bf16.mxu0 %v2456
    %3347 = vmatpush1.bf16.msra.mxu0 %v2455
    %3348 = vmatprep.subr.bf16.mxu0 %v2463
    %3349 = vmatpush1.bf16.msra.mxu0 %v2462
    %3350 = vmatprep.subr.bf16.mxu0 %v2470
    %3351 = vmatpush1.bf16.msra.mxu0 %v2469
    %3352 = vmatprep.subr.bf16.mxu0 %v2477
    %3353 = vmatpush1.bf16.msra.mxu0 %v2476
    %3354 = vmatprep.subr.bf16.mxu0 %v2484
    %3355 = vmatpush1.bf16.msra.mxu0 %v2483
    %3356 = vmatprep.subr.bf16.mxu0 %v2491
    %3357 = vmatpush1.bf16.msra.mxu0 %v2490
    %3358 = vmatprep.subr.bf16.mxu0 %v2498
    %3359 = vmatpush1.bf16.msra.mxu0 %v2497
    %3360 = vmatprep.subr.bf16.mxu0 %v2505
    %3361 = vmatpush1.bf16.msra.mxu0 %v2504
    %3362 = vmatprep.subr.bf16.mxu0 %v2512
    %3363 = vmatpush1.bf16.msra.mxu0 %v2511
    %3364 = vmatprep.subr.bf16.mxu0 %v2519
    %3365 = vmatpush1.bf16.msra.mxu0 %v2518
    %3366 = vmatprep.subr.bf16.mxu0 %v2526
    %3367 = vmatpush1.bf16.msra.mxu0 %v2525
    %3368 = vmatprep.mubr.bf16.mxu0 %v234
    %3369 = vmatmul.mubr.bf16.gmra.mrb[0].mxu0 %v233
    %v3370 = vpop.f32.mrb[0].mxu0
    %v3371 = vadd.f32 %v3330, %v3370
    %v3372 = vpop.f32.mrb[0].mxu0
    %v3373 = vadd.f32 %v3332, %v3372
    %v3374 = vpop.f32.mrb[0].mxu0
    %v3375 = vpop.f32.mrb[0].mxu0
    %3376 = vdwg.mxu0
    %3377 = vmatprep.subr.bf16.mxu0 %v2533
    %3378 = vmatpush1.bf16.msra.mxu0 %v2532
    %3379 = vmatprep.subr.bf16.mxu0 %v2540
    %3380 = vmatpush1.bf16.msra.mxu0 %v2539
    %3381 = vmatprep.subr.bf16.mxu0 %v2547
    %3382 = vmatpush1.bf16.msra.mxu0 %v2546
    %3383 = vmatprep.subr.bf16.mxu0 %v2554
    %3384 = vmatpush1.bf16.msra.mxu0 %v2553
    %3385 = vmatprep.subr.bf16.mxu0 %v2561
    %3386 = vmatpush1.bf16.msra.mxu0 %v2560
    %3387 = vmatprep.subr.bf16.mxu0 %v2568
    %3388 = vmatpush1.bf16.msra.mxu0 %v2567
    %3389 = vmatprep.subr.bf16.mxu0 %v2575
    %3390 = vmatpush1.bf16.msra.mxu0 %v2574
    %3391 = vmatprep.subr.bf16.mxu0 %v2582
    %3392 = vmatpush1.bf16.msra.mxu0 %v2581
    %3393 = vmatprep.subr.bf16.mxu0 %v2589
    %3394 = vmatpush1.bf16.msra.mxu0 %v2588
    %3395 = vmatprep.subr.bf16.mxu0 %v2596
    %3396 = vmatpush1.bf16.msra.mxu0 %v2595
    %3397 = vmatprep.subr.bf16.mxu0 %v2603
    %3398 = vmatpush1.bf16.msra.mxu0 %v2602
    %3399 = vmatprep.subr.bf16.mxu0 %v2610
    %3400 = vmatpush1.bf16.msra.mxu0 %v2609
    %3401 = vmatprep.subr.bf16.mxu0 %v2617
    %3402 = vmatpush1.bf16.msra.mxu0 %v2616
    %3403 = vmatprep.subr.bf16.mxu0 %v2624
    %3404 = vmatpush1.bf16.msra.mxu0 %v2623
    %3405 = vmatprep.subr.bf16.mxu0 %v2631
    %3406 = vmatpush1.bf16.msra.mxu0 %v2630
    %3407 = vmatprep.subr.bf16.mxu0 %v2638
    %3408 = vmatpush1.bf16.msra.mxu0 %v2637
    %3409 = vmatprep.mubr.bf16.mxu0 %v236
    %3410 = vmatmul.mubr.bf16.gmra.mrb[0].mxu0 %v235
    %v3411 = vpop.f32.mrb[0].mxu0
    %v3412 = vadd.f32 %v3371, %v3411
    %v3413 = vpop.f32.mrb[0].mxu0
    %v3414 = vadd.f32 %v3373, %v3413
    %v3415 = vpop.f32.mrb[0].mxu0
    %v3416 = vpop.f32.mrb[0].mxu0
    %3417 = vdwg.mxu0
    %3418 = vmatprep.subr.bf16.mxu0 %v2199
    %3419 = vmatpush1.bf16.msra.mxu0 %v2198
    %3420 = vmatprep.subr.bf16.mxu0 %v2206
    %3421 = vmatpush1.bf16.msra.mxu0 %v2205
    %3422 = vmatprep.subr.bf16.mxu0 %v2213
    %3423 = vmatpush1.bf16.msra.mxu0 %v2212
    %3424 = vmatprep.subr.bf16.mxu0 %v2220
    %3425 = vmatpush1.bf16.msra.mxu0 %v2219
    %3426 = vmatprep.subr.bf16.mxu0 %v2227
    %3427 = vmatpush1.bf16.msra.mxu0 %v2226
    %3428 = vmatprep.subr.bf16.mxu0 %v2234
    %3429 = vmatpush1.bf16.msra.mxu0 %v2233
    %3430 = vmatprep.subr.bf16.mxu0 %v2241
    %3431 = vmatpush1.bf16.msra.mxu0 %v2240
    %3432 = vmatprep.subr.bf16.mxu0 %v2248
    %3433 = vmatpush1.bf16.msra.mxu0 %v2247
    %3434 = vmatprep.subr.bf16.mxu0 %v2255
    %3435 = vmatpush1.bf16.msra.mxu0 %v2254
    %3436 = vmatprep.subr.bf16.mxu0 %v2262
    %3437 = vmatpush1.bf16.msra.mxu0 %v2261
    %3438 = vmatprep.subr.bf16.mxu0 %v2269
    %3439 = vmatpush1.bf16.msra.mxu0 %v2268
    %3440 = vmatprep.subr.bf16.mxu0 %v2276
    %3441 = vmatpush1.bf16.msra.mxu0 %v2275
    %3442 = vmatprep.subr.bf16.mxu0 %v2283
    %3443 = vmatpush1.bf16.msra.mxu0 %v2282
    %3444 = vmatprep.subr.bf16.mxu0 %v2290
    %3445 = vmatpush1.bf16.msra.mxu0 %v2289
    %3446 = vmatprep.subr.bf16.mxu0 %v2297
    %3447 = vmatpush1.bf16.msra.mxu0 %v2296
    %3448 = vmatprep.subr.bf16.mxu0 %v2304
    %3449 = vmatpush1.bf16.msra.mxu0 %v2303
    %3450 = vmatprep.mubr.bf16.mxu0 %v230
    %3451 = vmatmul.mubr.bf16.gmra.mrb[0].mxu0 %v229
    %v3452 = vpop.f32.mrb[0].mxu0
    %v3453 = vadd.f32 %v770, %v3452
    %v3454 = vpop.f32.mrb[0].mxu0
    %v3455 = vadd.f32 %v774, %v3454
    %v3456 = vpop.f32.mrb[0].mxu0
    %v3457 = vpop.f32.mrb[0].mxu0
    %3458 = vdwg.mxu0
    %3459 = vmatprep.subr.bf16.mxu0 %v2311
    %3460 = vmatpush1.bf16.msra.mxu0 %v2310
    %3461 = vmatprep.subr.bf16.mxu0 %v2318
    %3462 = vmatpush1.bf16.msra.mxu0 %v2317
    %3463 = vmatprep.subr.bf16.mxu0 %v2325
    %3464 = vmatpush1.bf16.msra.mxu0 %v2324
    %3465 = vmatprep.subr.bf16.mxu0 %v2332
    %3466 = vmatpush1.bf16.msra.mxu0 %v2331
    %3467 = vmatprep.subr.bf16.mxu0 %v2339
    %3468 = vmatpush1.bf16.msra.mxu0 %v2338
    %3469 = vmatprep.subr.bf16.mxu0 %v2346
    %3470 = vmatpush1.bf16.msra.mxu0 %v2345
    %3471 = vmatprep.subr.bf16.mxu0 %v2353
    %3472 = vmatpush1.bf16.msra.mxu0 %v2352
    %3473 = vmatprep.subr.bf16.mxu0 %v2360
    %3474 = vmatpush1.bf16.msra.mxu0 %v2359
    %3475 = vmatprep.subr.bf16.mxu0 %v2367
    %3476 = vmatpush1.bf16.msra.mxu0 %v2366
    %3477 = vmatprep.subr.bf16.mxu0 %v2374
    %3478 = vmatpush1.bf16.msra.mxu0 %v2373
    %3479 = vmatprep.subr.bf16.mxu0 %v2381
    %3480 = vmatpush1.bf16.msra.mxu0 %v2380
    %3481 = vmatprep.subr.bf16.mxu0 %v2388
    %3482 = vmatpush1.bf16.msra.mxu0 %v2387
    %3483 = vmatprep.subr.bf16.mxu0 %v2395
    %3484 = vmatpush1.bf16.msra.mxu0 %v2394
    %3485 = vmatprep.subr.bf16.mxu0 %v2402
    %3486 = vmatpush1.bf16.msra.mxu0 %v2401
    %3487 = vmatprep.subr.bf16.mxu0 %v2409
    %3488 = vmatpush1.bf16.msra.mxu0 %v2408
    %3489 = vmatprep.subr.bf16.mxu0 %v2416
    %3490 = vmatpush1.bf16.msra.mxu0 %v2415
    %3491 = vmatprep.mubr.bf16.mxu0 %v232
    %3492 = vmatmul.mubr.bf16.gmra.mrb[0].mxu0 %v231
    %v3493 = vpop.f32.mrb[0].mxu0
    %v3494 = vadd.f32 %v3453, %v3493
    %v3495 = vpop.f32.mrb[0].mxu0
    %v3496 = vadd.f32 %v3455, %v3495
    %v3497 = vpop.f32.mrb[0].mxu0
    %v3498 = vpop.f32.mrb[0].mxu0
    %3499 = vdwg.mxu0
    %3500 = vmatprep.subr.bf16.mxu0 %v2423
    %3501 = vmatpush1.bf16.msra.mxu0 %v2422
    %3502 = vmatprep.subr.bf16.mxu0 %v2430
    %3503 = vmatpush1.bf16.msra.mxu0 %v2429
    %3504 = vmatprep.subr.bf16.mxu0 %v2437
    %3505 = vmatpush1.bf16.msra.mxu0 %v2436
    %3506 = vmatprep.subr.bf16.mxu0 %v2444
    %3507 = vmatpush1.bf16.msra.mxu0 %v2443
    %3508 = vmatprep.subr.bf16.mxu0 %v2451
    %3509 = vmatpush1.bf16.msra.mxu0 %v2450
    %3510 = vmatprep.subr.bf16.mxu0 %v2458
    %3511 = vmatpush1.bf16.msra.mxu0 %v2457
    %3512 = vmatprep.subr.bf16.mxu0 %v2465
    %3513 = vmatpush1.bf16.msra.mxu0 %v2464
    %3514 = vmatprep.subr.bf16.mxu0 %v2472
    %3515 = vmatpush1.bf16.msra.mxu0 %v2471
    %3516 = vmatprep.subr.bf16.mxu0 %v2479
    %3517 = vmatpush1.bf16.msra.mxu0 %v2478
    %3518 = vmatprep.subr.bf16.mxu0 %v2486
    %3519 = vmatpush1.bf16.msra.mxu0 %v2485
    %3520 = vmatprep.subr.bf16.mxu0 %v2493
    %3521 = vmatpush1.bf16.msra.mxu0 %v2492
    %3522 = vmatprep.subr.bf16.mxu0 %v2500
    %3523 = vmatpush1.bf16.msra.mxu0 %v2499
    %3524 = vmatprep.subr.bf16.mxu0 %v2507
    %3525 = vmatpush1.bf16.msra.mxu0 %v2506
    %3526 = vmatprep.subr.bf16.mxu0 %v2514
    %3527 = vmatpush1.bf16.msra.mxu0 %v2513
    %3528 = vmatprep.subr.bf16.mxu0 %v2521
    %3529 = vmatpush1.bf16.msra.mxu0 %v2520
    %3530 = vmatprep.subr.bf16.mxu0 %v2528
    %3531 = vmatpush1.bf16.msra.mxu0 %v2527
    %3532 = vmatprep.mubr.bf16.mxu0 %v234
    %3533 = vmatmul.mubr.bf16.gmra.mrb[0].mxu0 %v233
    %v3534 = vpop.f32.mrb[0].mxu0
    %v3535 = vadd.f32 %v3494, %v3534
    %v3536 = vpop.f32.mrb[0].mxu0
    %v3537 = vadd.f32 %v3496, %v3536
    %v3538 = vpop.f32.mrb[0].mxu0
    %v3539 = vpop.f32.mrb[0].mxu0
    %3540 = vdwg.mxu0
    %3541 = vmatprep.subr.bf16.mxu0 %v2535
    %3542 = vmatpush1.bf16.msra.mxu0 %v2534
    %3543 = vmatprep.subr.bf16.mxu0 %v2542
    %3544 = vmatpush1.bf16.msra.mxu0 %v2541
    %3545 = vmatprep.subr.bf16.mxu0 %v2549
    %3546 = vmatpush1.bf16.msra.mxu0 %v2548
    %3547 = vmatprep.subr.bf16.mxu0 %v2556
    %3548 = vmatpush1.bf16.msra.mxu0 %v2555
    %3549 = vmatprep.subr.bf16.mxu0 %v2563
    %3550 = vmatpush1.bf16.msra.mxu0 %v2562
    %3551 = vmatprep.subr.bf16.mxu0 %v2570
    %3552 = vmatpush1.bf16.msra.mxu0 %v2569
    %3553 = vmatprep.subr.bf16.mxu0 %v2577
    %3554 = vmatpush1.bf16.msra.mxu0 %v2576
    %3555 = vmatprep.subr.bf16.mxu0 %v2584
    %3556 = vmatpush1.bf16.msra.mxu0 %v2583
    %3557 = vmatprep.subr.bf16.mxu0 %v2591
    %3558 = vmatpush1.bf16.msra.mxu0 %v2590
    %3559 = vmatprep.subr.bf16.mxu0 %v2598
    %3560 = vmatpush1.bf16.msra.mxu0 %v2597
    %3561 = vmatprep.subr.bf16.mxu0 %v2605
    %3562 = vmatpush1.bf16.msra.mxu0 %v2604
    %3563 = vmatprep.subr.bf16.mxu0 %v2612
    %3564 = vmatpush1.bf16.msra.mxu0 %v2611
    %3565 = vmatprep.subr.bf16.mxu0 %v2619
    %3566 = vmatpush1.bf16.msra.mxu0 %v2618
    %3567 = vmatprep.subr.bf16.mxu0 %v2626
    %3568 = vmatpush1.bf16.msra.mxu0 %v2625
    %3569 = vmatprep.subr.bf16.mxu0 %v2633
    %3570 = vmatpush1.bf16.msra.mxu0 %v2632
    %3571 = vmatprep.subr.bf16.mxu0 %v2640
    %3572 = vmatpush1.bf16.msra.mxu0 %v2639
    %3573 = vmatprep.mubr.bf16.mxu0 %v236
    %3574 = vmatmul.mubr.bf16.gmra.mrb[0].mxu0 %v235
    %v3575 = vpop.f32.mrb[0].mxu0
    %v3576 = vadd.f32 %v3535, %v3575
    %v3577 = vpop.f32.mrb[0].mxu0
    %v3578 = vadd.f32 %v3537, %v3577
    %v3579 = vpop.f32.mrb[0].mxu0
    %v3580 = vpop.f32.mrb[0].mxu0
    %3581 = vdwg.mxu0
    %3582 = vmatprep.subr.bf16.mxu0 0
    %3583 = vmatpush1.bf16.msra.mxu0 %v2200
    %3584 = vmatprep.subr.bf16.mxu0 0
    %3585 = vmatpush1.bf16.msra.mxu0 %v2207
    %3586 = vmatprep.subr.bf16.mxu0 0
    %3587 = vmatpush1.bf16.msra.mxu0 %v2214
    %3588 = vmatprep.subr.bf16.mxu0 0
    %3589 = vmatpush1.bf16.msra.mxu0 %v2221
    %3590 = vmatprep.subr.bf16.mxu0 0
    %3591 = vmatpush1.bf16.msra.mxu0 %v2228
    %3592 = vmatprep.subr.bf16.mxu0 0
    %3593 = vmatpush1.bf16.msra.mxu0 %v2235
    %3594 = vmatprep.subr.bf16.mxu0 0
    %3595 = vmatpush1.bf16.msra.mxu0 %v2242
    %3596 = vmatprep.subr.bf16.mxu0 0
    %3597 = vmatpush1.bf16.msra.mxu0 %v2249
    %3598 = vmatprep.subr.bf16.mxu0 0
    %3599 = vmatpush1.bf16.msra.mxu0 %v2256
    %3600 = vmatprep.subr.bf16.mxu0 0
    %3601 = vmatpush1.bf16.msra.mxu0 %v2263
    %3602 = vmatprep.subr.bf16.mxu0 0
    %3603 = vmatpush1.bf16.msra.mxu0 %v2270
    %3604 = vmatprep.subr.bf16.mxu0 0
    %3605 = vmatpush1.bf16.msra.mxu0 %v2277
    %3606 = vmatprep.subr.bf16.mxu0 0
    %3607 = vmatpush1.bf16.msra.mxu0 %v2284
    %3608 = vmatprep.subr.bf16.mxu0 0
    %3609 = vmatpush1.bf16.msra.mxu0 %v2291
    %3610 = vmatprep.subr.bf16.mxu0 0
    %3611 = vmatpush1.bf16.msra.mxu0 %v2298
    %3612 = vmatprep.subr.bf16.mxu0 0
    %3613 = vmatpush1.bf16.msra.mxu0 %v2305
    %3614 = vmatprep.mubr.bf16.mxu0 %v230
    %3615 = vmatmul.mubr.bf16.gmra.mrb[0].mxu0 %v229
    %v3616 = vpop.f32.mrb[0].mxu0
    %v3617 = vadd.f32 %v778, %v3616
    %v3618 = vpop.f32.mrb[0].mxu0
    %v3619 = vpop.f32.mrb[0].mxu0
    %v3620 = vpop.f32.mrb[0].mxu0
    %3621 = vdwg.mxu0
    %3622 = vmatprep.subr.bf16.mxu0 0
    %3623 = vmatpush1.bf16.msra.mxu0 %v2312
    %3624 = vmatprep.subr.bf16.mxu0 0
    %3625 = vmatpush1.bf16.msra.mxu0 %v2319
    %3626 = vmatprep.subr.bf16.mxu0 0
    %3627 = vmatpush1.bf16.msra.mxu0 %v2326
    %3628 = vmatprep.subr.bf16.mxu0 0
    %3629 = vmatpush1.bf16.msra.mxu0 %v2333
    %3630 = vmatprep.subr.bf16.mxu0 0
    %3631 = vmatpush1.bf16.msra.mxu0 %v2340
    %3632 = vmatprep.subr.bf16.mxu0 0
    %3633 = vmatpush1.bf16.msra.mxu0 %v2347
    %3634 = vmatprep.subr.bf16.mxu0 0
    %3635 = vmatpush1.bf16.msra.mxu0 %v2354
    %3636 = vmatprep.subr.bf16.mxu0 0
    %3637 = vmatpush1.bf16.msra.mxu0 %v2361
    %3638 = vmatprep.subr.bf16.mxu0 0
    %3639 = vmatpush1.bf16.msra.mxu0 %v2368
    %3640 = vmatprep.subr.bf16.mxu0 0
    %3641 = vmatpush1.bf16.msra.mxu0 %v2375
    %3642 = vmatprep.subr.bf16.mxu0 0
    %3643 = vmatpush1.bf16.msra.mxu0 %v2382
    %3644 = vmatprep.subr.bf16.mxu0 0
    %3645 = vmatpush1.bf16.msra.mxu0 %v2389
    %3646 = vmatprep.subr.bf16.mxu0 0
    %3647 = vmatpush1.bf16.msra.mxu0 %v2396
    %3648 = vmatprep.subr.bf16.mxu0 0
    %3649 = vmatpush1.bf16.msra.mxu0 %v2403
    %3650 = vmatprep.subr.bf16.mxu0 0
    %3651 = vmatpush1.bf16.msra.mxu0 %v2410
    %3652 = vmatprep.subr.bf16.mxu0 0
    %3653 = vmatpush1.bf16.msra.mxu0 %v2417
    %3654 = vmatprep.mubr.bf16.mxu0 %v232
    %3655 = vmatmul.mubr.bf16.gmra.mrb[0].mxu0 %v231
    %v3656 = vpop.f32.mrb[0].mxu0
    %v3657 = vadd.f32 %v3617, %v3656
    %v3658 = vpop.f32.mrb[0].mxu0
    %v3659 = vpop.f32.mrb[0].mxu0
    %v3660 = vpop.f32.mrb[0].mxu0
    %3661 = vdwg.mxu0
    %3662 = vmatprep.subr.bf16.mxu0 0
    %3663 = vmatpush1.bf16.msra.mxu0 %v2424
    %3664 = vmatprep.subr.bf16.mxu0 0
    %3665 = vmatpush1.bf16.msra.mxu0 %v2431
    %3666 = vmatprep.subr.bf16.mxu0 0
    %3667 = vmatpush1.bf16.msra.mxu0 %v2438
    %3668 = vmatprep.subr.bf16.mxu0 0
    %3669 = vmatpush1.bf16.msra.mxu0 %v2445
    %3670 = vmatprep.subr.bf16.mxu0 0
    %3671 = vmatpush1.bf16.msra.mxu0 %v2452
    %3672 = vmatprep.subr.bf16.mxu0 0
    %3673 = vmatpush1.bf16.msra.mxu0 %v2459
    %3674 = vmatprep.subr.bf16.mxu0 0
    %3675 = vmatpush1.bf16.msra.mxu0 %v2466
    %3676 = vmatprep.subr.bf16.mxu0 0
    %3677 = vmatpush1.bf16.msra.mxu0 %v2473
    %3678 = vmatprep.subr.bf16.mxu0 0
    %3679 = vmatpush1.bf16.msra.mxu0 %v2480
    %3680 = vmatprep.subr.bf16.mxu0 0
    %3681 = vmatpush1.bf16.msra.mxu0 %v2487
    %3682 = vmatprep.subr.bf16.mxu0 0
    %3683 = vmatpush1.bf16.msra.mxu0 %v2494
    %3684 = vmatprep.subr.bf16.mxu0 0
    %3685 = vmatpush1.bf16.msra.mxu0 %v2501
    %3686 = vmatprep.subr.bf16.mxu0 0
    %3687 = vmatpush1.bf16.msra.mxu0 %v2508
    %3688 = vmatprep.subr.bf16.mxu0 0
    %3689 = vmatpush1.bf16.msra.mxu0 %v2515
    %3690 = vmatprep.subr.bf16.mxu0 0
    %3691 = vmatpush1.bf16.msra.mxu0 %v2522
    %3692 = vmatprep.subr.bf16.mxu0 0
    %3693 = vmatpush1.bf16.msra.mxu0 %v2529
    %3694 = vmatprep.mubr.bf16.mxu0 %v234
    %3695 = vmatmul.mubr.bf16.gmra.mrb[0].mxu0 %v233
    %v3696 = vpop.f32.mrb[0].mxu0
    %v3697 = vadd.f32 %v3657, %v3696
    %v3698 = vpop.f32.mrb[0].mxu0
    %v3699 = vpop.f32.mrb[0].mxu0
    %v3700 = vpop.f32.mrb[0].mxu0
    %3701 = vdwg.mxu0
    %3702 = vmatprep.subr.bf16.mxu0 0
    %3703 = vmatpush1.bf16.msra.mxu0 %v2536
    %3704 = vmatprep.subr.bf16.mxu0 0
    %3705 = vmatpush1.bf16.msra.mxu0 %v2543
    %3706 = vmatprep.subr.bf16.mxu0 0
    %3707 = vmatpush1.bf16.msra.mxu0 %v2550
    %3708 = vmatprep.subr.bf16.mxu0 0
    %3709 = vmatpush1.bf16.msra.mxu0 %v2557
    %3710 = vmatprep.subr.bf16.mxu0 0
    %3711 = vmatpush1.bf16.msra.mxu0 %v2564
    %3712 = vmatprep.subr.bf16.mxu0 0
    %3713 = vmatpush1.bf16.msra.mxu0 %v2571
    %3714 = vmatprep.subr.bf16.mxu0 0
    %3715 = vmatpush1.bf16.msra.mxu0 %v2578
    %3716 = vmatprep.subr.bf16.mxu0 0
    %3717 = vmatpush1.bf16.msra.mxu0 %v2585
    %3718 = vmatprep.subr.bf16.mxu0 0
    %3719 = vmatpush1.bf16.msra.mxu0 %v2592
    %3720 = vmatprep.subr.bf16.mxu0 0
    %3721 = vmatpush1.bf16.msra.mxu0 %v2599
    %3722 = vmatprep.subr.bf16.mxu0 0
    %3723 = vmatpush1.bf16.msra.mxu0 %v2606
    %3724 = vmatprep.subr.bf16.mxu0 0
    %3725 = vmatpush1.bf16.msra.mxu0 %v2613
    %3726 = vmatprep.subr.bf16.mxu0 0
    %3727 = vmatpush1.bf16.msra.mxu0 %v2620
    %3728 = vmatprep.subr.bf16.mxu0 0
    %3729 = vmatpush1.bf16.msra.mxu0 %v2627
    %3730 = vmatprep.subr.bf16.mxu0 0
    %3731 = vmatpush1.bf16.msra.mxu0 %v2634
    %3732 = vmatprep.subr.bf16.mxu0 0
    %3733 = vmatpush1.bf16.msra.mxu0 %v2641
    %3734 = vmatprep.mubr.bf16.mxu0 %v236
    %3735 = vmatmul.mubr.bf16.gmra.mrb[0].mxu0 %v235
    %v3736 = vpop.f32.mrb[0].mxu0
    %v3737 = vadd.f32 %v3697, %v3736
    %v3738 = vpop.f32.mrb[0].mxu0
    %v3739 = vpop.f32.mrb[0].mxu0
    %v3740 = vpop.f32.mrb[0].mxu0
    %3741 = vdwg.mxu0
    %v3742 = vmax.f32 %v3248, 0.0
    %v3743 = vmax.f32 %v3250, 0.0
    %v3744 = vmax.f32 %v3412, 0.0
    %v3745 = vmax.f32 %v3414, 0.0
    %v3746 = vmax.f32 %v3576, 0.0
    %v3747 = vmax.f32 %v3578, 0.0
    %v3748 = vmax.f32 %v3737, 0.0
    %v3749 = vpack.c.bf16 %v3742, %v3742
    %v3750 = vpack.c.bf16 %v3743, %v3743
    %v3751 = vpack.c.bf16 %v3744, %v3744
    %v3752 = vpack.c.bf16 %v3745, %v3745
    %v3753 = vpack.c.bf16 %v3746, %v3746
    %v3754 = vpack.c.bf16 %v3747, %v3747
    %v3755 = vpack.c.bf16 %v3748, %v3748
    %v3756 = vld [vmem:[#allocation7] sm:$0xff]
    %v3757 = vld [vmem:[#allocation7 + $0x8] sm:$0xf]
    %v3758 = vld [vmem:[#allocation7 + $0xc] sm:$0xff]
    %v3759 = vld [vmem:[#allocation7 + $0x14] sm:$0xf]
    %v3760 = vld [vmem:[#allocation7 + $0x18] sm:$0xff]
    %v3761 = vld [vmem:[#allocation7 + $0x20] sm:$0xf]
    %v3762 = vld [vmem:[#allocation7 + $0x24] sm:$0xff]
    %v3763 = vld [vmem:[#allocation7 + $0x2c] sm:$0xf]
    %v3764 = vld [vmem:[#allocation7 + $0x30] sm:$0xff]
    %v3765 = vld [vmem:[#allocation7 + $0x38] sm:$0xf]
    %v3766 = vld [vmem:[#allocation7 + $0x3c] sm:$0xff]
    %v3767 = vld [vmem:[#allocation7 + $0x44] sm:$0xf]
    %v3768 = vld [vmem:[#allocation7 + $0x48] sm:$0xff]
    %v3769 = vld [vmem:[#allocation7 + $0x50] sm:$0xf]
    %v3770 = vld [vmem:[#allocation7 + $0x54] sm:$0xff]
    %v3771 = vld [vmem:[#allocation7 + $0x5c] sm:$0xf]
    %v3772 = vld [vmem:[#allocation7 + $0x60] sm:$0xff]
    %v3773 = vld [vmem:[#allocation7 + $0x68] sm:$0xf]
    %v3774 = vld [vmem:[#allocation7 + $0x6c] sm:$0xff]
    %v3775 = vld [vmem:[#allocation7 + $0x74] sm:$0xf]
    %v3776 = vld [vmem:[#allocation7 + $0x78] sm:$0xff]
    %v3777 = vld [vmem:[#allocation7 + $0x80] sm:$0xf]
    %v3778 = vld [vmem:[#allocation7 + $0x84] sm:$0xff]
    %v3779 = vld [vmem:[#allocation7 + $0x8c] sm:$0xf]
    %v3780 = vld [vmem:[#allocation7 + $0x90] sm:$0xff]
    %v3781 = vld [vmem:[#allocation7 + $0x98] sm:$0xf]
    %v3782 = vld [vmem:[#allocation7 + $0x9c] sm:$0xff]
    %v3783 = vld [vmem:[#allocation7 + $0xa4] sm:$0xf]
    %v3784 = vld [vmem:[#allocation7 + $0xa8] sm:$0xff]
    %v3785 = vld [vmem:[#allocation7 + $0xb0] sm:$0xf]
    %v3786 = vld [vmem:[#allocation7 + $0xb4] sm:$0xff]
    %v3787 = vld [vmem:[#allocation7 + $0xbc] sm:$0xf]
    %v3788 = vld [vmem:[#allocation7 + $0xc0] sm:$0xff]
    %v3789 = vld [vmem:[#allocation7 + $0xc8] sm:$0xf]
    %v3790 = vld [vmem:[#allocation7 + $0xcc] sm:$0xff]
    %v3791 = vld [vmem:[#allocation7 + $0xd4] sm:$0xf]
    %v3792 = vld [vmem:[#allocation7 + $0xd8] sm:$0xff]
    %v3793 = vld [vmem:[#allocation7 + $0xe0] sm:$0xf]
    %v3794 = vld [vmem:[#allocation7 + $0xe4] sm:$0xff]
    %v3795 = vld [vmem:[#allocation7 + $0xec] sm:$0xf]
    %v3796 = vld [vmem:[#allocation7 + $0xf0] sm:$0xff]
    %v3797 = vld [vmem:[#allocation7 + $0xf8] sm:$0xf]
    %v3798 = vld [vmem:[#allocation7 + $0xfc] sm:$0xff]
    %v3799 = vld [vmem:[#allocation7 + $0x104] sm:$0xf]
    %v3800 = vld [vmem:[#allocation7 + $0x108] sm:$0xff]
    %v3801 = vld [vmem:[#allocation7 + $0x110] sm:$0xf]
    %v3802 = vld [vmem:[#allocation7 + $0x114] sm:$0xff]
    %v3803 = vld [vmem:[#allocation7 + $0x11c] sm:$0xf]
    %v3804 = vld [vmem:[#allocation7 + $0x120] sm:$0xff]
    %v3805 = vld [vmem:[#allocation7 + $0x128] sm:$0xf]
    %v3806 = vld [vmem:[#allocation7 + $0x12c] sm:$0xff]
    %v3807 = vld [vmem:[#allocation7 + $0x134] sm:$0xf]
    %v3808 = vld [vmem:[#allocation7 + $0x138] sm:$0xff]
    %v3809 = vld [vmem:[#allocation7 + $0x140] sm:$0xf]
    %v3810 = vld [vmem:[#allocation7 + $0x144] sm:$0xff]
    %v3811 = vld [vmem:[#allocation7 + $0x14c] sm:$0xf]
    %v3812 = vld [vmem:[#allocation7 + $0x150] sm:$0xff]
    %v3813 = vld [vmem:[#allocation7 + $0x158] sm:$0xf]
    %v3814 = vld [vmem:[#allocation7 + $0x15c] sm:$0xff]
    %v3815 = vld [vmem:[#allocation7 + $0x164] sm:$0xf]
    %v3816 = vld [vmem:[#allocation7 + $0x168] sm:$0xff]
    %v3817 = vld [vmem:[#allocation7 + $0x170] sm:$0xf]
    %v3818 = vld [vmem:[#allocation7 + $0x174] sm:$0xff]
    %v3819 = vld [vmem:[#allocation7 + $0x17c] sm:$0xf]
    %v3820 = vld [vmem:[#allocation7 + $0x180] sm:$0xff]
    %v3821 = vld [vmem:[#allocation7 + $0x188] sm:$0xf]
    %v3822 = vld [vmem:[#allocation7 + $0x18c] sm:$0xff]
    %v3823 = vld [vmem:[#allocation7 + $0x194] sm:$0xf]
    %v3824 = vld [vmem:[#allocation7 + $0x198] sm:$0xff]
    %v3825 = vld [vmem:[#allocation7 + $0x1a0] sm:$0xf]
    %v3826 = vld [vmem:[#allocation7 + $0x1a4] sm:$0xff]
    %v3827 = vld [vmem:[#allocation7 + $0x1ac] sm:$0xf]
    %v3828 = vld [vmem:[#allocation7 + $0x1b0] sm:$0xff]
    %v3829 = vld [vmem:[#allocation7 + $0x1b8] sm:$0xf]
    %v3830 = vld [vmem:[#allocation7 + $0x1bc] sm:$0xff]
    %v3831 = vld [vmem:[#allocation7 + $0x1c4] sm:$0xf]
    %v3832 = vld [vmem:[#allocation7 + $0x1c8] sm:$0xff]
    %v3833 = vld [vmem:[#allocation7 + $0x1d0] sm:$0xf]
    %v3834 = vld [vmem:[#allocation7 + $0x1d4] sm:$0xff]
    %v3835 = vld [vmem:[#allocation7 + $0x1dc] sm:$0xf]
    %v3836 = vld [vmem:[#allocation7 + $0x1e0] sm:$0xff]
    %v3837 = vld [vmem:[#allocation7 + $0x1e8] sm:$0xf]
    %v3838 = vld [vmem:[#allocation7 + $0x1ec] sm:$0xff]
    %v3839 = vld [vmem:[#allocation7 + $0x1f4] sm:$0xf]
    %v3840 = vld [vmem:[#allocation7 + $0x1f8] sm:$0xff]
    %v3841 = vld [vmem:[#allocation7 + $0x200] sm:$0xf]
    %v3842 = vld [vmem:[#allocation7 + $0x204] sm:$0xff]
    %v3843 = vld [vmem:[#allocation7 + $0x20c] sm:$0xf]
    %v3844 = vld [vmem:[#allocation7 + $0x210] sm:$0xff]
    %v3845 = vld [vmem:[#allocation7 + $0x218] sm:$0xf]
    %v3846 = vld [vmem:[#allocation7 + $0x21c] sm:$0xff]
    %v3847 = vld [vmem:[#allocation7 + $0x224] sm:$0xf]
    %v3848 = vld [vmem:[#allocation7 + $0x228] sm:$0xff]
    %v3849 = vld [vmem:[#allocation7 + $0x230] sm:$0xf]
    %v3850 = vld [vmem:[#allocation7 + $0x234] sm:$0xff]
    %v3851 = vld [vmem:[#allocation7 + $0x23c] sm:$0xf]
    %v3852 = vld [vmem:[#allocation7 + $0x240] sm:$0xff]
    %v3853 = vld [vmem:[#allocation7 + $0x248] sm:$0xf]
    %v3854 = vld [vmem:[#allocation7 + $0x24c] sm:$0xff]
    %v3855 = vld [vmem:[#allocation7 + $0x254] sm:$0xf]
    %v3856 = vld [vmem:[#allocation7 + $0x258] sm:$0xff]
    %v3857 = vld [vmem:[#allocation7 + $0x260] sm:$0xf]
    %v3858 = vld [vmem:[#allocation7 + $0x264] sm:$0xff]
    %v3859 = vld [vmem:[#allocation7 + $0x26c] sm:$0xf]
    %v3860 = vld [vmem:[#allocation7 + $0x270] sm:$0xff]
    %v3861 = vld [vmem:[#allocation7 + $0x278] sm:$0xf]
    %v3862 = vld [vmem:[#allocation7 + $0x27c] sm:$0xff]
    %v3863 = vld [vmem:[#allocation7 + $0x284] sm:$0xf]
    %v3864 = vld [vmem:[#allocation7 + $0x288] sm:$0xff]
    %v3865 = vld [vmem:[#allocation7 + $0x290] sm:$0xf]
    %v3866 = vld [vmem:[#allocation7 + $0x294] sm:$0xff]
    %v3867 = vld [vmem:[#allocation7 + $0x29c] sm:$0xf]
    %v3868 = vld [vmem:[#allocation7 + $0x2a0] sm:$0xff]
    %v3869 = vld [vmem:[#allocation7 + $0x2a8] sm:$0xf]
    %v3870 = vld [vmem:[#allocation7 + $0x2ac] sm:$0xff]
    %v3871 = vld [vmem:[#allocation7 + $0x2b4] sm:$0xf]
    %v3872 = vld [vmem:[#allocation7 + $0x2b8] sm:$0xff]
    %v3873 = vld [vmem:[#allocation7 + $0x2c0] sm:$0xf]
    %v3874 = vld [vmem:[#allocation7 + $0x2c4] sm:$0xff]
    %v3875 = vld [vmem:[#allocation7 + $0x2cc] sm:$0xf]
    %v3876 = vld [vmem:[#allocation7 + $0x2d0] sm:$0xff]
    %v3877 = vld [vmem:[#allocation7 + $0x2d8] sm:$0xf]
    %v3878 = vld [vmem:[#allocation7 + $0x2dc] sm:$0xff]
    %v3879 = vld [vmem:[#allocation7 + $0x2e4] sm:$0xf]
    %v3880 = vld [vmem:[#allocation7 + $0x2e8] sm:$0xff]
    %v3881 = vld [vmem:[#allocation7 + $0x2f0] sm:$0xf]
    %v3882 = vld [vmem:[#allocation7 + $0x2f4] sm:$0xff]
    %v3883 = vld [vmem:[#allocation7 + $0x2fc] sm:$0xf]
    %v3884 = vld [vmem:[#allocation7 + $0x300] sm:$0xff]
    %v3885 = vld [vmem:[#allocation7 + $0x308] sm:$0xf]
    %v3886 = vld [vmem:[#allocation7 + $0x30c] sm:$0xff]
    %v3887 = vld [vmem:[#allocation7 + $0x314] sm:$0xf]
    %v3888 = vld [vmem:[#allocation7 + $0x318] sm:$0xff]
    %v3889 = vld [vmem:[#allocation7 + $0x320] sm:$0xf]
    %v3890 = vld [vmem:[#allocation7 + $0x324] sm:$0xff]
    %v3891 = vld [vmem:[#allocation7 + $0x32c] sm:$0xf]
    %v3892 = vld [vmem:[#allocation7 + $0x330] sm:$0xff]
    %v3893 = vld [vmem:[#allocation7 + $0x338] sm:$0xf]
    %v3894 = vld [vmem:[#allocation7 + $0x33c] sm:$0xff]
    %v3895 = vld [vmem:[#allocation7 + $0x344] sm:$0xf]
    %v3896 = vld [vmem:[#allocation7 + $0x348] sm:$0xff]
    %v3897 = vld [vmem:[#allocation7 + $0x350] sm:$0xf]
    %v3898 = vld [vmem:[#allocation7 + $0x354] sm:$0xff]
    %v3899 = vld [vmem:[#allocation7 + $0x35c] sm:$0xf]
    %v3900 = vld [vmem:[#allocation7 + $0x360] sm:$0xff]
    %v3901 = vld [vmem:[#allocation7 + $0x368] sm:$0xf]
    %v3902 = vld [vmem:[#allocation7 + $0x36c] sm:$0xff]
    %v3903 = vld [vmem:[#allocation7 + $0x374] sm:$0xf]
    %v3904 = vld [vmem:[#allocation7 + $0x378] sm:$0xff]
    %v3905 = vld [vmem:[#allocation7 + $0x380] sm:$0xf]
    %v3906 = vld [vmem:[#allocation7 + $0x384] sm:$0xff]
    %v3907 = vld [vmem:[#allocation7 + $0x38c] sm:$0xf]
    %v3908 = vld [vmem:[#allocation7 + $0x390] sm:$0xff]
    %v3909 = vld [vmem:[#allocation7 + $0x398] sm:$0xf]
    %v3910 = vld [vmem:[#allocation7 + $0x39c] sm:$0xff]
    %v3911 = vld [vmem:[#allocation7 + $0x3a4] sm:$0xf]
    %v3912 = vld [vmem:[#allocation7 + $0x3a8] sm:$0xff]
    %v3913 = vld [vmem:[#allocation7 + $0x3b0] sm:$0xf]
    %v3914 = vld [vmem:[#allocation7 + $0x3b4] sm:$0xff]
    %v3915 = vld [vmem:[#allocation7 + $0x3bc] sm:$0xf]
    %v3916 = vld [vmem:[#allocation7 + $0x3c0] sm:$0xff]
    %v3917 = vld [vmem:[#allocation7 + $0x3c8] sm:$0xf]
    %v3918 = vld [vmem:[#allocation7 + $0x3cc] sm:$0xff]
    %v3919 = vld [vmem:[#allocation7 + $0x3d4] sm:$0xf]
    %v3920 = vld [vmem:[#allocation7 + $0x3d8] sm:$0xff]
    %v3921 = vld [vmem:[#allocation7 + $0x3e0] sm:$0xf]
    %v3922 = vld [vmem:[#allocation7 + $0x3e4] sm:$0xff]
    %v3923 = vld [vmem:[#allocation7 + $0x3ec] sm:$0xf]
    %v3924 = vld [vmem:[#allocation7 + $0x3f0] sm:$0xff]
    %v3925 = vld [vmem:[#allocation7 + $0x3f8] sm:$0xf]
    %v3926 = vld [vmem:[#allocation7 + $0x3fc] sm:$0xff]
    %v3927 = vld [vmem:[#allocation7 + $0x404] sm:$0xf]
    %v3928 = vld [vmem:[#allocation7 + $0x408] sm:$0xff]
    %v3929 = vld [vmem:[#allocation7 + $0x410] sm:$0xf]
    %v3930 = vld [vmem:[#allocation7 + $0x414] sm:$0xff]
    %v3931 = vld [vmem:[#allocation7 + $0x41c] sm:$0xf]
    %v3932 = vld [vmem:[#allocation7 + $0x420] sm:$0xff]
    %v3933 = vld [vmem:[#allocation7 + $0x428] sm:$0xf]
    %v3934 = vld [vmem:[#allocation7 + $0x42c] sm:$0xff]
    %v3935 = vld [vmem:[#allocation7 + $0x434] sm:$0xf]
    %v3936 = vld [vmem:[#allocation7 + $0x438] sm:$0xff]
    %v3937 = vld [vmem:[#allocation7 + $0x440] sm:$0xf]
    %v3938 = vld [vmem:[#allocation7 + $0x444] sm:$0xff]
    %v3939 = vld [vmem:[#allocation7 + $0x44c] sm:$0xf]
    %v3940 = vld [vmem:[#allocation7 + $0x450] sm:$0xff]
    %v3941 = vld [vmem:[#allocation7 + $0x458] sm:$0xf]
    %v3942 = vld [vmem:[#allocation7 + $0x45c] sm:$0xff]
    %v3943 = vld [vmem:[#allocation7 + $0x464] sm:$0xf]
    %v3944 = vld [vmem:[#allocation7 + $0x468] sm:$0xff]
    %v3945 = vld [vmem:[#allocation7 + $0x470] sm:$0xf]
    %v3946 = vld [vmem:[#allocation7 + $0x474] sm:$0xff]
    %v3947 = vld [vmem:[#allocation7 + $0x47c] sm:$0xf]
    %v3948 = vld [vmem:[#allocation7 + $0x480] sm:$0xff]
    %v3949 = vld [vmem:[#allocation7 + $0x488] sm:$0xf]
    %v3950 = vld [vmem:[#allocation7 + $0x48c] sm:$0xff]
    %v3951 = vld [vmem:[#allocation7 + $0x494] sm:$0xf]
    %v3952 = vld [vmem:[#allocation7 + $0x498] sm:$0xff]
    %v3953 = vld [vmem:[#allocation7 + $0x4a0] sm:$0xf]
    %v3954 = vld [vmem:[#allocation7 + $0x4a4] sm:$0xff]
    %v3955 = vld [vmem:[#allocation7 + $0x4ac] sm:$0xf]
    %v3956 = vld [vmem:[#allocation7 + $0x4b0] sm:$0xff]
    %v3957 = vld [vmem:[#allocation7 + $0x4b8] sm:$0xf]
    %v3958 = vld [vmem:[#allocation7 + $0x4bc] sm:$0xff]
    %v3959 = vld [vmem:[#allocation7 + $0x4c4] sm:$0xf]
    %v3960 = vld [vmem:[#allocation7 + $0x4c8] sm:$0xff]
    %v3961 = vld [vmem:[#allocation7 + $0x4d0] sm:$0xf]
    %v3962 = vld [vmem:[#allocation7 + $0x4d4] sm:$0xff]
    %v3963 = vld [vmem:[#allocation7 + $0x4dc] sm:$0xf]
    %v3964 = vld [vmem:[#allocation7 + $0x4e0] sm:$0xff]
    %v3965 = vld [vmem:[#allocation7 + $0x4e8] sm:$0xf]
    %v3966 = vld [vmem:[#allocation7 + $0x4ec] sm:$0xff]
    %v3967 = vld [vmem:[#allocation7 + $0x4f4] sm:$0xf]
    %v3968 = vld [vmem:[#allocation7 + $0x4f8] sm:$0xff]
    %v3969 = vld [vmem:[#allocation7 + $0x500] sm:$0xf]
    %v3970 = vld [vmem:[#allocation7 + $0x504] sm:$0xff]
    %v3971 = vld [vmem:[#allocation7 + $0x50c] sm:$0xf]
    %v3972 = vld [vmem:[#allocation7 + $0x510] sm:$0xff]
    %v3973 = vld [vmem:[#allocation7 + $0x518] sm:$0xf]
    %v3974 = vld [vmem:[#allocation7 + $0x51c] sm:$0xff]
    %v3975 = vld [vmem:[#allocation7 + $0x524] sm:$0xf]
    %v3976 = vld [vmem:[#allocation7 + $0x528] sm:$0xff]
    %v3977 = vld [vmem:[#allocation7 + $0x530] sm:$0xf]
    %v3978 = vld [vmem:[#allocation7 + $0x534] sm:$0xff]
    %v3979 = vld [vmem:[#allocation7 + $0x53c] sm:$0xf]
    %v3980 = vld [vmem:[#allocation8] sm:$0x7]
    %v3982 = vlaneseq
    %v3983 = vshrl.u32 %v3982, 7
    %v3984 = vsub.s32 0, %v3983
    %v3985 = vrot.slane %v3980, %v3984
    %v3986 = vlaneseq
    %v3987 = vshrl.u32 %v3986, 7
    %v3988 = vsub.s32 1, %v3987
    %v3989 = vrot.slane %v3980, %v3988
    %v3990 = vlaneseq
    %v3991 = vshrl.u32 %v3990, 7
    %v3992 = vsub.s32 2, %v3991
    %v3993 = vrot.slane %v3980, %v3992
    %v4221 = vunpack.c.l.b16 %v3756
    %v4222 = vunpack.c.h.b16 %v3756
    %v4223 = vunpack.c.l.b16 %v3757
    %v4224 = vunpack.c.l.b16 %v3758
    %v4225 = vunpack.c.h.b16 %v3758
    %v4226 = vunpack.c.l.b16 %v3759
    %v4227 = vunpack.c.l.b16 %v3760
    %v4228 = vunpack.c.h.b16 %v3760
    %v4229 = vunpack.c.l.b16 %v3761
    %v4230 = vunpack.c.l.b16 %v3762
    %v4231 = vunpack.c.h.b16 %v3762
    %v4232 = vunpack.c.l.b16 %v3763
    %v4233 = vunpack.c.l.b16 %v3764
    %v4234 = vunpack.c.h.b16 %v3764
    %v4235 = vunpack.c.l.b16 %v3765
    %v4236 = vunpack.c.l.b16 %v3766
    %v4237 = vunpack.c.h.b16 %v3766
    %v4238 = vunpack.c.l.b16 %v3767
    %v4239 = vunpack.c.l.b16 %v3768
    %v4240 = vunpack.c.h.b16 %v3768
    %v4241 = vunpack.c.l.b16 %v3769
    %v4242 = vunpack.c.l.b16 %v3770
    %v4243 = vunpack.c.h.b16 %v3770
    %v4244 = vunpack.c.l.b16 %v3771
    %v4245 = vunpack.c.l.b16 %v3772
    %v4246 = vunpack.c.h.b16 %v3772
    %v4247 = vunpack.c.l.b16 %v3773
    %v4248 = vunpack.c.l.b16 %v3774
    %v4249 = vunpack.c.h.b16 %v3774
    %v4250 = vunpack.c.l.b16 %v3775
    %v4251 = vunpack.c.l.b16 %v3776
    %v4252 = vunpack.c.h.b16 %v3776
    %v4253 = vunpack.c.l.b16 %v3777
    %v4254 = vunpack.c.l.b16 %v3778
    %v4255 = vunpack.c.h.b16 %v3778
    %v4256 = vunpack.c.l.b16 %v3779
    %v4257 = vunpack.c.l.b16 %v3780
    %v4258 = vunpack.c.h.b16 %v3780
    %v4259 = vunpack.c.l.b16 %v3781
    %v4260 = vunpack.c.l.b16 %v3782
    %v4261 = vunpack.c.h.b16 %v3782
    %v4262 = vunpack.c.l.b16 %v3783
    %v4263 = vunpack.c.l.b16 %v3784
    %v4264 = vunpack.c.h.b16 %v3784
    %v4265 = vunpack.c.l.b16 %v3785
    %v4266 = vunpack.c.l.b16 %v3786
    %v4267 = vunpack.c.h.b16 %v3786
    %v4268 = vunpack.c.l.b16 %v3787
    %v4269 = vunpack.c.l.b16 %v3788
    %v4270 = vunpack.c.h.b16 %v3788
    %v4271 = vunpack.c.l.b16 %v3789
    %v4272 = vunpack.c.l.b16 %v3790
    %v4273 = vunpack.c.h.b16 %v3790
    %v4274 = vunpack.c.l.b16 %v3791
    %v4275 = vunpack.c.l.b16 %v3792
    %v4276 = vunpack.c.h.b16 %v3792
    %v4277 = vunpack.c.l.b16 %v3793
    %v4278 = vunpack.c.l.b16 %v3794
    %v4279 = vunpack.c.h.b16 %v3794
    %v4280 = vunpack.c.l.b16 %v3795
    %v4281 = vunpack.c.l.b16 %v3796
    %v4282 = vunpack.c.h.b16 %v3796
    %v4283 = vunpack.c.l.b16 %v3797
    %v4284 = vunpack.c.l.b16 %v3798
    %v4285 = vunpack.c.h.b16 %v3798
    %v4286 = vunpack.c.l.b16 %v3799
    %v4287 = vunpack.c.l.b16 %v3800
    %v4288 = vunpack.c.h.b16 %v3800
    %v4289 = vunpack.c.l.b16 %v3801
    %v4290 = vunpack.c.l.b16 %v3802
    %v4291 = vunpack.c.h.b16 %v3802
    %v4292 = vunpack.c.l.b16 %v3803
    %v4293 = vunpack.c.l.b16 %v3804
    %v4294 = vunpack.c.h.b16 %v3804
    %v4295 = vunpack.c.l.b16 %v3805
    %v4296 = vunpack.c.l.b16 %v3806
    %v4297 = vunpack.c.h.b16 %v3806
    %v4298 = vunpack.c.l.b16 %v3807
    %v4299 = vunpack.c.l.b16 %v3808
    %v4300 = vunpack.c.h.b16 %v3808
    %v4301 = vunpack.c.l.b16 %v3809
    %v4302 = vunpack.c.l.b16 %v3810
    %v4303 = vunpack.c.h.b16 %v3810
    %v4304 = vunpack.c.l.b16 %v3811
    %v4305 = vunpack.c.l.b16 %v3812
    %v4306 = vunpack.c.h.b16 %v3812
    %v4307 = vunpack.c.l.b16 %v3813
    %v4308 = vunpack.c.l.b16 %v3814
    %v4309 = vunpack.c.h.b16 %v3814
    %v4310 = vunpack.c.l.b16 %v3815
    %v4311 = vunpack.c.l.b16 %v3816
    %v4312 = vunpack.c.h.b16 %v3816
    %v4313 = vunpack.c.l.b16 %v3817
    %v4314 = vunpack.c.l.b16 %v3818
    %v4315 = vunpack.c.h.b16 %v3818
    %v4316 = vunpack.c.l.b16 %v3819
    %v4317 = vunpack.c.l.b16 %v3820
    %v4318 = vunpack.c.h.b16 %v3820
    %v4319 = vunpack.c.l.b16 %v3821
    %v4320 = vunpack.c.l.b16 %v3822
    %v4321 = vunpack.c.h.b16 %v3822
    %v4322 = vunpack.c.l.b16 %v3823
    %v4323 = vunpack.c.l.b16 %v3824
    %v4324 = vunpack.c.h.b16 %v3824
    %v4325 = vunpack.c.l.b16 %v3825
    %v4326 = vunpack.c.l.b16 %v3826
    %v4327 = vunpack.c.h.b16 %v3826
    %v4328 = vunpack.c.l.b16 %v3827
    %v4329 = vunpack.c.l.b16 %v3828
    %v4330 = vunpack.c.h.b16 %v3828
    %v4331 = vunpack.c.l.b16 %v3829
    %v4332 = vunpack.c.l.b16 %v3830
    %v4333 = vunpack.c.h.b16 %v3830
    %v4334 = vunpack.c.l.b16 %v3831
    %v4335 = vunpack.c.l.b16 %v3832
    %v4336 = vunpack.c.h.b16 %v3832
    %v4337 = vunpack.c.l.b16 %v3833
    %v4338 = vunpack.c.l.b16 %v3834
    %v4339 = vunpack.c.h.b16 %v3834
    %v4340 = vunpack.c.l.b16 %v3835
    %v4341 = vunpack.c.l.b16 %v3836
    %v4342 = vunpack.c.h.b16 %v3836
    %v4343 = vunpack.c.l.b16 %v3837
    %v4344 = vunpack.c.l.b16 %v3838
    %v4345 = vunpack.c.h.b16 %v3838
    %v4346 = vunpack.c.l.b16 %v3839
    %v4347 = vunpack.c.l.b16 %v3840
    %v4348 = vunpack.c.h.b16 %v3840
    %v4349 = vunpack.c.l.b16 %v3841
    %v4350 = vunpack.c.l.b16 %v3842
    %v4351 = vunpack.c.h.b16 %v3842
    %v4352 = vunpack.c.l.b16 %v3843
    %v4353 = vunpack.c.l.b16 %v3844
    %v4354 = vunpack.c.h.b16 %v3844
    %v4355 = vunpack.c.l.b16 %v3845
    %v4356 = vunpack.c.l.b16 %v3846
    %v4357 = vunpack.c.h.b16 %v3846
    %v4358 = vunpack.c.l.b16 %v3847
    %v4359 = vunpack.c.l.b16 %v3848
    %v4360 = vunpack.c.h.b16 %v3848
    %v4361 = vunpack.c.l.b16 %v3849
    %v4362 = vunpack.c.l.b16 %v3850
    %v4363 = vunpack.c.h.b16 %v3850
    %v4364 = vunpack.c.l.b16 %v3851
    %v4365 = vunpack.c.l.b16 %v3852
    %v4366 = vunpack.c.h.b16 %v3852
    %v4367 = vunpack.c.l.b16 %v3853
    %v4368 = vunpack.c.l.b16 %v3854
    %v4369 = vunpack.c.h.b16 %v3854
    %v4370 = vunpack.c.l.b16 %v3855
    %v4371 = vunpack.c.l.b16 %v3856
    %v4372 = vunpack.c.h.b16 %v3856
    %v4373 = vunpack.c.l.b16 %v3857
    %v4374 = vunpack.c.l.b16 %v3858
    %v4375 = vunpack.c.h.b16 %v3858
    %v4376 = vunpack.c.l.b16 %v3859
    %v4377 = vunpack.c.l.b16 %v3860
    %v4378 = vunpack.c.h.b16 %v3860
    %v4379 = vunpack.c.l.b16 %v3861
    %v4380 = vunpack.c.l.b16 %v3862
    %v4381 = vunpack.c.h.b16 %v3862
    %v4382 = vunpack.c.l.b16 %v3863
    %v4383 = vunpack.c.l.b16 %v3864
    %v4384 = vunpack.c.h.b16 %v3864
    %v4385 = vunpack.c.l.b16 %v3865
    %v4386 = vunpack.c.l.b16 %v3866
    %v4387 = vunpack.c.h.b16 %v3866
    %v4388 = vunpack.c.l.b16 %v3867
    %v4389 = vunpack.c.l.b16 %v3868
    %v4390 = vunpack.c.h.b16 %v3868
    %v4391 = vunpack.c.l.b16 %v3869
    %v4392 = vunpack.c.l.b16 %v3870
    %v4393 = vunpack.c.h.b16 %v3870
    %v4394 = vunpack.c.l.b16 %v3871
    %v4395 = vunpack.c.l.b16 %v3872
    %v4396 = vunpack.c.h.b16 %v3872
    %v4397 = vunpack.c.l.b16 %v3873
    %v4398 = vunpack.c.l.b16 %v3874
    %v4399 = vunpack.c.h.b16 %v3874
    %v4400 = vunpack.c.l.b16 %v3875
    %v4401 = vunpack.c.l.b16 %v3876
    %v4402 = vunpack.c.h.b16 %v3876
    %v4403 = vunpack.c.l.b16 %v3877
    %v4404 = vunpack.c.l.b16 %v3878
    %v4405 = vunpack.c.h.b16 %v3878
    %v4406 = vunpack.c.l.b16 %v3879
    %v4407 = vunpack.c.l.b16 %v3880
    %v4408 = vunpack.c.h.b16 %v3880
    %v4409 = vunpack.c.l.b16 %v3881
    %v4410 = vunpack.c.l.b16 %v3882
    %v4411 = vunpack.c.h.b16 %v3882
    %v4412 = vunpack.c.l.b16 %v3883
    %v4413 = vunpack.c.l.b16 %v3884
    %v4414 = vunpack.c.h.b16 %v3884
    %v4415 = vunpack.c.l.b16 %v3885
    %v4416 = vunpack.c.l.b16 %v3886
    %v4417 = vunpack.c.h.b16 %v3886
    %v4418 = vunpack.c.l.b16 %v3887
    %v4419 = vunpack.c.l.b16 %v3888
    %v4420 = vunpack.c.h.b16 %v3888
    %v4421 = vunpack.c.l.b16 %v3889
    %v4422 = vunpack.c.l.b16 %v3890
    %v4423 = vunpack.c.h.b16 %v3890
    %v4424 = vunpack.c.l.b16 %v3891
    %v4425 = vunpack.c.l.b16 %v3892
    %v4426 = vunpack.c.h.b16 %v3892
    %v4427 = vunpack.c.l.b16 %v3893
    %v4428 = vunpack.c.l.b16 %v3894
    %v4429 = vunpack.c.h.b16 %v3894
    %v4430 = vunpack.c.l.b16 %v3895
    %v4431 = vunpack.c.l.b16 %v3896
    %v4432 = vunpack.c.h.b16 %v3896
    %v4433 = vunpack.c.l.b16 %v3897
    %v4434 = vunpack.c.l.b16 %v3898
    %v4435 = vunpack.c.h.b16 %v3898
    %v4436 = vunpack.c.l.b16 %v3899
    %v4437 = vunpack.c.l.b16 %v3900
    %v4438 = vunpack.c.h.b16 %v3900
    %v4439 = vunpack.c.l.b16 %v3901
    %v4440 = vunpack.c.l.b16 %v3902
    %v4441 = vunpack.c.h.b16 %v3902
    %v4442 = vunpack.c.l.b16 %v3903
    %v4443 = vunpack.c.l.b16 %v3904
    %v4444 = vunpack.c.h.b16 %v3904
    %v4445 = vunpack.c.l.b16 %v3905
    %v4446 = vunpack.c.l.b16 %v3906
    %v4447 = vunpack.c.h.b16 %v3906
    %v4448 = vunpack.c.l.b16 %v3907
    %v4449 = vunpack.c.l.b16 %v3908
    %v4450 = vunpack.c.h.b16 %v3908
    %v4451 = vunpack.c.l.b16 %v3909
    %v4452 = vunpack.c.l.b16 %v3910
    %v4453 = vunpack.c.h.b16 %v3910
    %v4454 = vunpack.c.l.b16 %v3911
    %v4455 = vunpack.c.l.b16 %v3912
    %v4456 = vunpack.c.h.b16 %v3912
    %v4457 = vunpack.c.l.b16 %v3913
    %v4458 = vunpack.c.l.b16 %v3914
    %v4459 = vunpack.c.h.b16 %v3914
    %v4460 = vunpack.c.l.b16 %v3915
    %v4461 = vunpack.c.l.b16 %v3916
    %v4462 = vunpack.c.h.b16 %v3916
    %v4463 = vunpack.c.l.b16 %v3917
    %v4464 = vunpack.c.l.b16 %v3918
    %v4465 = vunpack.c.h.b16 %v3918
    %v4466 = vunpack.c.l.b16 %v3919
    %v4467 = vunpack.c.l.b16 %v3920
    %v4468 = vunpack.c.h.b16 %v3920
    %v4469 = vunpack.c.l.b16 %v3921
    %v4470 = vunpack.c.l.b16 %v3922
    %v4471 = vunpack.c.h.b16 %v3922
    %v4472 = vunpack.c.l.b16 %v3923
    %v4473 = vunpack.c.l.b16 %v3924
    %v4474 = vunpack.c.h.b16 %v3924
    %v4475 = vunpack.c.l.b16 %v3925
    %v4476 = vunpack.c.l.b16 %v3926
    %v4477 = vunpack.c.h.b16 %v3926
    %v4478 = vunpack.c.l.b16 %v3927
    %v4479 = vunpack.c.l.b16 %v3928
    %v4480 = vunpack.c.h.b16 %v3928
    %v4481 = vunpack.c.l.b16 %v3929
    %v4482 = vunpack.c.l.b16 %v3930
    %v4483 = vunpack.c.h.b16 %v3930
    %v4484 = vunpack.c.l.b16 %v3931
    %v4485 = vunpack.c.l.b16 %v3932
    %v4486 = vunpack.c.h.b16 %v3932
    %v4487 = vunpack.c.l.b16 %v3933
    %v4488 = vunpack.c.l.b16 %v3934
    %v4489 = vunpack.c.h.b16 %v3934
    %v4490 = vunpack.c.l.b16 %v3935
    %v4491 = vunpack.c.l.b16 %v3936
    %v4492 = vunpack.c.h.b16 %v3936
    %v4493 = vunpack.c.l.b16 %v3937
    %v4494 = vunpack.c.l.b16 %v3938
    %v4495 = vunpack.c.h.b16 %v3938
    %v4496 = vunpack.c.l.b16 %v3939
    %v4497 = vunpack.c.l.b16 %v3940
    %v4498 = vunpack.c.h.b16 %v3940
    %v4499 = vunpack.c.l.b16 %v3941
    %v4500 = vunpack.c.l.b16 %v3942
    %v4501 = vunpack.c.h.b16 %v3942
    %v4502 = vunpack.c.l.b16 %v3943
    %v4503 = vunpack.c.l.b16 %v3944
    %v4504 = vunpack.c.h.b16 %v3944
    %v4505 = vunpack.c.l.b16 %v3945
    %v4506 = vunpack.c.l.b16 %v3946
    %v4507 = vunpack.c.h.b16 %v3946
    %v4508 = vunpack.c.l.b16 %v3947
    %v4509 = vunpack.c.l.b16 %v3948
    %v4510 = vunpack.c.h.b16 %v3948
    %v4511 = vunpack.c.l.b16 %v3949
    %v4512 = vunpack.c.l.b16 %v3950
    %v4513 = vunpack.c.h.b16 %v3950
    %v4514 = vunpack.c.l.b16 %v3951
    %v4515 = vunpack.c.l.b16 %v3952
    %v4516 = vunpack.c.h.b16 %v3952
    %v4517 = vunpack.c.l.b16 %v3953
    %v4518 = vunpack.c.l.b16 %v3954
    %v4519 = vunpack.c.h.b16 %v3954
    %v4520 = vunpack.c.l.b16 %v3955
    %v4521 = vunpack.c.l.b16 %v3956
    %v4522 = vunpack.c.h.b16 %v3956
    %v4523 = vunpack.c.l.b16 %v3957
    %v4524 = vunpack.c.l.b16 %v3958
    %v4525 = vunpack.c.h.b16 %v3958
    %v4526 = vunpack.c.l.b16 %v3959
    %v4527 = vunpack.c.l.b16 %v3960
    %v4528 = vunpack.c.h.b16 %v3960
    %v4529 = vunpack.c.l.b16 %v3961
    %v4530 = vunpack.c.l.b16 %v3962
    %v4531 = vunpack.c.h.b16 %v3962
    %v4532 = vunpack.c.l.b16 %v3963
    %v4533 = vunpack.c.l.b16 %v3964
    %v4534 = vunpack.c.h.b16 %v3964
    %v4535 = vunpack.c.l.b16 %v3965
    %v4536 = vunpack.c.l.b16 %v3966
    %v4537 = vunpack.c.h.b16 %v3966
    %v4538 = vunpack.c.l.b16 %v3967
    %v4539 = vunpack.c.l.b16 %v3968
    %v4540 = vunpack.c.h.b16 %v3968
    %v4541 = vunpack.c.l.b16 %v3969
    %v4542 = vunpack.c.l.b16 %v3970
    %v4543 = vunpack.c.h.b16 %v3970
    %v4544 = vunpack.c.l.b16 %v3971
    %v4545 = vunpack.c.l.b16 %v3972
    %v4546 = vunpack.c.h.b16 %v3972
    %v4547 = vunpack.c.l.b16 %v3973
    %v4548 = vunpack.c.l.b16 %v3974
    %v4549 = vunpack.c.h.b16 %v3974
    %v4550 = vunpack.c.l.b16 %v3975
    %v4551 = vunpack.c.l.b16 %v3976
    %v4552 = vunpack.c.h.b16 %v3976
    %v4553 = vunpack.c.l.b16 %v3977
    %v4554 = vunpack.c.l.b16 %v3978
    %v4555 = vunpack.c.h.b16 %v3978
    %v4556 = vunpack.c.l.b16 %v3979
    %v4557 = vpack.c.b16 %v4224, %v4221
    %v4558 = vpack.c.b16 %v4225, %v4222
    %v4559 = vpack.c.b16 %v4226, %v4223
    %v4560 = vpack.c.b16 %v4230, %v4227
    %v4561 = vpack.c.b16 %v4231, %v4228
    %v4562 = vpack.c.b16 %v4232, %v4229
    %v4563 = vpack.c.b16 %v4236, %v4233
    %v4564 = vpack.c.b16 %v4237, %v4234
    %v4565 = vpack.c.b16 %v4238, %v4235
    %v4566 = vpack.c.b16 %v4242, %v4239
    %v4567 = vpack.c.b16 %v4243, %v4240
    %v4568 = vpack.c.b16 %v4244, %v4241
    %v4569 = vpack.c.b16 %v4248, %v4245
    %v4570 = vpack.c.b16 %v4249, %v4246
    %v4571 = vpack.c.b16 %v4250, %v4247
    %v4572 = vpack.c.b16 %v4254, %v4251
    %v4573 = vpack.c.b16 %v4255, %v4252
    %v4574 = vpack.c.b16 %v4256, %v4253
    %v4575 = vpack.c.b16 %v4260, %v4257
    %v4576 = vpack.c.b16 %v4261, %v4258
    %v4577 = vpack.c.b16 %v4262, %v4259
    %v4578 = vpack.c.b16 %v4266, %v4263
    %v4579 = vpack.c.b16 %v4267, %v4264
    %v4580 = vpack.c.b16 %v4268, %v4265
    %v4581 = vpack.c.b16 %v4272, %v4269
    %v4582 = vpack.c.b16 %v4273, %v4270
    %v4583 = vpack.c.b16 %v4274, %v4271
    %v4584 = vpack.c.b16 %v4278, %v4275
    %v4585 = vpack.c.b16 %v4279, %v4276
    %v4586 = vpack.c.b16 %v4280, %v4277
    %v4587 = vpack.c.b16 %v4284, %v4281
    %v4588 = vpack.c.b16 %v4285, %v4282
    %v4589 = vpack.c.b16 %v4286, %v4283
    %v4590 = vpack.c.b16 %v4290, %v4287
    %v4591 = vpack.c.b16 %v4291, %v4288
    %v4592 = vpack.c.b16 %v4292, %v4289
    %v4593 = vpack.c.b16 %v4296, %v4293
    %v4594 = vpack.c.b16 %v4297, %v4294
    %v4595 = vpack.c.b16 %v4298, %v4295
    %v4596 = vpack.c.b16 %v4302, %v4299
    %v4597 = vpack.c.b16 %v4303, %v4300
    %v4598 = vpack.c.b16 %v4304, %v4301
    %v4599 = vpack.c.b16 %v4308, %v4305
    %v4600 = vpack.c.b16 %v4309, %v4306
    %v4601 = vpack.c.b16 %v4310, %v4307
    %v4602 = vpack.c.b16 %v4314, %v4311
    %v4603 = vpack.c.b16 %v4315, %v4312
    %v4604 = vpack.c.b16 %v4316, %v4313
    %v4605 = vpack.c.b16 %v4320, %v4317
    %v4606 = vpack.c.b16 %v4321, %v4318
    %v4607 = vpack.c.b16 %v4322, %v4319
    %v4608 = vpack.c.b16 %v4326, %v4323
    %v4609 = vpack.c.b16 %v4327, %v4324
    %v4610 = vpack.c.b16 %v4328, %v4325
    %v4611 = vpack.c.b16 %v4332, %v4329
    %v4612 = vpack.c.b16 %v4333, %v4330
    %v4613 = vpack.c.b16 %v4334, %v4331
    %v4614 = vpack.c.b16 %v4338, %v4335
    %v4615 = vpack.c.b16 %v4339, %v4336
    %v4616 = vpack.c.b16 %v4340, %v4337
    %v4617 = vpack.c.b16 %v4344, %v4341
    %v4618 = vpack.c.b16 %v4345, %v4342
    %v4619 = vpack.c.b16 %v4346, %v4343
    %v4620 = vpack.c.b16 %v4350, %v4347
    %v4621 = vpack.c.b16 %v4351, %v4348
    %v4622 = vpack.c.b16 %v4352, %v4349
    %v4623 = vpack.c.b16 %v4356, %v4353
    %v4624 = vpack.c.b16 %v4357, %v4354
    %v4625 = vpack.c.b16 %v4358, %v4355
    %v4626 = vpack.c.b16 %v4362, %v4359
    %v4627 = vpack.c.b16 %v4363, %v4360
    %v4628 = vpack.c.b16 %v4364, %v4361
    %v4629 = vpack.c.b16 %v4368, %v4365
    %v4630 = vpack.c.b16 %v4369, %v4366
    %v4631 = vpack.c.b16 %v4370, %v4367
    %v4632 = vpack.c.b16 %v4374, %v4371
    %v4633 = vpack.c.b16 %v4375, %v4372
    %v4634 = vpack.c.b16 %v4376, %v4373
    %v4635 = vpack.c.b16 %v4380, %v4377
    %v4636 = vpack.c.b16 %v4381, %v4378
    %v4637 = vpack.c.b16 %v4382, %v4379
    %v4638 = vpack.c.b16 %v4386, %v4383
    %v4639 = vpack.c.b16 %v4387, %v4384
    %v4640 = vpack.c.b16 %v4388, %v4385
    %v4641 = vpack.c.b16 %v4392, %v4389
    %v4642 = vpack.c.b16 %v4393, %v4390
    %v4643 = vpack.c.b16 %v4394, %v4391
    %v4644 = vpack.c.b16 %v4398, %v4395
    %v4645 = vpack.c.b16 %v4399, %v4396
    %v4646 = vpack.c.b16 %v4400, %v4397
    %v4647 = vpack.c.b16 %v4404, %v4401
    %v4648 = vpack.c.b16 %v4405, %v4402
    %v4649 = vpack.c.b16 %v4406, %v4403
    %v4650 = vpack.c.b16 %v4410, %v4407
    %v4651 = vpack.c.b16 %v4411, %v4408
    %v4652 = vpack.c.b16 %v4412, %v4409
    %v4653 = vpack.c.b16 %v4416, %v4413
    %v4654 = vpack.c.b16 %v4417, %v4414
    %v4655 = vpack.c.b16 %v4418, %v4415
    %v4656 = vpack.c.b16 %v4422, %v4419
    %v4657 = vpack.c.b16 %v4423, %v4420
    %v4658 = vpack.c.b16 %v4424, %v4421
    %v4659 = vpack.c.b16 %v4428, %v4425
    %v4660 = vpack.c.b16 %v4429, %v4426
    %v4661 = vpack.c.b16 %v4430, %v4427
    %v4662 = vpack.c.b16 %v4434, %v4431
    %v4663 = vpack.c.b16 %v4435, %v4432
    %v4664 = vpack.c.b16 %v4436, %v4433
    %v4665 = vpack.c.b16 %v4440, %v4437
    %v4666 = vpack.c.b16 %v4441, %v4438
    %v4667 = vpack.c.b16 %v4442, %v4439
    %v4668 = vpack.c.b16 %v4446, %v4443
    %v4669 = vpack.c.b16 %v4447, %v4444
    %v4670 = vpack.c.b16 %v4448, %v4445
    %v4671 = vpack.c.b16 %v4452, %v4449
    %v4672 = vpack.c.b16 %v4453, %v4450
    %v4673 = vpack.c.b16 %v4454, %v4451
    %v4674 = vpack.c.b16 %v4458, %v4455
    %v4675 = vpack.c.b16 %v4459, %v4456
    %v4676 = vpack.c.b16 %v4460, %v4457
    %v4677 = vpack.c.b16 %v4464, %v4461
    %v4678 = vpack.c.b16 %v4465, %v4462
    %v4679 = vpack.c.b16 %v4466, %v4463
    %v4680 = vpack.c.b16 %v4470, %v4467
    %v4681 = vpack.c.b16 %v4471, %v4468
    %v4682 = vpack.c.b16 %v4472, %v4469
    %v4683 = vpack.c.b16 %v4476, %v4473
    %v4684 = vpack.c.b16 %v4477, %v4474
    %v4685 = vpack.c.b16 %v4478, %v4475
    %v4686 = vpack.c.b16 %v4482, %v4479
    %v4687 = vpack.c.b16 %v4483, %v4480
    %v4688 = vpack.c.b16 %v4484, %v4481
    %v4689 = vpack.c.b16 %v4488, %v4485
    %v4690 = vpack.c.b16 %v4489, %v4486
    %v4691 = vpack.c.b16 %v4490, %v4487
    %v4692 = vpack.c.b16 %v4494, %v4491
    %v4693 = vpack.c.b16 %v4495, %v4492
    %v4694 = vpack.c.b16 %v4496, %v4493
    %v4695 = vpack.c.b16 %v4500, %v4497
    %v4696 = vpack.c.b16 %v4501, %v4498
    %v4697 = vpack.c.b16 %v4502, %v4499
    %v4698 = vpack.c.b16 %v4506, %v4503
    %v4699 = vpack.c.b16 %v4507, %v4504
    %v4700 = vpack.c.b16 %v4508, %v4505
    %v4701 = vpack.c.b16 %v4512, %v4509
    %v4702 = vpack.c.b16 %v4513, %v4510
    %v4703 = vpack.c.b16 %v4514, %v4511
    %v4704 = vpack.c.b16 %v4518, %v4515
    %v4705 = vpack.c.b16 %v4519, %v4516
    %v4706 = vpack.c.b16 %v4520, %v4517
    %v4707 = vpack.c.b16 %v4524, %v4521
    %v4708 = vpack.c.b16 %v4525, %v4522
    %v4709 = vpack.c.b16 %v4526, %v4523
    %v4710 = vpack.c.b16 %v4530, %v4527
    %v4711 = vpack.c.b16 %v4531, %v4528
    %v4712 = vpack.c.b16 %v4532, %v4529
    %v4713 = vpack.c.b16 %v4536, %v4533
    %v4714 = vpack.c.b16 %v4537, %v4534
    %v4715 = vpack.c.b16 %v4538, %v4535
    %v4716 = vpack.c.b16 %v4542, %v4539
    %v4717 = vpack.c.b16 %v4543, %v4540
    %v4718 = vpack.c.b16 %v4544, %v4541
    %v4719 = vpack.c.b16 %v4548, %v4545
    %v4720 = vpack.c.b16 %v4549, %v4546
    %v4721 = vpack.c.b16 %v4550, %v4547
    %v4722 = vpack.c.b16 %v4554, %v4551
    %v4723 = vpack.c.b16 %v4555, %v4552
    %v4724 = vpack.c.b16 %v4556, %v4553
    %4893 = vmatprep.subr.bf16.mxu0 %v4558
    %4894 = vmatpush1.bf16.msra.mxu0 %v4557
    %4895 = vmatprep.subr.bf16.mxu0 %v4561
    %4896 = vmatpush1.bf16.msra.mxu0 %v4560
    %4897 = vmatprep.subr.bf16.mxu0 %v4564
    %4898 = vmatpush1.bf16.msra.mxu0 %v4563
    %4899 = vmatprep.subr.bf16.mxu0 %v4567
    %4900 = vmatpush1.bf16.msra.mxu0 %v4566
    %4901 = vmatprep.subr.bf16.mxu0 %v4570
    %4902 = vmatpush1.bf16.msra.mxu0 %v4569
    %4903 = vmatprep.subr.bf16.mxu0 %v4573
    %4904 = vmatpush1.bf16.msra.mxu0 %v4572
    %4905 = vmatprep.subr.bf16.mxu0 %v4576
    %4906 = vmatpush1.bf16.msra.mxu0 %v4575
    %4907 = vmatprep.subr.bf16.mxu0 %v4579
    %4908 = vmatpush1.bf16.msra.mxu0 %v4578
    %4909 = vmatprep.subr.bf16.mxu0 %v4582
    %4910 = vmatpush1.bf16.msra.mxu0 %v4581
    %4911 = vmatprep.subr.bf16.mxu0 %v4585
    %4912 = vmatpush1.bf16.msra.mxu0 %v4584
    %4913 = vmatprep.subr.bf16.mxu0 %v4588
    %4914 = vmatpush1.bf16.msra.mxu0 %v4587
    %4915 = vmatprep.subr.bf16.mxu0 %v4591
    %4916 = vmatpush1.bf16.msra.mxu0 %v4590
    %4917 = vmatprep.subr.bf16.mxu0 %v4594
    %4918 = vmatpush1.bf16.msra.mxu0 %v4593
    %4919 = vmatprep.subr.bf16.mxu0 %v4597
    %4920 = vmatpush1.bf16.msra.mxu0 %v4596
    %4921 = vmatprep.subr.bf16.mxu0 %v4600
    %4922 = vmatpush1.bf16.msra.mxu0 %v4599
    %4923 = vmatprep.subr.bf16.mxu0 %v4603
    %4924 = vmatpush1.bf16.msra.mxu0 %v4602
    %4925 = vmatprep.mubr.bf16.mxu0 %v3750
    %4926 = vmatmul.mubr.bf16.gmra.mrb[0].mxu0 %v3749
    %v4927 = vpop.f32.mrb[0].mxu0
    %v4928 = vadd.f32 %v3985, %v4927
    %v4929 = vpop.f32.mrb[0].mxu0
    %v4930 = vadd.f32 %v3989, %v4929
    %v4931 = vpop.f32.mrb[0].mxu0
    %v4932 = vpop.f32.mrb[0].mxu0
    %4933 = vdwg.mxu0
    %4934 = vmatprep.subr.bf16.mxu0 %v4606
    %4935 = vmatpush1.bf16.msra.mxu0 %v4605
    %4936 = vmatprep.subr.bf16.mxu0 %v4609
    %4937 = vmatpush1.bf16.msra.mxu0 %v4608
    %4938 = vmatprep.subr.bf16.mxu0 %v4612
    %4939 = vmatpush1.bf16.msra.mxu0 %v4611
    %4940 = vmatprep.subr.bf16.mxu0 %v4615
    %4941 = vmatpush1.bf16.msra.mxu0 %v4614
    %4942 = vmatprep.subr.bf16.mxu0 %v4618
    %4943 = vmatpush1.bf16.msra.mxu0 %v4617
    %4944 = vmatprep.subr.bf16.mxu0 %v4621
    %4945 = vmatpush1.bf16.msra.mxu0 %v4620
    %4946 = vmatprep.subr.bf16.mxu0 %v4624
    %4947 = vmatpush1.bf16.msra.mxu0 %v4623
    %4948 = vmatprep.subr.bf16.mxu0 %v4627
    %4949 = vmatpush1.bf16.msra.mxu0 %v4626
    %4950 = vmatprep.subr.bf16.mxu0 %v4630
    %4951 = vmatpush1.bf16.msra.mxu0 %v4629
    %4952 = vmatprep.subr.bf16.mxu0 %v4633
    %4953 = vmatpush1.bf16.msra.mxu0 %v4632
    %4954 = vmatprep.subr.bf16.mxu0 %v4636
    %4955 = vmatpush1.bf16.msra.mxu0 %v4635
    %4956 = vmatprep.subr.bf16.mxu0 %v4639
    %4957 = vmatpush1.bf16.msra.mxu0 %v4638
    %4958 = vmatprep.subr.bf16.mxu0 %v4642
    %4959 = vmatpush1.bf16.msra.mxu0 %v4641
    %4960 = vmatprep.subr.bf16.mxu0 %v4645
    %4961 = vmatpush1.bf16.msra.mxu0 %v4644
    %4962 = vmatprep.subr.bf16.mxu0 %v4648
    %4963 = vmatpush1.bf16.msra.mxu0 %v4647
    %4964 = vmatprep.subr.bf16.mxu0 %v4651
    %4965 = vmatpush1.bf16.msra.mxu0 %v4650
    %4966 = vmatprep.mubr.bf16.mxu0 %v3752
    %4967 = vmatmul.mubr.bf16.gmra.mrb[0].mxu0 %v3751
    %v4968 = vpop.f32.mrb[0].mxu0
    %v4969 = vadd.f32 %v4928, %v4968
    %v4970 = vpop.f32.mrb[0].mxu0
    %v4971 = vadd.f32 %v4930, %v4970
    %v4972 = vpop.f32.mrb[0].mxu0
    %v4973 = vpop.f32.mrb[0].mxu0
    %4974 = vdwg.mxu0
    %4975 = vmatprep.subr.bf16.mxu0 %v4654
    %4976 = vmatpush1.bf16.msra.mxu0 %v4653
    %4977 = vmatprep.subr.bf16.mxu0 %v4657
    %4978 = vmatpush1.bf16.msra.mxu0 %v4656
    %4979 = vmatprep.subr.bf16.mxu0 %v4660
    %4980 = vmatpush1.bf16.msra.mxu0 %v4659
    %4981 = vmatprep.subr.bf16.mxu0 %v4663
    %4982 = vmatpush1.bf16.msra.mxu0 %v4662
    %4983 = vmatprep.subr.bf16.mxu0 %v4666
    %4984 = vmatpush1.bf16.msra.mxu0 %v4665
    %4985 = vmatprep.subr.bf16.mxu0 %v4669
    %4986 = vmatpush1.bf16.msra.mxu0 %v4668
    %4987 = vmatprep.subr.bf16.mxu0 %v4672
    %4988 = vmatpush1.bf16.msra.mxu0 %v4671
    %4989 = vmatprep.subr.bf16.mxu0 %v4675
    %4990 = vmatpush1.bf16.msra.mxu0 %v4674
    %4991 = vmatprep.subr.bf16.mxu0 %v4678
    %4992 = vmatpush1.bf16.msra.mxu0 %v4677
    %4993 = vmatprep.subr.bf16.mxu0 %v4681
    %4994 = vmatpush1.bf16.msra.mxu0 %v4680
    %4995 = vmatprep.subr.bf16.mxu0 %v4684
    %4996 = vmatpush1.bf16.msra.mxu0 %v4683
    %4997 = vmatprep.subr.bf16.mxu0 %v4687
    %4998 = vmatpush1.bf16.msra.mxu0 %v4686
    %4999 = vmatprep.subr.bf16.mxu0 %v4690
    %5000 = vmatpush1.bf16.msra.mxu0 %v4689
    %5001 = vmatprep.subr.bf16.mxu0 %v4693
    %5002 = vmatpush1.bf16.msra.mxu0 %v4692
    %5003 = vmatprep.subr.bf16.mxu0 %v4696
    %5004 = vmatpush1.bf16.msra.mxu0 %v4695
    %5005 = vmatprep.subr.bf16.mxu0 %v4699
    %5006 = vmatpush1.bf16.msra.mxu0 %v4698
    %5007 = vmatprep.mubr.bf16.mxu0 %v3754
    %5008 = vmatmul.mubr.bf16.gmra.mrb[0].mxu0 %v3753
    %v5009 = vpop.f32.mrb[0].mxu0
    %v5010 = vadd.f32 %v4969, %v5009
    %v5011 = vpop.f32.mrb[0].mxu0
    %v5012 = vadd.f32 %v4971, %v5011
    %v5013 = vpop.f32.mrb[0].mxu0
    %v5014 = vpop.f32.mrb[0].mxu0
    %5015 = vdwg.mxu0
    %5016 = vmatprep.subr.bf16.mxu0 %v4702
    %5017 = vmatpush1.bf16.msra.mxu0 %v4701
    %5018 = vmatprep.subr.bf16.mxu0 %v4705
    %5019 = vmatpush1.bf16.msra.mxu0 %v4704
    %5020 = vmatprep.subr.bf16.mxu0 %v4708
    %5021 = vmatpush1.bf16.msra.mxu0 %v4707
    %5022 = vmatprep.subr.bf16.mxu0 %v4711
    %5023 = vmatpush1.bf16.msra.mxu0 %v4710
    %5024 = vmatprep.subr.bf16.mxu0 %v4714
    %5025 = vmatpush1.bf16.msra.mxu0 %v4713
    %5026 = vmatprep.subr.bf16.mxu0 %v4717
    %5027 = vmatpush1.bf16.msra.mxu0 %v4716
    %5028 = vmatprep.subr.bf16.mxu0 %v4720
    %5029 = vmatpush1.bf16.msra.mxu0 %v4719
    %5030 = vmatprep.subr.bf16.mxu0 %v4723
    %5031 = vmatpush1.bf16.msra.mxu0 %v4722
    %5032 = vmatprep.subr.bf16.mxu0 0
    %5033 = vmatpush1.bf16.msra.mxu0 0
    %5034 = vmatprep.subr.bf16.mxu0 0
    %5035 = vmatpush1.bf16.msra.mxu0 0
    %5036 = vmatprep.subr.bf16.mxu0 0
    %5037 = vmatpush1.bf16.msra.mxu0 0
    %5038 = vmatprep.subr.bf16.mxu0 0
    %5039 = vmatpush1.bf16.msra.mxu0 0
    %5040 = vmatprep.subr.bf16.mxu0 0
    %5041 = vmatpush1.bf16.msra.mxu0 0
    %5042 = vmatprep.subr.bf16.mxu0 0
    %5043 = vmatpush1.bf16.msra.mxu0 0
    %5044 = vmatprep.subr.bf16.mxu0 0
    %5045 = vmatpush1.bf16.msra.mxu0 0
    %5046 = vmatprep.subr.bf16.mxu0 0
    %5047 = vmatpush1.bf16.msra.mxu0 0
    %5048 = vmatprep.mubr.bf16.mxu0 0
    %5049 = vmatmul.mubr.bf16.gmra.mrb[0].mxu0 %v3755
    %v5050 = vpop.f32.mrb[0].mxu0
    %v5051 = vadd.f32 %v5010, %v5050
    %v5052 = vpop.f32.mrb[0].mxu0
    %v5053 = vadd.f32 %v5012, %v5052
    %v5054 = vpop.f32.mrb[0].mxu0
    %v5055 = vpop.f32.mrb[0].mxu0
    %5056 = vdwg.mxu0
    %5057 = vmatprep.subr.bf16.mxu0 0
    %5058 = vmatpush1.bf16.msra.mxu0 %v4559
    %5059 = vmatprep.subr.bf16.mxu0 0
    %5060 = vmatpush1.bf16.msra.mxu0 %v4562
    %5061 = vmatprep.subr.bf16.mxu0 0
    %5062 = vmatpush1.bf16.msra.mxu0 %v4565
    %5063 = vmatprep.subr.bf16.mxu0 0
    %5064 = vmatpush1.bf16.msra.mxu0 %v4568
    %5065 = vmatprep.subr.bf16.mxu0 0
    %5066 = vmatpush1.bf16.msra.mxu0 %v4571
    %5067 = vmatprep.subr.bf16.mxu0 0
    %5068 = vmatpush1.bf16.msra.mxu0 %v4574
    %5069 = vmatprep.subr.bf16.mxu0 0
    %5070 = vmatpush1.bf16.msra.mxu0 %v4577
    %5071 = vmatprep.subr.bf16.mxu0 0
    %5072 = vmatpush1.bf16.msra.mxu0 %v4580
    %5073 = vmatprep.subr.bf16.mxu0 0
    %5074 = vmatpush1.bf16.msra.mxu0 %v4583
    %5075 = vmatprep.subr.bf16.mxu0 0
    %5076 = vmatpush1.bf16.msra.mxu0 %v4586
    %5077 = vmatprep.subr.bf16.mxu0 0
    %5078 = vmatpush1.bf16.msra.mxu0 %v4589
    %5079 = vmatprep.subr.bf16.mxu0 0
    %5080 = vmatpush1.bf16.msra.mxu0 %v4592
    %5081 = vmatprep.subr.bf16.mxu0 0
    %5082 = vmatpush1.bf16.msra.mxu0 %v4595
    %5083 = vmatprep.subr.bf16.mxu0 0
    %5084 = vmatpush1.bf16.msra.mxu0 %v4598
    %5085 = vmatprep.subr.bf16.mxu0 0
    %5086 = vmatpush1.bf16.msra.mxu0 %v4601
    %5087 = vmatprep.subr.bf16.mxu0 0
    %5088 = vmatpush1.bf16.msra.mxu0 %v4604
    %5089 = vmatprep.mubr.bf16.mxu0 %v3750
    %5090 = vmatmul.mubr.bf16.gmra.mrb[0].mxu0 %v3749
    %v5091 = vpop.f32.mrb[0].mxu0
    %v5092 = vadd.f32 %v3993, %v5091
    %v5093 = vpop.f32.mrb[0].mxu0
    %v5094 = vpop.f32.mrb[0].mxu0
    %v5095 = vpop.f32.mrb[0].mxu0
    %5096 = vdwg.mxu0
    %5097 = vmatprep.subr.bf16.mxu0 0
    %5098 = vmatpush1.bf16.msra.mxu0 %v4607
    %5099 = vmatprep.subr.bf16.mxu0 0
    %5100 = vmatpush1.bf16.msra.mxu0 %v4610
    %5101 = vmatprep.subr.bf16.mxu0 0
    %5102 = vmatpush1.bf16.msra.mxu0 %v4613
    %5103 = vmatprep.subr.bf16.mxu0 0
    %5104 = vmatpush1.bf16.msra.mxu0 %v4616
    %5105 = vmatprep.subr.bf16.mxu0 0
    %5106 = vmatpush1.bf16.msra.mxu0 %v4619
    %5107 = vmatprep.subr.bf16.mxu0 0
    %5108 = vmatpush1.bf16.msra.mxu0 %v4622
    %5109 = vmatprep.subr.bf16.mxu0 0
    %5110 = vmatpush1.bf16.msra.mxu0 %v4625
    %5111 = vmatprep.subr.bf16.mxu0 0
    %5112 = vmatpush1.bf16.msra.mxu0 %v4628
    %5113 = vmatprep.subr.bf16.mxu0 0
    %5114 = vmatpush1.bf16.msra.mxu0 %v4631
    %5115 = vmatprep.subr.bf16.mxu0 0
    %5116 = vmatpush1.bf16.msra.mxu0 %v4634
    %5117 = vmatprep.subr.bf16.mxu0 0
    %5118 = vmatpush1.bf16.msra.mxu0 %v4637
    %5119 = vmatprep.subr.bf16.mxu0 0
    %5120 = vmatpush1.bf16.msra.mxu0 %v4640
    %5121 = vmatprep.subr.bf16.mxu0 0
    %5122 = vmatpush1.bf16.msra.mxu0 %v4643
    %5123 = vmatprep.subr.bf16.mxu0 0
    %5124 = vmatpush1.bf16.msra.mxu0 %v4646
    %5125 = vmatprep.subr.bf16.mxu0 0
    %5126 = vmatpush1.bf16.msra.mxu0 %v4649
    %5127 = vmatprep.subr.bf16.mxu0 0
    %5128 = vmatpush1.bf16.msra.mxu0 %v4652
    %5129 = vmatprep.mubr.bf16.mxu0 %v3752
    %5130 = vmatmul.mubr.bf16.gmra.mrb[0].mxu0 %v3751
    %v5131 = vpop.f32.mrb[0].mxu0
    %v5132 = vadd.f32 %v5092, %v5131
    %v5133 = vpop.f32.mrb[0].mxu0
    %v5134 = vpop.f32.mrb[0].mxu0
    %v5135 = vpop.f32.mrb[0].mxu0
    %5136 = vdwg.mxu0
    %5137 = vmatprep.subr.bf16.mxu0 0
    %5138 = vmatpush1.bf16.msra.mxu0 %v4655
    %5139 = vmatprep.subr.bf16.mxu0 0
    %5140 = vmatpush1.bf16.msra.mxu0 %v4658
    %5141 = vmatprep.subr.bf16.mxu0 0
    %5142 = vmatpush1.bf16.msra.mxu0 %v4661
    %5143 = vmatprep.subr.bf16.mxu0 0
    %5144 = vmatpush1.bf16.msra.mxu0 %v4664
    %5145 = vmatprep.subr.bf16.mxu0 0
    %5146 = vmatpush1.bf16.msra.mxu0 %v4667
    %5147 = vmatprep.subr.bf16.mxu0 0
    %5148 = vmatpush1.bf16.msra.mxu0 %v4670
    %5149 = vmatprep.subr.bf16.mxu0 0
    %5150 = vmatpush1.bf16.msra.mxu0 %v4673
    %5151 = vmatprep.subr.bf16.mxu0 0
    %5152 = vmatpush1.bf16.msra.mxu0 %v4676
    %5153 = vmatprep.subr.bf16.mxu0 0
    %5154 = vmatpush1.bf16.msra.mxu0 %v4679
    %5155 = vmatprep.subr.bf16.mxu0 0
    %5156 = vmatpush1.bf16.msra.mxu0 %v4682
    %5157 = vmatprep.subr.bf16.mxu0 0
    %5158 = vmatpush1.bf16.msra.mxu0 %v4685
    %5159 = vmatprep.subr.bf16.mxu0 0
    %5160 = vmatpush1.bf16.msra.mxu0 %v4688
    %5161 = vmatprep.subr.bf16.mxu0 0
    %5162 = vmatpush1.bf16.msra.mxu0 %v4691
    %5163 = vmatprep.subr.bf16.mxu0 0
    %5164 = vmatpush1.bf16.msra.mxu0 %v4694
    %5165 = vmatprep.subr.bf16.mxu0 0
    %5166 = vmatpush1.bf16.msra.mxu0 %v4697
    %5167 = vmatprep.subr.bf16.mxu0 0
    %5168 = vmatpush1.bf16.msra.mxu0 %v4700
    %5169 = vmatprep.mubr.bf16.mxu0 %v3754
    %5170 = vmatmul.mubr.bf16.gmra.mrb[0].mxu0 %v3753
    %v5171 = vpop.f32.mrb[0].mxu0
    %v5172 = vadd.f32 %v5132, %v5171
    %v5173 = vpop.f32.mrb[0].mxu0
    %v5174 = vpop.f32.mrb[0].mxu0
    %v5175 = vpop.f32.mrb[0].mxu0
    %5176 = vdwg.mxu0
    %5177 = vmatprep.subr.bf16.mxu0 0
    %5178 = vmatpush1.bf16.msra.mxu0 %v4703
    %5179 = vmatprep.subr.bf16.mxu0 0
    %5180 = vmatpush1.bf16.msra.mxu0 %v4706
    %5181 = vmatprep.subr.bf16.mxu0 0
    %5182 = vmatpush1.bf16.msra.mxu0 %v4709
    %5183 = vmatprep.subr.bf16.mxu0 0
    %5184 = vmatpush1.bf16.msra.mxu0 %v4712
    %5185 = vmatprep.subr.bf16.mxu0 0
    %5186 = vmatpush1.bf16.msra.mxu0 %v4715
    %5187 = vmatprep.subr.bf16.mxu0 0
    %5188 = vmatpush1.bf16.msra.mxu0 %v4718
    %5189 = vmatprep.subr.bf16.mxu0 0
    %5190 = vmatpush1.bf16.msra.mxu0 %v4721
    %5191 = vmatprep.subr.bf16.mxu0 0
    %5192 = vmatpush1.bf16.msra.mxu0 %v4724
    %5193 = vmatprep.subr.bf16.mxu0 0
    %5194 = vmatpush1.bf16.msra.mxu0 0
    %5195 = vmatprep.subr.bf16.mxu0 0
    %5196 = vmatpush1.bf16.msra.mxu0 0
    %5197 = vmatprep.subr.bf16.mxu0 0
    %5198 = vmatpush1.bf16.msra.mxu0 0
    %5199 = vmatprep.subr.bf16.mxu0 0
    %5200 = vmatpush1.bf16.msra.mxu0 0
    %5201 = vmatprep.subr.bf16.mxu0 0
    %5202 = vmatpush1.bf16.msra.mxu0 0
    %5203 = vmatprep.subr.bf16.mxu0 0
    %5204 = vmatpush1.bf16.msra.mxu0 0
    %5205 = vmatprep.subr.bf16.mxu0 0
    %5206 = vmatpush1.bf16.msra.mxu0 0
    %5207 = vmatprep.subr.bf16.mxu0 0
    %5208 = vmatpush1.bf16.msra.mxu0 0
    %5209 = vmatprep.mubr.bf16.mxu0 0
    %5210 = vmatmul.mubr.bf16.gmra.mrb[0].mxu0 %v3755
    %v5211 = vpop.f32.mrb[0].mxu0
    %v5212 = vadd.f32 %v5172, %v5211
    %v5213 = vpop.f32.mrb[0].mxu0
    %v5214 = vpop.f32.mrb[0].mxu0
    %v5215 = vpop.f32.mrb[0].mxu0
    %5216 = vdwg.mxu0
    %v5217 = vmax.f32 %v5051, 0.0
    %v5218 = vmax.f32 %v5053, 0.0
    %v5219 = vmax.f32 %v5212, 0.0
    %v5220 = vpack.c.bf16 %v5217, %v5217
    %v5221 = vpack.c.bf16 %v5218, %v5218
    %v5222 = vpack.c.bf16 %v5219, %v5219
    %v5223 = vld [vmem:[#allocation10] sm:$0xf]
    %v5224 = vld [vmem:[#allocation10 + $0x4] sm:$0xf]
    %v5225 = vld [vmem:[#allocation10 + $0x8] sm:$0xf]
    %v5226 = vld [vmem:[#allocation10 + $0xc] sm:$0xf]
    %v5227 = vld [vmem:[#allocation10 + $0x10] sm:$0xf]
    %v5228 = vld [vmem:[#allocation10 + $0x14] sm:$0xf]
    %v5229 = vld [vmem:[#allocation10 + $0x18] sm:$0xf]
    %v5230 = vld [vmem:[#allocation10 + $0x1c] sm:$0xf]
    %v5231 = vld [vmem:[#allocation10 + $0x20] sm:$0xf]
    %v5232 = vld [vmem:[#allocation10 + $0x24] sm:$0xf]
    %v5233 = vld [vmem:[#allocation10 + $0x28] sm:$0xf]
    %v5234 = vld [vmem:[#allocation10 + $0x2c] sm:$0xf]
    %v5235 = vld [vmem:[#allocation10 + $0x30] sm:$0xf]
    %v5236 = vld [vmem:[#allocation10 + $0x34] sm:$0xf]
    %v5237 = vld [vmem:[#allocation10 + $0x38] sm:$0xf]
    %v5238 = vld [vmem:[#allocation10 + $0x3c] sm:$0xf]
    %v5239 = vld [vmem:[#allocation10 + $0x40] sm:$0xf]
    %v5240 = vld [vmem:[#allocation10 + $0x44] sm:$0xf]
    %v5241 = vld [vmem:[#allocation10 + $0x48] sm:$0xf]
    %v5242 = vld [vmem:[#allocation10 + $0x4c] sm:$0xf]
    %v5243 = vld [vmem:[#allocation10 + $0x50] sm:$0xf]
    %v5244 = vld [vmem:[#allocation10 + $0x54] sm:$0xf]
    %v5245 = vld [vmem:[#allocation10 + $0x58] sm:$0xf]
    %v5246 = vld [vmem:[#allocation10 + $0x5c] sm:$0xf]
    %v5247 = vld [vmem:[#allocation10 + $0x60] sm:$0xf]
    %v5248 = vld [vmem:[#allocation10 + $0x64] sm:$0xf]
    %v5249 = vld [vmem:[#allocation10 + $0x68] sm:$0xf]
    %v5250 = vld [vmem:[#allocation10 + $0x6c] sm:$0xf]
    %v5251 = vld [vmem:[#allocation10 + $0x70] sm:$0xf]
    %v5252 = vld [vmem:[#allocation10 + $0x74] sm:$0xf]
    %v5253 = vld [vmem:[#allocation10 + $0x78] sm:$0xf]
    %v5254 = vld [vmem:[#allocation10 + $0x7c] sm:$0xf]
    %v5255 = vld [vmem:[#allocation10 + $0x80] sm:$0xf]
    %v5256 = vld [vmem:[#allocation10 + $0x84] sm:$0xf]
    %v5257 = vld [vmem:[#allocation10 + $0x88] sm:$0xf]
    %v5258 = vld [vmem:[#allocation10 + $0x8c] sm:$0xf]
    %v5259 = vld [vmem:[#allocation10 + $0x90] sm:$0xf]
    %v5260 = vld [vmem:[#allocation10 + $0x94] sm:$0xf]
    %v5261 = vld [vmem:[#allocation10 + $0x98] sm:$0xf]
    %v5262 = vld [vmem:[#allocation10 + $0x9c] sm:$0xf]
    %v5263 = vld [vmem:[#allocation10 + $0xa0] sm:$0xf]
    %v5264 = vld [vmem:[#allocation10 + $0xa4] sm:$0xf]
    %v5265 = vld [vmem:[#allocation10 + $0xa8] sm:$0xf]
    %v5266 = vld [vmem:[#allocation10 + $0xac] sm:$0xf]
    %v5267 = vld [vmem:[#allocation10 + $0xb0] sm:$0xf]
    %v5268 = vld [vmem:[#allocation10 + $0xb4] sm:$0xf]
    %v5269 = vld [vmem:[#allocation10 + $0xb8] sm:$0xf]
    %v5270 = vld [vmem:[#allocation10 + $0xbc] sm:$0xf]
    %v5271 = vld [vmem:[#allocation11] sm:$0x1]
    %v5273 = vlaneseq
    %v5274 = vshrl.u32 %v5273, 7
    %v5275 = vsub.s32 0, %v5274
    %v5276 = vrot.slane %v5271, %v5275
    %v5326 = vunpack.c.l.b16 %v5223
    %v5327 = vunpack.c.l.b16 %v5224
    %v5328 = vunpack.c.l.b16 %v5225
    %v5329 = vunpack.c.l.b16 %v5226
    %v5330 = vunpack.c.l.b16 %v5227
    %v5331 = vunpack.c.l.b16 %v5228
    %v5332 = vunpack.c.l.b16 %v5229
    %v5333 = vunpack.c.l.b16 %v5230
    %v5334 = vunpack.c.l.b16 %v5231
    %v5335 = vunpack.c.l.b16 %v5232
    %v5336 = vunpack.c.l.b16 %v5233
    %v5337 = vunpack.c.l.b16 %v5234
    %v5338 = vunpack.c.l.b16 %v5235
    %v5339 = vunpack.c.l.b16 %v5236
    %v5340 = vunpack.c.l.b16 %v5237
    %v5341 = vunpack.c.l.b16 %v5238
    %v5342 = vunpack.c.l.b16 %v5239
    %v5343 = vunpack.c.l.b16 %v5240
    %v5344 = vunpack.c.l.b16 %v5241
    %v5345 = vunpack.c.l.b16 %v5242
    %v5346 = vunpack.c.l.b16 %v5243
    %v5347 = vunpack.c.l.b16 %v5244
    %v5348 = vunpack.c.l.b16 %v5245
    %v5349 = vunpack.c.l.b16 %v5246
    %v5350 = vunpack.c.l.b16 %v5247
    %v5351 = vunpack.c.l.b16 %v5248
    %v5352 = vunpack.c.l.b16 %v5249
    %v5353 = vunpack.c.l.b16 %v5250
    %v5354 = vunpack.c.l.b16 %v5251
    %v5355 = vunpack.c.l.b16 %v5252
    %v5356 = vunpack.c.l.b16 %v5253
    %v5357 = vunpack.c.l.b16 %v5254
    %v5358 = vunpack.c.l.b16 %v5255
    %v5359 = vunpack.c.l.b16 %v5256
    %v5360 = vunpack.c.l.b16 %v5257
    %v5361 = vunpack.c.l.b16 %v5258
    %v5362 = vunpack.c.l.b16 %v5259
    %v5363 = vunpack.c.l.b16 %v5260
    %v5364 = vunpack.c.l.b16 %v5261
    %v5365 = vunpack.c.l.b16 %v5262
    %v5366 = vunpack.c.l.b16 %v5263
    %v5367 = vunpack.c.l.b16 %v5264
    %v5368 = vunpack.c.l.b16 %v5265
    %v5369 = vunpack.c.l.b16 %v5266
    %v5370 = vunpack.c.l.b16 %v5267
    %v5371 = vunpack.c.l.b16 %v5268
    %v5372 = vunpack.c.l.b16 %v5269
    %v5373 = vunpack.c.l.b16 %v5270
    %v5374 = vpack.c.b16 %v5327, %v5326
    %v5375 = vpack.c.b16 %v5329, %v5328
    %v5376 = vpack.c.b16 %v5331, %v5330
    %v5377 = vpack.c.b16 %v5333, %v5332
    %v5378 = vpack.c.b16 %v5335, %v5334
    %v5379 = vpack.c.b16 %v5337, %v5336
    %v5380 = vpack.c.b16 %v5339, %v5338
    %v5381 = vpack.c.b16 %v5341, %v5340
    %v5382 = vpack.c.b16 %v5343, %v5342
    %v5383 = vpack.c.b16 %v5345, %v5344
    %v5384 = vpack.c.b16 %v5347, %v5346
    %v5385 = vpack.c.b16 %v5349, %v5348
    %v5386 = vpack.c.b16 %v5351, %v5350
    %v5387 = vpack.c.b16 %v5353, %v5352
    %v5388 = vpack.c.b16 %v5355, %v5354
    %v5389 = vpack.c.b16 %v5357, %v5356
    %v5390 = vpack.c.b16 %v5359, %v5358
    %v5391 = vpack.c.b16 %v5361, %v5360
    %v5392 = vpack.c.b16 %v5363, %v5362
    %v5393 = vpack.c.b16 %v5365, %v5364
    %v5394 = vpack.c.b16 %v5367, %v5366
    %v5395 = vpack.c.b16 %v5369, %v5368
    %v5396 = vpack.c.b16 %v5371, %v5370
    %v5397 = vpack.c.b16 %v5373, %v5372
    %5422 = vmatprep.subr.bf16.mxu0 0
    %5423 = vmatpush1.bf16.msra.mxu0 %v5374
    %5424 = vmatprep.subr.bf16.mxu0 0
    %5425 = vmatpush1.bf16.msra.mxu0 %v5375
    %5426 = vmatprep.subr.bf16.mxu0 0
    %5427 = vmatpush1.bf16.msra.mxu0 %v5376
    %5428 = vmatprep.subr.bf16.mxu0 0
    %5429 = vmatpush1.bf16.msra.mxu0 %v5377
    %5430 = vmatprep.subr.bf16.mxu0 0
    %5431 = vmatpush1.bf16.msra.mxu0 %v5378
    %5432 = vmatprep.subr.bf16.mxu0 0
    %5433 = vmatpush1.bf16.msra.mxu0 %v5379
    %5434 = vmatprep.subr.bf16.mxu0 0
    %5435 = vmatpush1.bf16.msra.mxu0 %v5380
    %5436 = vmatprep.subr.bf16.mxu0 0
    %5437 = vmatpush1.bf16.msra.mxu0 %v5381
    %5438 = vmatprep.subr.bf16.mxu0 0
    %5439 = vmatpush1.bf16.msra.mxu0 %v5382
    %5440 = vmatprep.subr.bf16.mxu0 0
    %5441 = vmatpush1.bf16.msra.mxu0 %v5383
    %5442 = vmatprep.subr.bf16.mxu0 0
    %5443 = vmatpush1.bf16.msra.mxu0 %v5384
    %5444 = vmatprep.subr.bf16.mxu0 0
    %5445 = vmatpush1.bf16.msra.mxu0 %v5385
    %5446 = vmatprep.subr.bf16.mxu0 0
    %5447 = vmatpush1.bf16.msra.mxu0 %v5386
    %5448 = vmatprep.subr.bf16.mxu0 0
    %5449 = vmatpush1.bf16.msra.mxu0 %v5387
    %5450 = vmatprep.subr.bf16.mxu0 0
    %5451 = vmatpush1.bf16.msra.mxu0 %v5388
    %5452 = vmatprep.subr.bf16.mxu0 0
    %5453 = vmatpush1.bf16.msra.mxu0 %v5389
    %5454 = vmatprep.mubr.bf16.mxu0 %v5221
    %5455 = vmatmul.mubr.bf16.gmra.mrb[0].mxu0 %v5220
    %v5456 = vpop.f32.mrb[0].mxu0
    %v5457 = vadd.f32 %v5276, %v5456
    %v5458 = vpop.f32.mrb[0].mxu0
    %v5459 = vpop.f32.mrb[0].mxu0
    %v5460 = vpop.f32.mrb[0].mxu0
    %5461 = vdwg.mxu0
    %5462 = vmatprep.subr.bf16.mxu0 0
    %5463 = vmatpush1.bf16.msra.mxu0 %v5390
    %5464 = vmatprep.subr.bf16.mxu0 0
    %5465 = vmatpush1.bf16.msra.mxu0 %v5391
    %5466 = vmatprep.subr.bf16.mxu0 0
    %5467 = vmatpush1.bf16.msra.mxu0 %v5392
    %5468 = vmatprep.subr.bf16.mxu0 0
    %5469 = vmatpush1.bf16.msra.mxu0 %v5393
    %5470 = vmatprep.subr.bf16.mxu0 0
    %5471 = vmatpush1.bf16.msra.mxu0 %v5394
    %5472 = vmatprep.subr.bf16.mxu0 0
    %5473 = vmatpush1.bf16.msra.mxu0 %v5395
    %5474 = vmatprep.subr.bf16.mxu0 0
    %5475 = vmatpush1.bf16.msra.mxu0 %v5396
    %5476 = vmatprep.subr.bf16.mxu0 0
    %5477 = vmatpush1.bf16.msra.mxu0 %v5397
    %5478 = vmatprep.subr.bf16.mxu0 0
    %5479 = vmatpush1.bf16.msra.mxu0 0
    %5480 = vmatprep.subr.bf16.mxu0 0
    %5481 = vmatpush1.bf16.msra.mxu0 0
    %5482 = vmatprep.subr.bf16.mxu0 0
    %5483 = vmatpush1.bf16.msra.mxu0 0
    %5484 = vmatprep.subr.bf16.mxu0 0
    %5485 = vmatpush1.bf16.msra.mxu0 0
    %5486 = vmatprep.subr.bf16.mxu0 0
    %5487 = vmatpush1.bf16.msra.mxu0 0
    %5488 = vmatprep.subr.bf16.mxu0 0
    %5489 = vmatpush1.bf16.msra.mxu0 0
    %5490 = vmatprep.subr.bf16.mxu0 0
    %5491 = vmatpush1.bf16.msra.mxu0 0
    %5492 = vmatprep.subr.bf16.mxu0 0
    %5493 = vmatpush1.bf16.msra.mxu0 0
    %5494 = vmatprep.mubr.bf16.mxu0 0
    %5495 = vmatmul.mubr.bf16.gmra.mrb[0].mxu0 %v5222
    %v5496 = vpop.f32.mrb[0].mxu0
    %v5497 = vadd.f32 %v5457, %v5496
    %v5498 = vpop.f32.mrb[0].mxu0
    %v5499 = vpop.f32.mrb[0].mxu0
    %v5500 = vpop.f32.mrb[0].mxu0
    %5501 = vdwg.mxu0
    %v5502 = vmax.f32 %v5497, 0.0
    %v5503 = vpack.c.bf16 %v5502, %v5502
    %v5504 = vld [vmem:[#allocation13] sm:$0xff]
    %v5505 = vld [vmem:[#allocation13 + $0x8] sm:$0xff]
    %v5506 = vld [vmem:[#allocation13 + $0x10] sm:$0xff]
    %v5507 = vld [vmem:[#allocation13 + $0x18] sm:$0xff]
    %v5508 = vld [vmem:[#allocation13 + $0x20] sm:$0xff]
    %v5509 = vld [vmem:[#allocation13 + $0x28] sm:$0xff]
    %v5510 = vld [vmem:[#allocation13 + $0x30] sm:$0xff]
    %v5511 = vld [vmem:[#allocation13 + $0x38] sm:$0xff]
    %v5512 = vld [vmem:[#allocation13 + $0x40] sm:$0xff]
    %v5513 = vld [vmem:[#allocation13 + $0x48] sm:$0xff]
    %v5514 = vld [vmem:[#allocation13 + $0x50] sm:$0xff]
    %v5515 = vld [vmem:[#allocation13 + $0x58] sm:$0xff]
    %v5516 = vld [vmem:[#allocation13 + $0x60] sm:$0xff]
    %v5517 = vld [vmem:[#allocation13 + $0x68] sm:$0xff]
    %v5518 = vld [vmem:[#allocation13 + $0x70] sm:$0xff]
    %v5519 = vld [vmem:[#allocation13 + $0x78] sm:$0xff]
    %v5520 = vld [vmem:[#allocation14] sm:$0x3]
    %v5522 = vlaneseq
    %v5523 = vshrl.u32 %v5522, 7
    %v5524 = vsub.s32 0, %v5523
    %v5525 = vrot.slane %v5520, %v5524
    %v5526 = vlaneseq
    %v5527 = vshrl.u32 %v5526, 7
    %v5528 = vsub.s32 1, %v5527
    %v5529 = vrot.slane %v5520, %v5528
    %v5548 = vunpack.c.l.b16 %v5504
    %v5549 = vunpack.c.h.b16 %v5504
    %v5550 = vunpack.c.l.b16 %v5505
    %v5551 = vunpack.c.h.b16 %v5505
    %v5552 = vunpack.c.l.b16 %v5506
    %v5553 = vunpack.c.h.b16 %v5506
    %v5554 = vunpack.c.l.b16 %v5507
    %v5555 = vunpack.c.h.b16 %v5507
    %v5556 = vunpack.c.l.b16 %v5508
    %v5557 = vunpack.c.h.b16 %v5508
    %v5558 = vunpack.c.l.b16 %v5509
    %v5559 = vunpack.c.h.b16 %v5509
    %v5560 = vunpack.c.l.b16 %v5510
    %v5561 = vunpack.c.h.b16 %v5510
    %v5562 = vunpack.c.l.b16 %v5511
    %v5563 = vunpack.c.h.b16 %v5511
    %v5564 = vunpack.c.l.b16 %v5512
    %v5565 = vunpack.c.h.b16 %v5512
    %v5566 = vunpack.c.l.b16 %v5513
    %v5567 = vunpack.c.h.b16 %v5513
    %v5568 = vunpack.c.l.b16 %v5514
    %v5569 = vunpack.c.h.b16 %v5514
    %v5570 = vunpack.c.l.b16 %v5515
    %v5571 = vunpack.c.h.b16 %v5515
    %v5572 = vunpack.c.l.b16 %v5516
    %v5573 = vunpack.c.h.b16 %v5516
    %v5574 = vunpack.c.l.b16 %v5517
    %v5575 = vunpack.c.h.b16 %v5517
    %v5576 = vunpack.c.l.b16 %v5518
    %v5577 = vunpack.c.h.b16 %v5518
    %v5578 = vunpack.c.l.b16 %v5519
    %v5579 = vunpack.c.h.b16 %v5519
    %v5580 = vpack.c.b16 %v5550, %v5548
    %v5581 = vpack.c.b16 %v5551, %v5549
    %v5582 = vpack.c.b16 %v5554, %v5552
    %v5583 = vpack.c.b16 %v5555, %v5553
    %v5584 = vpack.c.b16 %v5558, %v5556
    %v5585 = vpack.c.b16 %v5559, %v5557
    %v5586 = vpack.c.b16 %v5562, %v5560
    %v5587 = vpack.c.b16 %v5563, %v5561
    %v5588 = vpack.c.b16 %v5566, %v5564
    %v5589 = vpack.c.b16 %v5567, %v5565
    %v5590 = vpack.c.b16 %v5570, %v5568
    %v5591 = vpack.c.b16 %v5571, %v5569
    %v5592 = vpack.c.b16 %v5574, %v5572
    %v5593 = vpack.c.b16 %v5575, %v5573
    %v5594 = vpack.c.b16 %v5578, %v5576
    %v5595 = vpack.c.b16 %v5579, %v5577
    %5612 = vmatprep.subr.bf16.mxu0 %v5581
    %5613 = vmatpush1.bf16.msra.mxu0 %v5580
    %5614 = vmatprep.subr.bf16.mxu0 %v5583
    %5615 = vmatpush1.bf16.msra.mxu0 %v5582
    %5616 = vmatprep.subr.bf16.mxu0 %v5585
    %5617 = vmatpush1.bf16.msra.mxu0 %v5584
    %5618 = vmatprep.subr.bf16.mxu0 %v5587
    %5619 = vmatpush1.bf16.msra.mxu0 %v5586
    %5620 = vmatprep.subr.bf16.mxu0 %v5589
    %5621 = vmatpush1.bf16.msra.mxu0 %v5588
    %5622 = vmatprep.subr.bf16.mxu0 %v5591
    %5623 = vmatpush1.bf16.msra.mxu0 %v5590
    %5624 = vmatprep.subr.bf16.mxu0 %v5593
    %5625 = vmatpush1.bf16.msra.mxu0 %v5592
    %5626 = vmatprep.subr.bf16.mxu0 %v5595
    %5627 = vmatpush1.bf16.msra.mxu0 %v5594
    %5628 = vmatprep.subr.bf16.mxu0 0
    %5629 = vmatpush1.bf16.msra.mxu0 0
    %5630 = vmatprep.subr.bf16.mxu0 0
    %5631 = vmatpush1.bf16.msra.mxu0 0
    %5632 = vmatprep.subr.bf16.mxu0 0
    %5633 = vmatpush1.bf16.msra.mxu0 0
    %5634 = vmatprep.subr.bf16.mxu0 0
    %5635 = vmatpush1.bf16.msra.mxu0 0
    %5636 = vmatprep.subr.bf16.mxu0 0
    %5637 = vmatpush1.bf16.msra.mxu0 0
    %5638 = vmatprep.subr.bf16.mxu0 0
    %5639 = vmatpush1.bf16.msra.mxu0 0
    %5640 = vmatprep.subr.bf16.mxu0 0
    %5641 = vmatpush1.bf16.msra.mxu0 0
    %5642 = vmatprep.subr.bf16.mxu0 0
    %5643 = vmatpush1.bf16.msra.mxu0 0
    %5644 = vmatprep.mubr.bf16.mxu0 0
    %5645 = vmatmul.mubr.bf16.gmra.mrb[0].mxu0 %v5503
    %v5646 = vpop.f32.mrb[0].mxu0
    %v5647 = vadd.f32 %v5525, %v5646
    %v5648 = vpop.f32.mrb[0].mxu0
    %v5649 = vadd.f32 %v5529, %v5648
    %v5650 = vpop.f32.mrb[0].mxu0
    %v5651 = vpop.f32.mrb[0].mxu0
    %5652 = vdwg.mxu0
    %v5653 = vmax.f32 %v5647, 0.0
    %v5654 = vmax.f32 %v5649, 0.0
    %v5655 = vpack.c.bf16 %v5653, %v5653
    %v5656 = vpack.c.bf16 %v5654, %v5654
    %v5657 = vld [vmem:[#allocation16] sm:$0xff]
    %v5658 = vld [vmem:[#allocation16 + $0x8] sm:$0xff]
    %v5659 = vld [vmem:[#allocation16 + $0x10] sm:$0xff]
    %v5660 = vld [vmem:[#allocation16 + $0x18] sm:$0xff]
    %v5661 = vld [vmem:[#allocation16 + $0x20] sm:$0xff]
    %v5662 = vld [vmem:[#allocation16 + $0x28] sm:$0xff]
    %v5663 = vld [vmem:[#allocation16 + $0x30] sm:$0xff]
    %v5664 = vld [vmem:[#allocation16 + $0x38] sm:$0xff]
    %v5665 = vld [vmem:[#allocation16 + $0x40] sm:$0xff]
    %v5666 = vld [vmem:[#allocation16 + $0x48] sm:$0xff]
    %v5667 = vld [vmem:[#allocation16 + $0x50] sm:$0xff]
    %v5668 = vld [vmem:[#allocation16 + $0x58] sm:$0xff]
    %v5669 = vld [vmem:[#allocation16 + $0x60] sm:$0xff]
    %v5670 = vld [vmem:[#allocation16 + $0x68] sm:$0xff]
    %v5671 = vld [vmem:[#allocation16 + $0x70] sm:$0xff]
    %v5672 = vld [vmem:[#allocation16 + $0x78] sm:$0xff]
    %v5673 = vld [vmem:[#allocation16 + $0x80] sm:$0xff]
    %v5674 = vld [vmem:[#allocation16 + $0x88] sm:$0xff]
    %v5675 = vld [vmem:[#allocation16 + $0x90] sm:$0xff]
    %v5676 = vld [vmem:[#allocation16 + $0x98] sm:$0xff]
    %v5677 = vld [vmem:[#allocation16 + $0xa0] sm:$0xff]
    %v5678 = vld [vmem:[#allocation16 + $0xa8] sm:$0xff]
    %v5679 = vld [vmem:[#allocation16 + $0xb0] sm:$0xff]
    %v5680 = vld [vmem:[#allocation16 + $0xb8] sm:$0xff]
    %v5681 = vld [vmem:[#allocation16 + $0xc0] sm:$0xff]
    %v5682 = vld [vmem:[#allocation16 + $0xc8] sm:$0xff]
    %v5683 = vld [vmem:[#allocation16 + $0xd0] sm:$0xff]
    %v5684 = vld [vmem:[#allocation16 + $0xd8] sm:$0xff]
    %v5685 = vld [vmem:[#allocation16 + $0xe0] sm:$0xff]
    %v5686 = vld [vmem:[#allocation16 + $0xe8] sm:$0xff]
    %v5687 = vld [vmem:[#allocation16 + $0xf0] sm:$0xff]
    %v5688 = vld [vmem:[#allocation16 + $0xf8] sm:$0xff]
    %v5689 = vld [vmem:[#allocation16 + $0x100] sm:$0xff]
    %v5690 = vld [vmem:[#allocation16 + $0x108] sm:$0xff]
    %v5691 = vld [vmem:[#allocation16 + $0x110] sm:$0xff]
    %v5692 = vld [vmem:[#allocation16 + $0x118] sm:$0xff]
    %v5693 = vld [vmem:[#allocation16 + $0x120] sm:$0xff]
    %v5694 = vld [vmem:[#allocation16 + $0x128] sm:$0xff]
    %v5695 = vld [vmem:[#allocation16 + $0x130] sm:$0xff]
    %v5696 = vld [vmem:[#allocation16 + $0x138] sm:$0xff]
    %v5697 = vld [vmem:[#allocation16 + $0x140] sm:$0xff]
    %v5698 = vld [vmem:[#allocation16 + $0x148] sm:$0xff]
    %v5699 = vld [vmem:[#allocation16 + $0x150] sm:$0xff]
    %v5700 = vld [vmem:[#allocation16 + $0x158] sm:$0xff]
    %v5701 = vld [vmem:[#allocation16 + $0x160] sm:$0xff]
    %v5702 = vld [vmem:[#allocation16 + $0x168] sm:$0xff]
    %v5703 = vld [vmem:[#allocation16 + $0x170] sm:$0xff]
    %v5704 = vld [vmem:[#allocation16 + $0x178] sm:$0xff]
    %v5705 = vld [vmem:[#allocation16 + $0x180] sm:$0xff]
    %v5706 = vld [vmem:[#allocation16 + $0x188] sm:$0xff]
    %v5707 = vld [vmem:[#allocation16 + $0x190] sm:$0xff]
    %v5708 = vld [vmem:[#allocation16 + $0x198] sm:$0xff]
    %v5709 = vld [vmem:[#allocation16 + $0x1a0] sm:$0xff]
    %v5710 = vld [vmem:[#allocation16 + $0x1a8] sm:$0xff]
    %v5711 = vld [vmem:[#allocation16 + $0x1b0] sm:$0xff]
    %v5712 = vld [vmem:[#allocation16 + $0x1b8] sm:$0xff]
    %v5713 = vld [vmem:[#allocation16 + $0x1c0] sm:$0xff]
    %v5714 = vld [vmem:[#allocation16 + $0x1c8] sm:$0xff]
    %v5715 = vld [vmem:[#allocation16 + $0x1d0] sm:$0xff]
    %v5716 = vld [vmem:[#allocation16 + $0x1d8] sm:$0xff]
    %v5717 = vld [vmem:[#allocation16 + $0x1e0] sm:$0xff]
    %v5718 = vld [vmem:[#allocation16 + $0x1e8] sm:$0xff]
    %v5719 = vld [vmem:[#allocation16 + $0x1f0] sm:$0xff]
    %v5720 = vld [vmem:[#allocation16 + $0x1f8] sm:$0xff]
    %v5721 = vld [vmem:[#allocation16 + $0x200] sm:$0xff]
    %v5722 = vld [vmem:[#allocation16 + $0x208] sm:$0xff]
    %v5723 = vld [vmem:[#allocation16 + $0x210] sm:$0xff]
    %v5724 = vld [vmem:[#allocation16 + $0x218] sm:$0xff]
    %v5725 = vld [vmem:[#allocation16 + $0x220] sm:$0xff]
    %v5726 = vld [vmem:[#allocation16 + $0x228] sm:$0xff]
    %v5727 = vld [vmem:[#allocation16 + $0x230] sm:$0xff]
    %v5728 = vld [vmem:[#allocation16 + $0x238] sm:$0xff]
    %v5729 = vld [vmem:[#allocation16 + $0x240] sm:$0xff]
    %v5730 = vld [vmem:[#allocation16 + $0x248] sm:$0xff]
    %v5731 = vld [vmem:[#allocation16 + $0x250] sm:$0xff]
    %v5732 = vld [vmem:[#allocation16 + $0x258] sm:$0xff]
    %v5733 = vld [vmem:[#allocation16 + $0x260] sm:$0xff]
    %v5734 = vld [vmem:[#allocation16 + $0x268] sm:$0xff]
    %v5735 = vld [vmem:[#allocation16 + $0x270] sm:$0xff]
    %v5736 = vld [vmem:[#allocation16 + $0x278] sm:$0xff]
    %v5737 = vld [vmem:[#allocation16 + $0x280] sm:$0xff]
    %v5738 = vld [vmem:[#allocation16 + $0x288] sm:$0xff]
    %v5739 = vld [vmem:[#allocation16 + $0x290] sm:$0xff]
    %v5740 = vld [vmem:[#allocation16 + $0x298] sm:$0xff]
    %v5741 = vld [vmem:[#allocation16 + $0x2a0] sm:$0xff]
    %v5742 = vld [vmem:[#allocation16 + $0x2a8] sm:$0xff]
    %v5743 = vld [vmem:[#allocation16 + $0x2b0] sm:$0xff]
    %v5744 = vld [vmem:[#allocation16 + $0x2b8] sm:$0xff]
    %v5745 = vld [vmem:[#allocation16 + $0x2c0] sm:$0xff]
    %v5746 = vld [vmem:[#allocation16 + $0x2c8] sm:$0xff]
    %v5747 = vld [vmem:[#allocation16 + $0x2d0] sm:$0xff]
    %v5748 = vld [vmem:[#allocation16 + $0x2d8] sm:$0xff]
    %v5749 = vld [vmem:[#allocation16 + $0x2e0] sm:$0xff]
    %v5750 = vld [vmem:[#allocation16 + $0x2e8] sm:$0xff]
    %v5751 = vld [vmem:[#allocation16 + $0x2f0] sm:$0xff]
    %v5752 = vld [vmem:[#allocation16 + $0x2f8] sm:$0xff]
    %v5753 = vld [vmem:[#allocation16 + $0x300] sm:$0xff]
    %v5754 = vld [vmem:[#allocation16 + $0x308] sm:$0xff]
    %v5755 = vld [vmem:[#allocation16 + $0x310] sm:$0xff]
    %v5756 = vld [vmem:[#allocation16 + $0x318] sm:$0xff]
    %v5757 = vld [vmem:[#allocation16 + $0x320] sm:$0xff]
    %v5758 = vld [vmem:[#allocation16 + $0x328] sm:$0xff]
    %v5759 = vld [vmem:[#allocation16 + $0x330] sm:$0xff]
    %v5760 = vld [vmem:[#allocation16 + $0x338] sm:$0xff]
    %v5761 = vld [vmem:[#allocation16 + $0x340] sm:$0xff]
    %v5762 = vld [vmem:[#allocation16 + $0x348] sm:$0xff]
    %v5763 = vld [vmem:[#allocation16 + $0x350] sm:$0xff]
    %v5764 = vld [vmem:[#allocation16 + $0x358] sm:$0xff]
    %v5765 = vld [vmem:[#allocation16 + $0x360] sm:$0xff]
    %v5766 = vld [vmem:[#allocation16 + $0x368] sm:$0xff]
    %v5767 = vld [vmem:[#allocation16 + $0x370] sm:$0xff]
    %v5768 = vld [vmem:[#allocation16 + $0x378] sm:$0xff]
    %v5769 = vld [vmem:[#allocation16 + $0x380] sm:$0xff]
    %v5770 = vld [vmem:[#allocation16 + $0x388] sm:$0xff]
    %v5771 = vld [vmem:[#allocation16 + $0x390] sm:$0xff]
    %v5772 = vld [vmem:[#allocation16 + $0x398] sm:$0xff]
    %v5773 = vld [vmem:[#allocation16 + $0x3a0] sm:$0xff]
    %v5774 = vld [vmem:[#allocation16 + $0x3a8] sm:$0xff]
    %v5775 = vld [vmem:[#allocation16 + $0x3b0] sm:$0xff]
    %v5776 = vld [vmem:[#allocation16 + $0x3b8] sm:$0xff]
    %v5777 = vld [vmem:[#allocation16 + $0x3c0] sm:$0xff]
    %v5778 = vld [vmem:[#allocation16 + $0x3c8] sm:$0xff]
    %v5779 = vld [vmem:[#allocation16 + $0x3d0] sm:$0xff]
    %v5780 = vld [vmem:[#allocation16 + $0x3d8] sm:$0xff]
    %v5781 = vld [vmem:[#allocation16 + $0x3e0] sm:$0xff]
    %v5782 = vld [vmem:[#allocation16 + $0x3e8] sm:$0xff]
    %v5783 = vld [vmem:[#allocation16 + $0x3f0] sm:$0xff]
    %v5784 = vld [vmem:[#allocation16 + $0x3f8] sm:$0xff]
    %v5785 = vld [vmem:[#allocation17] sm:$0xff]
    %v5787 = vlaneseq
    %v5788 = vshrl.u32 %v5787, 7
    %v5789 = vsub.s32 0, %v5788
    %v5790 = vrot.slane %v5785, %v5789
    %v5791 = vlaneseq
    %v5792 = vshrl.u32 %v5791, 7
    %v5793 = vsub.s32 1, %v5792
    %v5794 = vrot.slane %v5785, %v5793
    %v5795 = vlaneseq
    %v5796 = vshrl.u32 %v5795, 7
    %v5797 = vsub.s32 2, %v5796
    %v5798 = vrot.slane %v5785, %v5797
    %v5799 = vlaneseq
    %v5800 = vshrl.u32 %v5799, 7
    %v5801 = vsub.s32 3, %v5800
    %v5802 = vrot.slane %v5785, %v5801
    %v5803 = vlaneseq
    %v5804 = vshrl.u32 %v5803, 7
    %v5805 = vsub.s32 4, %v5804
    %v5806 = vrot.slane %v5785, %v5805
    %v5807 = vlaneseq
    %v5808 = vshrl.u32 %v5807, 7
    %v5809 = vsub.s32 5, %v5808
    %v5810 = vrot.slane %v5785, %v5809
    %v5811 = vlaneseq
    %v5812 = vshrl.u32 %v5811, 7
    %v5813 = vsub.s32 6, %v5812
    %v5814 = vrot.slane %v5785, %v5813
    %v5815 = vlaneseq
    %v5816 = vshrl.u32 %v5815, 7
    %v5817 = vsub.s32 7, %v5816
    %v5818 = vrot.slane %v5785, %v5817
    %v5955 = vunpack.c.l.b16 %v5657
    %v5956 = vunpack.c.h.b16 %v5657
    %v5957 = vunpack.c.l.b16 %v5658
    %v5958 = vunpack.c.h.b16 %v5658
    %v5959 = vunpack.c.l.b16 %v5659
    %v5960 = vunpack.c.h.b16 %v5659
    %v5961 = vunpack.c.l.b16 %v5660
    %v5962 = vunpack.c.h.b16 %v5660
    %v5963 = vunpack.c.l.b16 %v5661
    %v5964 = vunpack.c.h.b16 %v5661
    %v5965 = vunpack.c.l.b16 %v5662
    %v5966 = vunpack.c.h.b16 %v5662
    %v5967 = vunpack.c.l.b16 %v5663
    %v5968 = vunpack.c.h.b16 %v5663
    %v5969 = vunpack.c.l.b16 %v5664
    %v5970 = vunpack.c.h.b16 %v5664
    %v5971 = vunpack.c.l.b16 %v5665
    %v5972 = vunpack.c.h.b16 %v5665
    %v5973 = vunpack.c.l.b16 %v5666
    %v5974 = vunpack.c.h.b16 %v5666
    %v5975 = vunpack.c.l.b16 %v5667
    %v5976 = vunpack.c.h.b16 %v5667
    %v5977 = vunpack.c.l.b16 %v5668
    %v5978 = vunpack.c.h.b16 %v5668
    %v5979 = vunpack.c.l.b16 %v5669
    %v5980 = vunpack.c.h.b16 %v5669
    %v5981 = vunpack.c.l.b16 %v5670
    %v5982 = vunpack.c.h.b16 %v5670
    %v5983 = vunpack.c.l.b16 %v5671
    %v5984 = vunpack.c.h.b16 %v5671
    %v5985 = vunpack.c.l.b16 %v5672
    %v5986 = vunpack.c.h.b16 %v5672
    %v5987 = vunpack.c.l.b16 %v5673
    %v5988 = vunpack.c.h.b16 %v5673
    %v5989 = vunpack.c.l.b16 %v5674
    %v5990 = vunpack.c.h.b16 %v5674
    %v5991 = vunpack.c.l.b16 %v5675
    %v5992 = vunpack.c.h.b16 %v5675
    %v5993 = vunpack.c.l.b16 %v5676
    %v5994 = vunpack.c.h.b16 %v5676
    %v5995 = vunpack.c.l.b16 %v5677
    %v5996 = vunpack.c.h.b16 %v5677
    %v5997 = vunpack.c.l.b16 %v5678
    %v5998 = vunpack.c.h.b16 %v5678
    %v5999 = vunpack.c.l.b16 %v5679
    %v6000 = vunpack.c.h.b16 %v5679
    %v6001 = vunpack.c.l.b16 %v5680
    %v6002 = vunpack.c.h.b16 %v5680
    %v6003 = vunpack.c.l.b16 %v5681
    %v6004 = vunpack.c.h.b16 %v5681
    %v6005 = vunpack.c.l.b16 %v5682
    %v6006 = vunpack.c.h.b16 %v5682
    %v6007 = vunpack.c.l.b16 %v5683
    %v6008 = vunpack.c.h.b16 %v5683
    %v6009 = vunpack.c.l.b16 %v5684
    %v6010 = vunpack.c.h.b16 %v5684
    %v6011 = vunpack.c.l.b16 %v5685
    %v6012 = vunpack.c.h.b16 %v5685
    %v6013 = vunpack.c.l.b16 %v5686
    %v6014 = vunpack.c.h.b16 %v5686
    %v6015 = vunpack.c.l.b16 %v5687
    %v6016 = vunpack.c.h.b16 %v5687
    %v6017 = vunpack.c.l.b16 %v5688
    %v6018 = vunpack.c.h.b16 %v5688
    %v6019 = vunpack.c.l.b16 %v5689
    %v6020 = vunpack.c.h.b16 %v5689
    %v6021 = vunpack.c.l.b16 %v5690
    %v6022 = vunpack.c.h.b16 %v5690
    %v6023 = vunpack.c.l.b16 %v5691
    %v6024 = vunpack.c.h.b16 %v5691
    %v6025 = vunpack.c.l.b16 %v5692
    %v6026 = vunpack.c.h.b16 %v5692
    %v6027 = vunpack.c.l.b16 %v5693
    %v6028 = vunpack.c.h.b16 %v5693
    %v6029 = vunpack.c.l.b16 %v5694
    %v6030 = vunpack.c.h.b16 %v5694
    %v6031 = vunpack.c.l.b16 %v5695
    %v6032 = vunpack.c.h.b16 %v5695
    %v6033 = vunpack.c.l.b16 %v5696
    %v6034 = vunpack.c.h.b16 %v5696
    %v6035 = vunpack.c.l.b16 %v5697
    %v6036 = vunpack.c.h.b16 %v5697
    %v6037 = vunpack.c.l.b16 %v5698
    %v6038 = vunpack.c.h.b16 %v5698
    %v6039 = vunpack.c.l.b16 %v5699
    %v6040 = vunpack.c.h.b16 %v5699
    %v6041 = vunpack.c.l.b16 %v5700
    %v6042 = vunpack.c.h.b16 %v5700
    %v6043 = vunpack.c.l.b16 %v5701
    %v6044 = vunpack.c.h.b16 %v5701
    %v6045 = vunpack.c.l.b16 %v5702
    %v6046 = vunpack.c.h.b16 %v5702
    %v6047 = vunpack.c.l.b16 %v5703
    %v6048 = vunpack.c.h.b16 %v5703
    %v6049 = vunpack.c.l.b16 %v5704
    %v6050 = vunpack.c.h.b16 %v5704
    %v6051 = vunpack.c.l.b16 %v5705
    %v6052 = vunpack.c.h.b16 %v5705
    %v6053 = vunpack.c.l.b16 %v5706
    %v6054 = vunpack.c.h.b16 %v5706
    %v6055 = vunpack.c.l.b16 %v5707
    %v6056 = vunpack.c.h.b16 %v5707
    %v6057 = vunpack.c.l.b16 %v5708
    %v6058 = vunpack.c.h.b16 %v5708
    %v6059 = vunpack.c.l.b16 %v5709
    %v6060 = vunpack.c.h.b16 %v5709
    %v6061 = vunpack.c.l.b16 %v5710
    %v6062 = vunpack.c.h.b16 %v5710
    %v6063 = vunpack.c.l.b16 %v5711
    %v6064 = vunpack.c.h.b16 %v5711
    %v6065 = vunpack.c.l.b16 %v5712
    %v6066 = vunpack.c.h.b16 %v5712
    %v6067 = vunpack.c.l.b16 %v5713
    %v6068 = vunpack.c.h.b16 %v5713
    %v6069 = vunpack.c.l.b16 %v5714
    %v6070 = vunpack.c.h.b16 %v5714
    %v6071 = vunpack.c.l.b16 %v5715
    %v6072 = vunpack.c.h.b16 %v5715
    %v6073 = vunpack.c.l.b16 %v5716
    %v6074 = vunpack.c.h.b16 %v5716
    %v6075 = vunpack.c.l.b16 %v5717
    %v6076 = vunpack.c.h.b16 %v5717
    %v6077 = vunpack.c.l.b16 %v5718
    %v6078 = vunpack.c.h.b16 %v5718
    %v6079 = vunpack.c.l.b16 %v5719
    %v6080 = vunpack.c.h.b16 %v5719
    %v6081 = vunpack.c.l.b16 %v5720
    %v6082 = vunpack.c.h.b16 %v5720
    %v6083 = vunpack.c.l.b16 %v5721
    %v6084 = vunpack.c.h.b16 %v5721
    %v6085 = vunpack.c.l.b16 %v5722
    %v6086 = vunpack.c.h.b16 %v5722
    %v6087 = vunpack.c.l.b16 %v5723
    %v6088 = vunpack.c.h.b16 %v5723
    %v6089 = vunpack.c.l.b16 %v5724
    %v6090 = vunpack.c.h.b16 %v5724
    %v6091 = vunpack.c.l.b16 %v5725
    %v6092 = vunpack.c.h.b16 %v5725
    %v6093 = vunpack.c.l.b16 %v5726
    %v6094 = vunpack.c.h.b16 %v5726
    %v6095 = vunpack.c.l.b16 %v5727
    %v6096 = vunpack.c.h.b16 %v5727
    %v6097 = vunpack.c.l.b16 %v5728
    %v6098 = vunpack.c.h.b16 %v5728
    %v6099 = vunpack.c.l.b16 %v5729
    %v6100 = vunpack.c.h.b16 %v5729
    %v6101 = vunpack.c.l.b16 %v5730
    %v6102 = vunpack.c.h.b16 %v5730
    %v6103 = vunpack.c.l.b16 %v5731
    %v6104 = vunpack.c.h.b16 %v5731
    %v6105 = vunpack.c.l.b16 %v5732
    %v6106 = vunpack.c.h.b16 %v5732
    %v6107 = vunpack.c.l.b16 %v5733
    %v6108 = vunpack.c.h.b16 %v5733
    %v6109 = vunpack.c.l.b16 %v5734
    %v6110 = vunpack.c.h.b16 %v5734
    %v6111 = vunpack.c.l.b16 %v5735
    %v6112 = vunpack.c.h.b16 %v5735
    %v6113 = vunpack.c.l.b16 %v5736
    %v6114 = vunpack.c.h.b16 %v5736
    %v6115 = vunpack.c.l.b16 %v5737
    %v6116 = vunpack.c.h.b16 %v5737
    %v6117 = vunpack.c.l.b16 %v5738
    %v6118 = vunpack.c.h.b16 %v5738
    %v6119 = vunpack.c.l.b16 %v5739
    %v6120 = vunpack.c.h.b16 %v5739
    %v6121 = vunpack.c.l.b16 %v5740
    %v6122 = vunpack.c.h.b16 %v5740
    %v6123 = vunpack.c.l.b16 %v5741
    %v6124 = vunpack.c.h.b16 %v5741
    %v6125 = vunpack.c.l.b16 %v5742
    %v6126 = vunpack.c.h.b16 %v5742
    %v6127 = vunpack.c.l.b16 %v5743
    %v6128 = vunpack.c.h.b16 %v5743
    %v6129 = vunpack.c.l.b16 %v5744
    %v6130 = vunpack.c.h.b16 %v5744
    %v6131 = vunpack.c.l.b16 %v5745
    %v6132 = vunpack.c.h.b16 %v5745
    %v6133 = vunpack.c.l.b16 %v5746
    %v6134 = vunpack.c.h.b16 %v5746
    %v6135 = vunpack.c.l.b16 %v5747
    %v6136 = vunpack.c.h.b16 %v5747
    %v6137 = vunpack.c.l.b16 %v5748
    %v6138 = vunpack.c.h.b16 %v5748
    %v6139 = vunpack.c.l.b16 %v5749
    %v6140 = vunpack.c.h.b16 %v5749
    %v6141 = vunpack.c.l.b16 %v5750
    %v6142 = vunpack.c.h.b16 %v5750
    %v6143 = vunpack.c.l.b16 %v5751
    %v6144 = vunpack.c.h.b16 %v5751
    %v6145 = vunpack.c.l.b16 %v5752
    %v6146 = vunpack.c.h.b16 %v5752
    %v6147 = vunpack.c.l.b16 %v5753
    %v6148 = vunpack.c.h.b16 %v5753
    %v6149 = vunpack.c.l.b16 %v5754
    %v6150 = vunpack.c.h.b16 %v5754
    %v6151 = vunpack.c.l.b16 %v5755
    %v6152 = vunpack.c.h.b16 %v5755
    %v6153 = vunpack.c.l.b16 %v5756
    %v6154 = vunpack.c.h.b16 %v5756
    %v6155 = vunpack.c.l.b16 %v5757
    %v6156 = vunpack.c.h.b16 %v5757
    %v6157 = vunpack.c.l.b16 %v5758
    %v6158 = vunpack.c.h.b16 %v5758
    %v6159 = vunpack.c.l.b16 %v5759
    %v6160 = vunpack.c.h.b16 %v5759
    %v6161 = vunpack.c.l.b16 %v5760
    %v6162 = vunpack.c.h.b16 %v5760
    %v6163 = vunpack.c.l.b16 %v5761
    %v6164 = vunpack.c.h.b16 %v5761
    %v6165 = vunpack.c.l.b16 %v5762
    %v6166 = vunpack.c.h.b16 %v5762
    %v6167 = vunpack.c.l.b16 %v5763
    %v6168 = vunpack.c.h.b16 %v5763
    %v6169 = vunpack.c.l.b16 %v5764
    %v6170 = vunpack.c.h.b16 %v5764
    %v6171 = vunpack.c.l.b16 %v5765
    %v6172 = vunpack.c.h.b16 %v5765
    %v6173 = vunpack.c.l.b16 %v5766
    %v6174 = vunpack.c.h.b16 %v5766
    %v6175 = vunpack.c.l.b16 %v5767
    %v6176 = vunpack.c.h.b16 %v5767
    %v6177 = vunpack.c.l.b16 %v5768
    %v6178 = vunpack.c.h.b16 %v5768
    %v6179 = vunpack.c.l.b16 %v5769
    %v6180 = vunpack.c.h.b16 %v5769
    %v6181 = vunpack.c.l.b16 %v5770
    %v6182 = vunpack.c.h.b16 %v5770
    %v6183 = vunpack.c.l.b16 %v5771
    %v6184 = vunpack.c.h.b16 %v5771
    %v6185 = vunpack.c.l.b16 %v5772
    %v6186 = vunpack.c.h.b16 %v5772
    %v6187 = vunpack.c.l.b16 %v5773
    %v6188 = vunpack.c.h.b16 %v5773
    %v6189 = vunpack.c.l.b16 %v5774
    %v6190 = vunpack.c.h.b16 %v5774
    %v6191 = vunpack.c.l.b16 %v5775
    %v6192 = vunpack.c.h.b16 %v5775
    %v6193 = vunpack.c.l.b16 %v5776
    %v6194 = vunpack.c.h.b16 %v5776
    %v6195 = vunpack.c.l.b16 %v5777
    %v6196 = vunpack.c.h.b16 %v5777
    %v6197 = vunpack.c.l.b16 %v5778
    %v6198 = vunpack.c.h.b16 %v5778
    %v6199 = vunpack.c.l.b16 %v5779
    %v6200 = vunpack.c.h.b16 %v5779
    %v6201 = vunpack.c.l.b16 %v5780
    %v6202 = vunpack.c.h.b16 %v5780
    %v6203 = vunpack.c.l.b16 %v5781
    %v6204 = vunpack.c.h.b16 %v5781
    %v6205 = vunpack.c.l.b16 %v5782
    %v6206 = vunpack.c.h.b16 %v5782
    %v6207 = vunpack.c.l.b16 %v5783
    %v6208 = vunpack.c.h.b16 %v5783
    %v6209 = vunpack.c.l.b16 %v5784
    %v6210 = vunpack.c.h.b16 %v5784
    %v6211 = vpack.c.b16 %v5963, %v5955
    %v6212 = vpack.c.b16 %v5964, %v5956
    %v6213 = vpack.c.b16 %v5965, %v5957
    %v6214 = vpack.c.b16 %v5966, %v5958
    %v6215 = vpack.c.b16 %v5967, %v5959
    %v6216 = vpack.c.b16 %v5968, %v5960
    %v6217 = vpack.c.b16 %v5969, %v5961
    %v6218 = vpack.c.b16 %v5970, %v5962
    %v6219 = vpack.c.b16 %v5979, %v5971
    %v6220 = vpack.c.b16 %v5980, %v5972
    %v6221 = vpack.c.b16 %v5981, %v5973
    %v6222 = vpack.c.b16 %v5982, %v5974
    %v6223 = vpack.c.b16 %v5983, %v5975
    %v6224 = vpack.c.b16 %v5984, %v5976
    %v6225 = vpack.c.b16 %v5985, %v5977
    %v6226 = vpack.c.b16 %v5986, %v5978
    %v6227 = vpack.c.b16 %v5995, %v5987
    %v6228 = vpack.c.b16 %v5996, %v5988
    %v6229 = vpack.c.b16 %v5997, %v5989
    %v6230 = vpack.c.b16 %v5998, %v5990
    %v6231 = vpack.c.b16 %v5999, %v5991
    %v6232 = vpack.c.b16 %v6000, %v5992
    %v6233 = vpack.c.b16 %v6001, %v5993
    %v6234 = vpack.c.b16 %v6002, %v5994
    %v6235 = vpack.c.b16 %v6011, %v6003
    %v6236 = vpack.c.b16 %v6012, %v6004
    %v6237 = vpack.c.b16 %v6013, %v6005
    %v6238 = vpack.c.b16 %v6014, %v6006
    %v6239 = vpack.c.b16 %v6015, %v6007
    %v6240 = vpack.c.b16 %v6016, %v6008
    %v6241 = vpack.c.b16 %v6017, %v6009
    %v6242 = vpack.c.b16 %v6018, %v6010
    %v6243 = vpack.c.b16 %v6027, %v6019
    %v6244 = vpack.c.b16 %v6028, %v6020
    %v6245 = vpack.c.b16 %v6029, %v6021
    %v6246 = vpack.c.b16 %v6030, %v6022
    %v6247 = vpack.c.b16 %v6031, %v6023
    %v6248 = vpack.c.b16 %v6032, %v6024
    %v6249 = vpack.c.b16 %v6033, %v6025
    %v6250 = vpack.c.b16 %v6034, %v6026
    %v6251 = vpack.c.b16 %v6043, %v6035
    %v6252 = vpack.c.b16 %v6044, %v6036
    %v6253 = vpack.c.b16 %v6045, %v6037
    %v6254 = vpack.c.b16 %v6046, %v6038
    %v6255 = vpack.c.b16 %v6047, %v6039
    %v6256 = vpack.c.b16 %v6048, %v6040
    %v6257 = vpack.c.b16 %v6049, %v6041
    %v6258 = vpack.c.b16 %v6050, %v6042
    %v6259 = vpack.c.b16 %v6059, %v6051
    %v6260 = vpack.c.b16 %v6060, %v6052
    %v6261 = vpack.c.b16 %v6061, %v6053
    %v6262 = vpack.c.b16 %v6062, %v6054
    %v6263 = vpack.c.b16 %v6063, %v6055
    %v6264 = vpack.c.b16 %v6064, %v6056
    %v6265 = vpack.c.b16 %v6065, %v6057
    %v6266 = vpack.c.b16 %v6066, %v6058
    %v6267 = vpack.c.b16 %v6075, %v6067
    %v6268 = vpack.c.b16 %v6076, %v6068
    %v6269 = vpack.c.b16 %v6077, %v6069
    %v6270 = vpack.c.b16 %v6078, %v6070
    %v6271 = vpack.c.b16 %v6079, %v6071
    %v6272 = vpack.c.b16 %v6080, %v6072
    %v6273 = vpack.c.b16 %v6081, %v6073
    %v6274 = vpack.c.b16 %v6082, %v6074
    %v6275 = vpack.c.b16 %v6091, %v6083
    %v6276 = vpack.c.b16 %v6092, %v6084
    %v6277 = vpack.c.b16 %v6093, %v6085
    %v6278 = vpack.c.b16 %v6094, %v6086
    %v6279 = vpack.c.b16 %v6095, %v6087
    %v6280 = vpack.c.b16 %v6096, %v6088
    %v6281 = vpack.c.b16 %v6097, %v6089
    %v6282 = vpack.c.b16 %v6098, %v6090
    %v6283 = vpack.c.b16 %v6107, %v6099
    %v6284 = vpack.c.b16 %v6108, %v6100
    %v6285 = vpack.c.b16 %v6109, %v6101
    %v6286 = vpack.c.b16 %v6110, %v6102
    %v6287 = vpack.c.b16 %v6111, %v6103
    %v6288 = vpack.c.b16 %v6112, %v6104
    %v6289 = vpack.c.b16 %v6113, %v6105
    %v6290 = vpack.c.b16 %v6114, %v6106
    %v6291 = vpack.c.b16 %v6123, %v6115
    %v6292 = vpack.c.b16 %v6124, %v6116
    %v6293 = vpack.c.b16 %v6125, %v6117
    %v6294 = vpack.c.b16 %v6126, %v6118
    %v6295 = vpack.c.b16 %v6127, %v6119
    %v6296 = vpack.c.b16 %v6128, %v6120
    %v6297 = vpack.c.b16 %v6129, %v6121
    %v6298 = vpack.c.b16 %v6130, %v6122
    %v6299 = vpack.c.b16 %v6139, %v6131
    %v6300 = vpack.c.b16 %v6140, %v6132
    %v6301 = vpack.c.b16 %v6141, %v6133
    %v6302 = vpack.c.b16 %v6142, %v6134
    %v6303 = vpack.c.b16 %v6143, %v6135
    %v6304 = vpack.c.b16 %v6144, %v6136
    %v6305 = vpack.c.b16 %v6145, %v6137
    %v6306 = vpack.c.b16 %v6146, %v6138
    %v6307 = vpack.c.b16 %v6155, %v6147
    %v6308 = vpack.c.b16 %v6156, %v6148
    %v6309 = vpack.c.b16 %v6157, %v6149
    %v6310 = vpack.c.b16 %v6158, %v6150
    %v6311 = vpack.c.b16 %v6159, %v6151
    %v6312 = vpack.c.b16 %v6160, %v6152
    %v6313 = vpack.c.b16 %v6161, %v6153
    %v6314 = vpack.c.b16 %v6162, %v6154
    %v6315 = vpack.c.b16 %v6171, %v6163
    %v6316 = vpack.c.b16 %v6172, %v6164
    %v6317 = vpack.c.b16 %v6173, %v6165
    %v6318 = vpack.c.b16 %v6174, %v6166
    %v6319 = vpack.c.b16 %v6175, %v6167
    %v6320 = vpack.c.b16 %v6176, %v6168
    %v6321 = vpack.c.b16 %v6177, %v6169
    %v6322 = vpack.c.b16 %v6178, %v6170
    %v6323 = vpack.c.b16 %v6187, %v6179
    %v6324 = vpack.c.b16 %v6188, %v6180
    %v6325 = vpack.c.b16 %v6189, %v6181
    %v6326 = vpack.c.b16 %v6190, %v6182
    %v6327 = vpack.c.b16 %v6191, %v6183
    %v6328 = vpack.c.b16 %v6192, %v6184
    %v6329 = vpack.c.b16 %v6193, %v6185
    %v6330 = vpack.c.b16 %v6194, %v6186
    %v6331 = vpack.c.b16 %v6203, %v6195
    %v6332 = vpack.c.b16 %v6204, %v6196
    %v6333 = vpack.c.b16 %v6205, %v6197
    %v6334 = vpack.c.b16 %v6206, %v6198
    %v6335 = vpack.c.b16 %v6207, %v6199
    %v6336 = vpack.c.b16 %v6208, %v6200
    %v6337 = vpack.c.b16 %v6209, %v6201
    %v6338 = vpack.c.b16 %v6210, %v6202
    %6467 = vmatprep.subr.bf16.mxu0 %v6212
    %6468 = vmatpush1.bf16.msra.mxu0 %v6211
    %6469 = vmatprep.subr.bf16.mxu0 %v6220
    %6470 = vmatpush1.bf16.msra.mxu0 %v6219
    %6471 = vmatprep.subr.bf16.mxu0 %v6228
    %6472 = vmatpush1.bf16.msra.mxu0 %v6227
    %6473 = vmatprep.subr.bf16.mxu0 %v6236
    %6474 = vmatpush1.bf16.msra.mxu0 %v6235
    %6475 = vmatprep.subr.bf16.mxu0 %v6244
    %6476 = vmatpush1.bf16.msra.mxu0 %v6243
    %6477 = vmatprep.subr.bf16.mxu0 %v6252
    %6478 = vmatpush1.bf16.msra.mxu0 %v6251
    %6479 = vmatprep.subr.bf16.mxu0 %v6260
    %6480 = vmatpush1.bf16.msra.mxu0 %v6259
    %6481 = vmatprep.subr.bf16.mxu0 %v6268
    %6482 = vmatpush1.bf16.msra.mxu0 %v6267
    %6483 = vmatprep.subr.bf16.mxu0 %v6276
    %6484 = vmatpush1.bf16.msra.mxu0 %v6275
    %6485 = vmatprep.subr.bf16.mxu0 %v6284
    %6486 = vmatpush1.bf16.msra.mxu0 %v6283
    %6487 = vmatprep.subr.bf16.mxu0 %v6292
    %6488 = vmatpush1.bf16.msra.mxu0 %v6291
    %6489 = vmatprep.subr.bf16.mxu0 %v6300
    %6490 = vmatpush1.bf16.msra.mxu0 %v6299
    %6491 = vmatprep.subr.bf16.mxu0 %v6308
    %6492 = vmatpush1.bf16.msra.mxu0 %v6307
    %6493 = vmatprep.subr.bf16.mxu0 %v6316
    %6494 = vmatpush1.bf16.msra.mxu0 %v6315
    %6495 = vmatprep.subr.bf16.mxu0 %v6324
    %6496 = vmatpush1.bf16.msra.mxu0 %v6323
    %6497 = vmatprep.subr.bf16.mxu0 %v6332
    %6498 = vmatpush1.bf16.msra.mxu0 %v6331
    %6499 = vmatprep.mubr.bf16.mxu0 %v5656
    %6500 = vmatmul.mubr.bf16.gmra.mrb[0].mxu0 %v5655
    %v6501 = vpop.f32.mrb[0].mxu0
    %v6502 = vadd.f32 %v5790, %v6501
    %v6503 = vpop.f32.mrb[0].mxu0
    %v6504 = vadd.f32 %v5794, %v6503
    %v6505 = vpop.f32.mrb[0].mxu0
    %v6506 = vpop.f32.mrb[0].mxu0
    %6507 = vdwg.mxu0
    %6508 = vmatprep.subr.bf16.mxu0 %v6214
    %6509 = vmatpush1.bf16.msra.mxu0 %v6213
    %6510 = vmatprep.subr.bf16.mxu0 %v6222
    %6511 = vmatpush1.bf16.msra.mxu0 %v6221
    %6512 = vmatprep.subr.bf16.mxu0 %v6230
    %6513 = vmatpush1.bf16.msra.mxu0 %v6229
    %6514 = vmatprep.subr.bf16.mxu0 %v6238
    %6515 = vmatpush1.bf16.msra.mxu0 %v6237
    %6516 = vmatprep.subr.bf16.mxu0 %v6246
    %6517 = vmatpush1.bf16.msra.mxu0 %v6245
    %6518 = vmatprep.subr.bf16.mxu0 %v6254
    %6519 = vmatpush1.bf16.msra.mxu0 %v6253
    %6520 = vmatprep.subr.bf16.mxu0 %v6262
    %6521 = vmatpush1.bf16.msra.mxu0 %v6261
    %6522 = vmatprep.subr.bf16.mxu0 %v6270
    %6523 = vmatpush1.bf16.msra.mxu0 %v6269
    %6524 = vmatprep.subr.bf16.mxu0 %v6278
    %6525 = vmatpush1.bf16.msra.mxu0 %v6277
    %6526 = vmatprep.subr.bf16.mxu0 %v6286
    %6527 = vmatpush1.bf16.msra.mxu0 %v6285
    %6528 = vmatprep.subr.bf16.mxu0 %v6294
    %6529 = vmatpush1.bf16.msra.mxu0 %v6293
    %6530 = vmatprep.subr.bf16.mxu0 %v6302
    %6531 = vmatpush1.bf16.msra.mxu0 %v6301
    %6532 = vmatprep.subr.bf16.mxu0 %v6310
    %6533 = vmatpush1.bf16.msra.mxu0 %v6309
    %6534 = vmatprep.subr.bf16.mxu0 %v6318
    %6535 = vmatpush1.bf16.msra.mxu0 %v6317
    %6536 = vmatprep.subr.bf16.mxu0 %v6326
    %6537 = vmatpush1.bf16.msra.mxu0 %v6325
    %6538 = vmatprep.subr.bf16.mxu0 %v6334
    %6539 = vmatpush1.bf16.msra.mxu0 %v6333
    %6540 = vmatprep.mubr.bf16.mxu0 %v5656
    %6541 = vmatmul.mubr.bf16.gmra.mrb[0].mxu0 %v5655
    %v6542 = vpop.f32.mrb[0].mxu0
    %v6543 = vadd.f32 %v5798, %v6542
    %v6544 = vpop.f32.mrb[0].mxu0
    %v6545 = vadd.f32 %v5802, %v6544
    %v6546 = vpop.f32.mrb[0].mxu0
    %v6547 = vpop.f32.mrb[0].mxu0
    %6548 = vdwg.mxu0
    %6549 = vmatprep.subr.bf16.mxu0 %v6216
    %6550 = vmatpush1.bf16.msra.mxu0 %v6215
    %6551 = vmatprep.subr.bf16.mxu0 %v6224
    %6552 = vmatpush1.bf16.msra.mxu0 %v6223
    %6553 = vmatprep.subr.bf16.mxu0 %v6232
    %6554 = vmatpush1.bf16.msra.mxu0 %v6231
    %6555 = vmatprep.subr.bf16.mxu0 %v6240
    %6556 = vmatpush1.bf16.msra.mxu0 %v6239
    %6557 = vmatprep.subr.bf16.mxu0 %v6248
    %6558 = vmatpush1.bf16.msra.mxu0 %v6247
    %6559 = vmatprep.subr.bf16.mxu0 %v6256
    %6560 = vmatpush1.bf16.msra.mxu0 %v6255
    %6561 = vmatprep.subr.bf16.mxu0 %v6264
    %6562 = vmatpush1.bf16.msra.mxu0 %v6263
    %6563 = vmatprep.subr.bf16.mxu0 %v6272
    %6564 = vmatpush1.bf16.msra.mxu0 %v6271
    %6565 = vmatprep.subr.bf16.mxu0 %v6280
    %6566 = vmatpush1.bf16.msra.mxu0 %v6279
    %6567 = vmatprep.subr.bf16.mxu0 %v6288
    %6568 = vmatpush1.bf16.msra.mxu0 %v6287
    %6569 = vmatprep.subr.bf16.mxu0 %v6296
    %6570 = vmatpush1.bf16.msra.mxu0 %v6295
    %6571 = vmatprep.subr.bf16.mxu0 %v6304
    %6572 = vmatpush1.bf16.msra.mxu0 %v6303
    %6573 = vmatprep.subr.bf16.mxu0 %v6312
    %6574 = vmatpush1.bf16.msra.mxu0 %v6311
    %6575 = vmatprep.subr.bf16.mxu0 %v6320
    %6576 = vmatpush1.bf16.msra.mxu0 %v6319
    %6577 = vmatprep.subr.bf16.mxu0 %v6328
    %6578 = vmatpush1.bf16.msra.mxu0 %v6327
    %6579 = vmatprep.subr.bf16.mxu0 %v6336
    %6580 = vmatpush1.bf16.msra.mxu0 %v6335
    %6581 = vmatprep.mubr.bf16.mxu0 %v5656
    %6582 = vmatmul.mubr.bf16.gmra.mrb[0].mxu0 %v5655
    %v6583 = vpop.f32.mrb[0].mxu0
    %v6584 = vadd.f32 %v5806, %v6583
    %v6585 = vpop.f32.mrb[0].mxu0
    %v6586 = vadd.f32 %v5810, %v6585
    %v6587 = vpop.f32.mrb[0].mxu0
    %v6588 = vpop.f32.mrb[0].mxu0
    %6589 = vdwg.mxu0
    %6590 = vmatprep.subr.bf16.mxu0 %v6218
    %6591 = vmatpush1.bf16.msra.mxu0 %v6217
    %6592 = vmatprep.subr.bf16.mxu0 %v6226
    %6593 = vmatpush1.bf16.msra.mxu0 %v6225
    %6594 = vmatprep.subr.bf16.mxu0 %v6234
    %6595 = vmatpush1.bf16.msra.mxu0 %v6233
    %6596 = vmatprep.subr.bf16.mxu0 %v6242
    %6597 = vmatpush1.bf16.msra.mxu0 %v6241
    %6598 = vmatprep.subr.bf16.mxu0 %v6250
    %6599 = vmatpush1.bf16.msra.mxu0 %v6249
    %6600 = vmatprep.subr.bf16.mxu0 %v6258
    %6601 = vmatpush1.bf16.msra.mxu0 %v6257
    %6602 = vmatprep.subr.bf16.mxu0 %v6266
    %6603 = vmatpush1.bf16.msra.mxu0 %v6265
    %6604 = vmatprep.subr.bf16.mxu0 %v6274
    %6605 = vmatpush1.bf16.msra.mxu0 %v6273
    %6606 = vmatprep.subr.bf16.mxu0 %v6282
    %6607 = vmatpush1.bf16.msra.mxu0 %v6281
    %6608 = vmatprep.subr.bf16.mxu0 %v6290
    %6609 = vmatpush1.bf16.msra.mxu0 %v6289
    %6610 = vmatprep.subr.bf16.mxu0 %v6298
    %6611 = vmatpush1.bf16.msra.mxu0 %v6297
    %6612 = vmatprep.subr.bf16.mxu0 %v6306
    %6613 = vmatpush1.bf16.msra.mxu0 %v6305
    %6614 = vmatprep.subr.bf16.mxu0 %v6314
    %6615 = vmatpush1.bf16.msra.mxu0 %v6313
    %6616 = vmatprep.subr.bf16.mxu0 %v6322
    %6617 = vmatpush1.bf16.msra.mxu0 %v6321
    %6618 = vmatprep.subr.bf16.mxu0 %v6330
    %6619 = vmatpush1.bf16.msra.mxu0 %v6329
    %6620 = vmatprep.subr.bf16.mxu0 %v6338
    %6621 = vmatpush1.bf16.msra.mxu0 %v6337
    %6622 = vmatprep.mubr.bf16.mxu0 %v5656
    %6623 = vmatmul.mubr.bf16.gmra.mrb[0].mxu0 %v5655
    %v6624 = vpop.f32.mrb[0].mxu0
    %v6625 = vadd.f32 %v5814, %v6624
    %v6626 = vpop.f32.mrb[0].mxu0
    %v6627 = vadd.f32 %v5818, %v6626
    %v6628 = vpop.f32.mrb[0].mxu0
    %v6629 = vpop.f32.mrb[0].mxu0
    %6630 = vdwg.mxu0
    %v6631 = vmax.f32 %v6502, 0.0
    %v6632 = vmax.f32 %v6504, 0.0
    %v6633 = vmax.f32 %v6543, 0.0
    %v6634 = vmax.f32 %v6545, 0.0
    %v6635 = vmax.f32 %v6584, 0.0
    %v6636 = vmax.f32 %v6586, 0.0
    %v6637 = vmax.f32 %v6625, 0.0
    %v6638 = vmax.f32 %v6627, 0.0
    %v6639 = vpack.c.bf16 %v6631, %v6631
    %v6640 = vpack.c.bf16 %v6632, %v6632
    %v6641 = vpack.c.bf16 %v6633, %v6633
    %v6642 = vpack.c.bf16 %v6634, %v6634
    %v6643 = vpack.c.bf16 %v6635, %v6635
    %v6644 = vpack.c.bf16 %v6636, %v6636
    %v6645 = vpack.c.bf16 %v6637, %v6637
    %v6646 = vpack.c.bf16 %v6638, %v6638
    %v6647 = vld [vmem:[%s11] sm:$0xf]
    %v6648 = vld [vmem:[%s11 + $0x4] sm:$0xf]
    %v6649 = vld [vmem:[%s11 + $0x8] sm:$0xf]
    %v6650 = vld [vmem:[%s11 + $0xc] sm:$0xf]
    %v6651 = vld [vmem:[%s11 + $0x10] sm:$0xf]
    %v6652 = vld [vmem:[%s11 + $0x14] sm:$0xf]
    %v6653 = vld [vmem:[%s11 + $0x18] sm:$0xf]
    %v6654 = vld [vmem:[%s11 + $0x1c] sm:$0xf]
    %v6655 = vld [vmem:[%s11 + $0x20] sm:$0xf]
    %v6656 = vld [vmem:[%s11 + $0x24] sm:$0xf]
    %v6657 = vld [vmem:[%s11 + $0x28] sm:$0xf]
    %v6658 = vld [vmem:[%s11 + $0x2c] sm:$0xf]
    %v6659 = vld [vmem:[%s11 + $0x30] sm:$0xf]
    %v6660 = vld [vmem:[%s11 + $0x34] sm:$0xf]
    %v6661 = vld [vmem:[%s11 + $0x38] sm:$0xf]
    %v6662 = vld [vmem:[%s11 + $0x3c] sm:$0xf]
    %v6663 = vld [vmem:[%s11 + $0x40] sm:$0xf]
    %v6664 = vld [vmem:[%s11 + $0x44] sm:$0xf]
    %v6665 = vld [vmem:[%s11 + $0x48] sm:$0xf]
    %v6666 = vld [vmem:[%s11 + $0x4c] sm:$0xf]
    %v6667 = vld [vmem:[%s11 + $0x50] sm:$0xf]
    %v6668 = vld [vmem:[%s11 + $0x54] sm:$0xf]
    %v6669 = vld [vmem:[%s11 + $0x58] sm:$0xf]
    %v6670 = vld [vmem:[%s11 + $0x5c] sm:$0xf]
    %v6671 = vld [vmem:[%s11 + $0x60] sm:$0xf]
    %v6672 = vld [vmem:[%s11 + $0x64] sm:$0xf]
    %v6673 = vld [vmem:[%s11 + $0x68] sm:$0xf]
    %v6674 = vld [vmem:[%s11 + $0x6c] sm:$0xf]
    %v6675 = vld [vmem:[%s11 + $0x70] sm:$0xf]
    %v6676 = vld [vmem:[%s11 + $0x74] sm:$0xf]
    %v6677 = vld [vmem:[%s11 + $0x78] sm:$0xf]
    %v6678 = vld [vmem:[%s11 + $0x7c] sm:$0xf]
    %v6679 = vld [vmem:[%s11 + $0x80] sm:$0xf]
    %v6680 = vld [vmem:[%s11 + $0x84] sm:$0xf]
    %v6681 = vld [vmem:[%s11 + $0x88] sm:$0xf]
    %v6682 = vld [vmem:[%s11 + $0x8c] sm:$0xf]
    %v6683 = vld [vmem:[%s11 + $0x90] sm:$0xf]
    %v6684 = vld [vmem:[%s11 + $0x94] sm:$0xf]
    %v6685 = vld [vmem:[%s11 + $0x98] sm:$0xf]
    %v6686 = vld [vmem:[%s11 + $0x9c] sm:$0xf]
    %v6687 = vld [vmem:[%s11 + $0xa0] sm:$0xf]
    %v6688 = vld [vmem:[%s11 + $0xa4] sm:$0xf]
    %v6689 = vld [vmem:[%s11 + $0xa8] sm:$0xf]
    %v6690 = vld [vmem:[%s11 + $0xac] sm:$0xf]
    %v6691 = vld [vmem:[%s11 + $0xb0] sm:$0xf]
    %v6692 = vld [vmem:[%s11 + $0xb4] sm:$0xf]
    %v6693 = vld [vmem:[%s11 + $0xb8] sm:$0xf]
    %v6694 = vld [vmem:[%s11 + $0xbc] sm:$0xf]
    %v6695 = vld [vmem:[%s11 + $0xc0] sm:$0xf]
    %v6696 = vld [vmem:[%s11 + $0xc4] sm:$0xf]
    %v6697 = vld [vmem:[%s11 + $0xc8] sm:$0xf]
    %v6698 = vld [vmem:[%s11 + $0xcc] sm:$0xf]
    %v6699 = vld [vmem:[%s11 + $0xd0] sm:$0xf]
    %v6700 = vld [vmem:[%s11 + $0xd4] sm:$0xf]
    %v6701 = vld [vmem:[%s11 + $0xd8] sm:$0xf]
    %v6702 = vld [vmem:[%s11 + $0xdc] sm:$0xf]
    %v6703 = vld [vmem:[%s11 + $0xe0] sm:$0xf]
    %v6704 = vld [vmem:[%s11 + $0xe4] sm:$0xf]
    %v6705 = vld [vmem:[%s11 + $0xe8] sm:$0xf]
    %v6706 = vld [vmem:[%s11 + $0xec] sm:$0xf]
    %v6707 = vld [vmem:[%s11 + $0xf0] sm:$0xf]
    %v6708 = vld [vmem:[%s11 + $0xf4] sm:$0xf]
    %v6709 = vld [vmem:[%s11 + $0xf8] sm:$0xf]
    %v6710 = vld [vmem:[%s11 + $0xfc] sm:$0xf]
    %v6711 = vld [vmem:[%s11 + $0x100] sm:$0xf]
    %v6712 = vld [vmem:[%s11 + $0x104] sm:$0xf]
    %v6713 = vld [vmem:[%s11 + $0x108] sm:$0xf]
    %v6714 = vld [vmem:[%s11 + $0x10c] sm:$0xf]
    %v6715 = vld [vmem:[%s11 + $0x110] sm:$0xf]
    %v6716 = vld [vmem:[%s11 + $0x114] sm:$0xf]
    %v6717 = vld [vmem:[%s11 + $0x118] sm:$0xf]
    %v6718 = vld [vmem:[%s11 + $0x11c] sm:$0xf]
    %v6719 = vld [vmem:[%s11 + $0x120] sm:$0xf]
    %v6720 = vld [vmem:[%s11 + $0x124] sm:$0xf]
    %v6721 = vld [vmem:[%s11 + $0x128] sm:$0xf]
    %v6722 = vld [vmem:[%s11 + $0x12c] sm:$0xf]
    %v6723 = vld [vmem:[%s11 + $0x130] sm:$0xf]
    %v6724 = vld [vmem:[%s11 + $0x134] sm:$0xf]
    %v6725 = vld [vmem:[%s11 + $0x138] sm:$0xf]
    %v6726 = vld [vmem:[%s11 + $0x13c] sm:$0xf]
    %v6727 = vld [vmem:[%s11 + $0x140] sm:$0xf]
    %v6728 = vld [vmem:[%s11 + $0x144] sm:$0xf]
    %v6729 = vld [vmem:[%s11 + $0x148] sm:$0xf]
    %v6730 = vld [vmem:[%s11 + $0x14c] sm:$0xf]
    %v6731 = vld [vmem:[%s11 + $0x150] sm:$0xf]
    %v6732 = vld [vmem:[%s11 + $0x154] sm:$0xf]
    %v6733 = vld [vmem:[%s11 + $0x158] sm:$0xf]
    %v6734 = vld [vmem:[%s11 + $0x15c] sm:$0xf]
    %v6735 = vld [vmem:[%s11 + $0x160] sm:$0xf]
    %v6736 = vld [vmem:[%s11 + $0x164] sm:$0xf]
    %v6737 = vld [vmem:[%s11 + $0x168] sm:$0xf]
    %v6738 = vld [vmem:[%s11 + $0x16c] sm:$0xf]
    %v6739 = vld [vmem:[%s11 + $0x170] sm:$0xf]
    %v6740 = vld [vmem:[%s11 + $0x174] sm:$0xf]
    %v6741 = vld [vmem:[%s11 + $0x178] sm:$0xf]
    %v6742 = vld [vmem:[%s11 + $0x17c] sm:$0xf]
    %v6743 = vld [vmem:[%s11 + $0x180] sm:$0xf]
    %v6744 = vld [vmem:[%s11 + $0x184] sm:$0xf]
    %v6745 = vld [vmem:[%s11 + $0x188] sm:$0xf]
    %v6746 = vld [vmem:[%s11 + $0x18c] sm:$0xf]
    %v6747 = vld [vmem:[%s11 + $0x190] sm:$0xf]
    %v6748 = vld [vmem:[%s11 + $0x194] sm:$0xf]
    %v6749 = vld [vmem:[%s11 + $0x198] sm:$0xf]
    %v6750 = vld [vmem:[%s11 + $0x19c] sm:$0xf]
    %v6751 = vld [vmem:[%s11 + $0x1a0] sm:$0xf]
    %v6752 = vld [vmem:[%s11 + $0x1a4] sm:$0xf]
    %v6753 = vld [vmem:[%s11 + $0x1a8] sm:$0xf]
    %v6754 = vld [vmem:[%s11 + $0x1ac] sm:$0xf]
    %v6755 = vld [vmem:[%s11 + $0x1b0] sm:$0xf]
    %v6756 = vld [vmem:[%s11 + $0x1b4] sm:$0xf]
    %v6757 = vld [vmem:[%s11 + $0x1b8] sm:$0xf]
    %v6758 = vld [vmem:[%s11 + $0x1bc] sm:$0xf]
    %v6759 = vld [vmem:[%s11 + $0x1c0] sm:$0xf]
    %v6760 = vld [vmem:[%s11 + $0x1c4] sm:$0xf]
    %v6761 = vld [vmem:[%s11 + $0x1c8] sm:$0xf]
    %v6762 = vld [vmem:[%s11 + $0x1cc] sm:$0xf]
    %v6763 = vld [vmem:[%s11 + $0x1d0] sm:$0xf]
    %v6764 = vld [vmem:[%s11 + $0x1d4] sm:$0xf]
    %v6765 = vld [vmem:[%s11 + $0x1d8] sm:$0xf]
    %v6766 = vld [vmem:[%s11 + $0x1dc] sm:$0xf]
    %v6767 = vld [vmem:[%s11 + $0x1e0] sm:$0xf]
    %v6768 = vld [vmem:[%s11 + $0x1e4] sm:$0xf]
    %v6769 = vld [vmem:[%s11 + $0x1e8] sm:$0xf]
    %v6770 = vld [vmem:[%s11 + $0x1ec] sm:$0xf]
    %v6771 = vld [vmem:[%s11 + $0x1f0] sm:$0xf]
    %v6772 = vld [vmem:[%s11 + $0x1f4] sm:$0xf]
    %v6773 = vld [vmem:[%s11 + $0x1f8] sm:$0xf]
    %v6774 = vld [vmem:[%s11 + $0x1fc] sm:$0xf]
    %v6775 = vld [vmem:[#allocation19] sm:$0x1]
    %v6777 = vlaneseq
    %v6778 = vshrl.u32 %v6777, 7
    %v6779 = vsub.s32 0, %v6778
    %v6780 = vrot.slane %v6775, %v6779
    %v6910 = vunpack.c.l.b16 %v6647
    %v6911 = vunpack.c.l.b16 %v6648
    %v6912 = vunpack.c.l.b16 %v6649
    %v6913 = vunpack.c.l.b16 %v6650
    %v6914 = vunpack.c.l.b16 %v6651
    %v6915 = vunpack.c.l.b16 %v6652
    %v6916 = vunpack.c.l.b16 %v6653
    %v6917 = vunpack.c.l.b16 %v6654
    %v6918 = vunpack.c.l.b16 %v6655
    %v6919 = vunpack.c.l.b16 %v6656
    %v6920 = vunpack.c.l.b16 %v6657
    %v6921 = vunpack.c.l.b16 %v6658
    %v6922 = vunpack.c.l.b16 %v6659
    %v6923 = vunpack.c.l.b16 %v6660
    %v6924 = vunpack.c.l.b16 %v6661
    %v6925 = vunpack.c.l.b16 %v6662
    %v6926 = vunpack.c.l.b16 %v6663
    %v6927 = vunpack.c.l.b16 %v6664
    %v6928 = vunpack.c.l.b16 %v6665
    %v6929 = vunpack.c.l.b16 %v6666
    %v6930 = vunpack.c.l.b16 %v6667
    %v6931 = vunpack.c.l.b16 %v6668
    %v6932 = vunpack.c.l.b16 %v6669
    %v6933 = vunpack.c.l.b16 %v6670
    %v6934 = vunpack.c.l.b16 %v6671
    %v6935 = vunpack.c.l.b16 %v6672
    %v6936 = vunpack.c.l.b16 %v6673
    %v6937 = vunpack.c.l.b16 %v6674
    %v6938 = vunpack.c.l.b16 %v6675
    %v6939 = vunpack.c.l.b16 %v6676
    %v6940 = vunpack.c.l.b16 %v6677
    %v6941 = vunpack.c.l.b16 %v6678
    %v6942 = vunpack.c.l.b16 %v6679
    %v6943 = vunpack.c.l.b16 %v6680
    %v6944 = vunpack.c.l.b16 %v6681
    %v6945 = vunpack.c.l.b16 %v6682
    %v6946 = vunpack.c.l.b16 %v6683
    %v6947 = vunpack.c.l.b16 %v6684
    %v6948 = vunpack.c.l.b16 %v6685
    %v6949 = vunpack.c.l.b16 %v6686
    %v6950 = vunpack.c.l.b16 %v6687
    %v6951 = vunpack.c.l.b16 %v6688
    %v6952 = vunpack.c.l.b16 %v6689
    %v6953 = vunpack.c.l.b16 %v6690
    %v6954 = vunpack.c.l.b16 %v6691
    %v6955 = vunpack.c.l.b16 %v6692
    %v6956 = vunpack.c.l.b16 %v6693
    %v6957 = vunpack.c.l.b16 %v6694
    %v6958 = vunpack.c.l.b16 %v6695
    %v6959 = vunpack.c.l.b16 %v6696
    %v6960 = vunpack.c.l.b16 %v6697
    %v6961 = vunpack.c.l.b16 %v6698
    %v6962 = vunpack.c.l.b16 %v6699
    %v6963 = vunpack.c.l.b16 %v6700
    %v6964 = vunpack.c.l.b16 %v6701
    %v6965 = vunpack.c.l.b16 %v6702
    %v6966 = vunpack.c.l.b16 %v6703
    %v6967 = vunpack.c.l.b16 %v6704
    %v6968 = vunpack.c.l.b16 %v6705
    %v6969 = vunpack.c.l.b16 %v6706
    %v6970 = vunpack.c.l.b16 %v6707
    %v6971 = vunpack.c.l.b16 %v6708
    %v6972 = vunpack.c.l.b16 %v6709
    %v6973 = vunpack.c.l.b16 %v6710
    %v6974 = vunpack.c.l.b16 %v6711
    %v6975 = vunpack.c.l.b16 %v6712
    %v6976 = vunpack.c.l.b16 %v6713
    %v6977 = vunpack.c.l.b16 %v6714
    %v6978 = vunpack.c.l.b16 %v6715
    %v6979 = vunpack.c.l.b16 %v6716
    %v6980 = vunpack.c.l.b16 %v6717
    %v6981 = vunpack.c.l.b16 %v6718
    %v6982 = vunpack.c.l.b16 %v6719
    %v6983 = vunpack.c.l.b16 %v6720
    %v6984 = vunpack.c.l.b16 %v6721
    %v6985 = vunpack.c.l.b16 %v6722
    %v6986 = vunpack.c.l.b16 %v6723
    %v6987 = vunpack.c.l.b16 %v6724
    %v6988 = vunpack.c.l.b16 %v6725
    %v6989 = vunpack.c.l.b16 %v6726
    %v6990 = vunpack.c.l.b16 %v6727
    %v6991 = vunpack.c.l.b16 %v6728
    %v6992 = vunpack.c.l.b16 %v6729
    %v6993 = vunpack.c.l.b16 %v6730
    %v6994 = vunpack.c.l.b16 %v6731
    %v6995 = vunpack.c.l.b16 %v6732
    %v6996 = vunpack.c.l.b16 %v6733
    %v6997 = vunpack.c.l.b16 %v6734
    %v6998 = vunpack.c.l.b16 %v6735
    %v6999 = vunpack.c.l.b16 %v6736
    %v7000 = vunpack.c.l.b16 %v6737
    %v7001 = vunpack.c.l.b16 %v6738
    %v7002 = vunpack.c.l.b16 %v6739
    %v7003 = vunpack.c.l.b16 %v6740
    %v7004 = vunpack.c.l.b16 %v6741
    %v7005 = vunpack.c.l.b16 %v6742
    %v7006 = vunpack.c.l.b16 %v6743
    %v7007 = vunpack.c.l.b16 %v6744
    %v7008 = vunpack.c.l.b16 %v6745
    %v7009 = vunpack.c.l.b16 %v6746
    %v7010 = vunpack.c.l.b16 %v6747
    %v7011 = vunpack.c.l.b16 %v6748
    %v7012 = vunpack.c.l.b16 %v6749
    %v7013 = vunpack.c.l.b16 %v6750
    %v7014 = vunpack.c.l.b16 %v6751
    %v7015 = vunpack.c.l.b16 %v6752
    %v7016 = vunpack.c.l.b16 %v6753
    %v7017 = vunpack.c.l.b16 %v6754
    %v7018 = vunpack.c.l.b16 %v6755
    %v7019 = vunpack.c.l.b16 %v6756
    %v7020 = vunpack.c.l.b16 %v6757
    %v7021 = vunpack.c.l.b16 %v6758
    %v7022 = vunpack.c.l.b16 %v6759
    %v7023 = vunpack.c.l.b16 %v6760
    %v7024 = vunpack.c.l.b16 %v6761
    %v7025 = vunpack.c.l.b16 %v6762
    %v7026 = vunpack.c.l.b16 %v6763
    %v7027 = vunpack.c.l.b16 %v6764
    %v7028 = vunpack.c.l.b16 %v6765
    %v7029 = vunpack.c.l.b16 %v6766
    %v7030 = vunpack.c.l.b16 %v6767
    %v7031 = vunpack.c.l.b16 %v6768
    %v7032 = vunpack.c.l.b16 %v6769
    %v7033 = vunpack.c.l.b16 %v6770
    %v7034 = vunpack.c.l.b16 %v6771
    %v7035 = vunpack.c.l.b16 %v6772
    %v7036 = vunpack.c.l.b16 %v6773
    %v7037 = vunpack.c.l.b16 %v6774
    %v7038 = vpack.c.b16 %v6911, %v6910
    %v7039 = vpack.c.b16 %v6913, %v6912
    %v7040 = vpack.c.b16 %v6915, %v6914
    %v7041 = vpack.c.b16 %v6917, %v6916
    %v7042 = vpack.c.b16 %v6919, %v6918
    %v7043 = vpack.c.b16 %v6921, %v6920
    %v7044 = vpack.c.b16 %v6923, %v6922
    %v7045 = vpack.c.b16 %v6925, %v6924
    %v7046 = vpack.c.b16 %v6927, %v6926
    %v7047 = vpack.c.b16 %v6929, %v6928
    %v7048 = vpack.c.b16 %v6931, %v6930
    %v7049 = vpack.c.b16 %v6933, %v6932
    %v7050 = vpack.c.b16 %v6935, %v6934
    %v7051 = vpack.c.b16 %v6937, %v6936
    %v7052 = vpack.c.b16 %v6939, %v6938
    %v7053 = vpack.c.b16 %v6941, %v6940
    %v7054 = vpack.c.b16 %v6943, %v6942
    %v7055 = vpack.c.b16 %v6945, %v6944
    %v7056 = vpack.c.b16 %v6947, %v6946
    %v7057 = vpack.c.b16 %v6949, %v6948
    %v7058 = vpack.c.b16 %v6951, %v6950
    %v7059 = vpack.c.b16 %v6953, %v6952
    %v7060 = vpack.c.b16 %v6955, %v6954
    %v7061 = vpack.c.b16 %v6957, %v6956
    %v7062 = vpack.c.b16 %v6959, %v6958
    %v7063 = vpack.c.b16 %v6961, %v6960
    %v7064 = vpack.c.b16 %v6963, %v6962
    %v7065 = vpack.c.b16 %v6965, %v6964
    %v7066 = vpack.c.b16 %v6967, %v6966
    %v7067 = vpack.c.b16 %v6969, %v6968
    %v7068 = vpack.c.b16 %v6971, %v6970
    %v7069 = vpack.c.b16 %v6973, %v6972
    %v7070 = vpack.c.b16 %v6975, %v6974
    %v7071 = vpack.c.b16 %v6977, %v6976
    %v7072 = vpack.c.b16 %v6979, %v6978
    %v7073 = vpack.c.b16 %v6981, %v6980
    %v7074 = vpack.c.b16 %v6983, %v6982
    %v7075 = vpack.c.b16 %v6985, %v6984
    %v7076 = vpack.c.b16 %v6987, %v6986
    %v7077 = vpack.c.b16 %v6989, %v6988
    %v7078 = vpack.c.b16 %v6991, %v6990
    %v7079 = vpack.c.b16 %v6993, %v6992
    %v7080 = vpack.c.b16 %v6995, %v6994
    %v7081 = vpack.c.b16 %v6997, %v6996
    %v7082 = vpack.c.b16 %v6999, %v6998
    %v7083 = vpack.c.b16 %v7001, %v7000
    %v7084 = vpack.c.b16 %v7003, %v7002
    %v7085 = vpack.c.b16 %v7005, %v7004
    %v7086 = vpack.c.b16 %v7007, %v7006
    %v7087 = vpack.c.b16 %v7009, %v7008
    %v7088 = vpack.c.b16 %v7011, %v7010
    %v7089 = vpack.c.b16 %v7013, %v7012
    %v7090 = vpack.c.b16 %v7015, %v7014
    %v7091 = vpack.c.b16 %v7017, %v7016
    %v7092 = vpack.c.b16 %v7019, %v7018
    %v7093 = vpack.c.b16 %v7021, %v7020
    %v7094 = vpack.c.b16 %v7023, %v7022
    %v7095 = vpack.c.b16 %v7025, %v7024
    %v7096 = vpack.c.b16 %v7027, %v7026
    %v7097 = vpack.c.b16 %v7029, %v7028
    %v7098 = vpack.c.b16 %v7031, %v7030
    %v7099 = vpack.c.b16 %v7033, %v7032
    %v7100 = vpack.c.b16 %v7035, %v7034
    %v7101 = vpack.c.b16 %v7037, %v7036
    %7166 = vmatprep.subr.bf16.mxu0 0
    %7167 = vmatpush1.bf16.msra.mxu0 %v7038
    %7168 = vmatprep.subr.bf16.mxu0 0
    %7169 = vmatpush1.bf16.msra.mxu0 %v7039
    %7170 = vmatprep.subr.bf16.mxu0 0
    %7171 = vmatpush1.bf16.msra.mxu0 %v7040
    %7172 = vmatprep.subr.bf16.mxu0 0
    %7173 = vmatpush1.bf16.msra.mxu0 %v7041
    %7174 = vmatprep.subr.bf16.mxu0 0
    %7175 = vmatpush1.bf16.msra.mxu0 %v7042
    %7176 = vmatprep.subr.bf16.mxu0 0
    %7177 = vmatpush1.bf16.msra.mxu0 %v7043
    %7178 = vmatprep.subr.bf16.mxu0 0
    %7179 = vmatpush1.bf16.msra.mxu0 %v7044
    %7180 = vmatprep.subr.bf16.mxu0 0
    %7181 = vmatpush1.bf16.msra.mxu0 %v7045
    %7182 = vmatprep.subr.bf16.mxu0 0
    %7183 = vmatpush1.bf16.msra.mxu0 %v7046
    %7184 = vmatprep.subr.bf16.mxu0 0
    %7185 = vmatpush1.bf16.msra.mxu0 %v7047
    %7186 = vmatprep.subr.bf16.mxu0 0
    %7187 = vmatpush1.bf16.msra.mxu0 %v7048
    %7188 = vmatprep.subr.bf16.mxu0 0
    %7189 = vmatpush1.bf16.msra.mxu0 %v7049
    %7190 = vmatprep.subr.bf16.mxu0 0
    %7191 = vmatpush1.bf16.msra.mxu0 %v7050
    %7192 = vmatprep.subr.bf16.mxu0 0
    %7193 = vmatpush1.bf16.msra.mxu0 %v7051
    %7194 = vmatprep.subr.bf16.mxu0 0
    %7195 = vmatpush1.bf16.msra.mxu0 %v7052
    %7196 = vmatprep.subr.bf16.mxu0 0
    %7197 = vmatpush1.bf16.msra.mxu0 %v7053
    %7198 = vmatprep.mubr.bf16.mxu0 %v6640
    %7199 = vmatmul.mubr.bf16.gmra.mrb[0].mxu0 %v6639
    %v7200 = vpop.f32.mrb[0].mxu0
    %v7201 = vadd.f32 %v6780, %v7200
    %v7202 = vpop.f32.mrb[0].mxu0
    %v7203 = vpop.f32.mrb[0].mxu0
    %v7204 = vpop.f32.mrb[0].mxu0
    %7205 = vdwg.mxu0
    %7206 = vmatprep.subr.bf16.mxu0 0
    %7207 = vmatpush1.bf16.msra.mxu0 %v7054
    %7208 = vmatprep.subr.bf16.mxu0 0
    %7209 = vmatpush1.bf16.msra.mxu0 %v7055
    %7210 = vmatprep.subr.bf16.mxu0 0
    %7211 = vmatpush1.bf16.msra.mxu0 %v7056
    %7212 = vmatprep.subr.bf16.mxu0 0
    %7213 = vmatpush1.bf16.msra.mxu0 %v7057
    %7214 = vmatprep.subr.bf16.mxu0 0
    %7215 = vmatpush1.bf16.msra.mxu0 %v7058
    %7216 = vmatprep.subr.bf16.mxu0 0
    %7217 = vmatpush1.bf16.msra.mxu0 %v7059
    %7218 = vmatprep.subr.bf16.mxu0 0
    %7219 = vmatpush1.bf16.msra.mxu0 %v7060
    %7220 = vmatprep.subr.bf16.mxu0 0
    %7221 = vmatpush1.bf16.msra.mxu0 %v7061
    %7222 = vmatprep.subr.bf16.mxu0 0
    %7223 = vmatpush1.bf16.msra.mxu0 %v7062
    %7224 = vmatprep.subr.bf16.mxu0 0
    %7225 = vmatpush1.bf16.msra.mxu0 %v7063
    %7226 = vmatprep.subr.bf16.mxu0 0
    %7227 = vmatpush1.bf16.msra.mxu0 %v7064
    %7228 = vmatprep.subr.bf16.mxu0 0
    %7229 = vmatpush1.bf16.msra.mxu0 %v7065
    %7230 = vmatprep.subr.bf16.mxu0 0
    %7231 = vmatpush1.bf16.msra.mxu0 %v7066
    %7232 = vmatprep.subr.bf16.mxu0 0
    %7233 = vmatpush1.bf16.msra.mxu0 %v7067
    %7234 = vmatprep.subr.bf16.mxu0 0
    %7235 = vmatpush1.bf16.msra.mxu0 %v7068
    %7236 = vmatprep.subr.bf16.mxu0 0
    %7237 = vmatpush1.bf16.msra.mxu0 %v7069
    %7238 = vmatprep.mubr.bf16.mxu0 %v6642
    %7239 = vmatmul.mubr.bf16.gmra.mrb[0].mxu0 %v6641
    %v7240 = vpop.f32.mrb[0].mxu0
    %v7241 = vadd.f32 %v7201, %v7240
    %v7242 = vpop.f32.mrb[0].mxu0
    %v7243 = vpop.f32.mrb[0].mxu0
    %v7244 = vpop.f32.mrb[0].mxu0
    %7245 = vdwg.mxu0
    %7246 = vmatprep.subr.bf16.mxu0 0
    %7247 = vmatpush1.bf16.msra.mxu0 %v7070
    %7248 = vmatprep.subr.bf16.mxu0 0
    %7249 = vmatpush1.bf16.msra.mxu0 %v7071
    %7250 = vmatprep.subr.bf16.mxu0 0
    %7251 = vmatpush1.bf16.msra.mxu0 %v7072
    %7252 = vmatprep.subr.bf16.mxu0 0
    %7253 = vmatpush1.bf16.msra.mxu0 %v7073
    %7254 = vmatprep.subr.bf16.mxu0 0
    %7255 = vmatpush1.bf16.msra.mxu0 %v7074
    %7256 = vmatprep.subr.bf16.mxu0 0
    %7257 = vmatpush1.bf16.msra.mxu0 %v7075
    %7258 = vmatprep.subr.bf16.mxu0 0
    %7259 = vmatpush1.bf16.msra.mxu0 %v7076
    %7260 = vmatprep.subr.bf16.mxu0 0
    %7261 = vmatpush1.bf16.msra.mxu0 %v7077
    %7262 = vmatprep.subr.bf16.mxu0 0
    %7263 = vmatpush1.bf16.msra.mxu0 %v7078
    %7264 = vmatprep.subr.bf16.mxu0 0
    %7265 = vmatpush1.bf16.msra.mxu0 %v7079
    %7266 = vmatprep.subr.bf16.mxu0 0
    %7267 = vmatpush1.bf16.msra.mxu0 %v7080
    %7268 = vmatprep.subr.bf16.mxu0 0
    %7269 = vmatpush1.bf16.msra.mxu0 %v7081
    %7270 = vmatprep.subr.bf16.mxu0 0
    %7271 = vmatpush1.bf16.msra.mxu0 %v7082
    %7272 = vmatprep.subr.bf16.mxu0 0
    %7273 = vmatpush1.bf16.msra.mxu0 %v7083
    %7274 = vmatprep.subr.bf16.mxu0 0
    %7275 = vmatpush1.bf16.msra.mxu0 %v7084
    %7276 = vmatprep.subr.bf16.mxu0 0
    %7277 = vmatpush1.bf16.msra.mxu0 %v7085
    %7278 = vmatprep.mubr.bf16.mxu0 %v6644
    %7279 = vmatmul.mubr.bf16.gmra.mrb[0].mxu0 %v6643
    %v7280 = vpop.f32.mrb[0].mxu0
    %v7281 = vadd.f32 %v7241, %v7280
    %v7282 = vpop.f32.mrb[0].mxu0
    %v7283 = vpop.f32.mrb[0].mxu0
    %v7284 = vpop.f32.mrb[0].mxu0
    %7285 = vdwg.mxu0
    %7286 = vmatprep.subr.bf16.mxu0 0
    %7287 = vmatpush1.bf16.msra.mxu0 %v7086
    %7288 = vmatprep.subr.bf16.mxu0 0
    %7289 = vmatpush1.bf16.msra.mxu0 %v7087
    %7290 = vmatprep.subr.bf16.mxu0 0
    %7291 = vmatpush1.bf16.msra.mxu0 %v7088
    %7292 = vmatprep.subr.bf16.mxu0 0
    %7293 = vmatpush1.bf16.msra.mxu0 %v7089
    %7294 = vmatprep.subr.bf16.mxu0 0
    %7295 = vmatpush1.bf16.msra.mxu0 %v7090
    %7296 = vmatprep.subr.bf16.mxu0 0
    %7297 = vmatpush1.bf16.msra.mxu0 %v7091
    %7298 = vmatprep.subr.bf16.mxu0 0
    %7299 = vmatpush1.bf16.msra.mxu0 %v7092
    %7300 = vmatprep.subr.bf16.mxu0 0
    %7301 = vmatpush1.bf16.msra.mxu0 %v7093
    %7302 = vmatprep.subr.bf16.mxu0 0
    %7303 = vmatpush1.bf16.msra.mxu0 %v7094
    %7304 = vmatprep.subr.bf16.mxu0 0
    %7305 = vmatpush1.bf16.msra.mxu0 %v7095
    %7306 = vmatprep.subr.bf16.mxu0 0
    %7307 = vmatpush1.bf16.msra.mxu0 %v7096
    %7308 = vmatprep.subr.bf16.mxu0 0
    %7309 = vmatpush1.bf16.msra.mxu0 %v7097
    %7310 = vmatprep.subr.bf16.mxu0 0
    %7311 = vmatpush1.bf16.msra.mxu0 %v7098
    %7312 = vmatprep.subr.bf16.mxu0 0
    %7313 = vmatpush1.bf16.msra.mxu0 %v7099
    %7314 = vmatprep.subr.bf16.mxu0 0
    %7315 = vmatpush1.bf16.msra.mxu0 %v7100
    %7316 = vmatprep.subr.bf16.mxu0 0
    %7317 = vmatpush1.bf16.msra.mxu0 %v7101
    %7318 = vmatprep.mubr.bf16.mxu0 %v6646
    %7319 = vmatmul.mubr.bf16.gmra.mrb[0].mxu0 %v6645
    %v7320 = vpop.f32.mrb[0].mxu0
    %v7321 = vadd.f32 %v7281, %v7320
    %v7322 = vpop.f32.mrb[0].mxu0
    %v7323 = vpop.f32.mrb[0].mxu0
    %v7324 = vpop.f32.mrb[0].mxu0
    %7325 = vdwg.mxu0
    %vm7326 = vcmask 25600
    %7327 = vst.msk [vmem:[#allocation20] sm:$0x3] %vm7326, %v7321
    // Predicated region
    $region98: #{dueling_dqn_forward.1} parent=1 // pred_check
      _
    $region99: #{dueling_dqn_forward.1} parent=1 // pred_check_branch
      %7329 = sbr.rel (0) target = $region101
    $region100: #{dueling_dqn_forward.1} parent=1 // pred_region
      %s7331 = ssub.s32 32, 32
      %7332 = vsyncadd [#allocation4], %s7331
      %s7334 = sshll.u32 [#allocation20], 4
      %s7335 = int_to_ptr.vmem [resolvable:$true] %s7334
      %7337 = dma.vmem_to_hbm [thread:$0]  %s7335, 32, %s13, [#allocation4]
    $region101: #{dueling_dqn_forward.1} parent=1 // pred_fallthru
      _
    // Predicated region
    $region102: #{dueling_dqn_forward.1} parent=1 // pred_check
      _
    $region103: #{dueling_dqn_forward.1} parent=1 // pred_check_branch
      %7339 = sbr.rel (0) target = $region105
    $region104: #{dueling_dqn_forward.1} parent=1 // pred_region
      %7340 = dma.done [#allocation4], 32
    $region105: #{dueling_dqn_forward.1} parent=1 // pred_fallthru
      _
    %7341 = vsyncpa [#allocation3], 1
    %7342 = vsyncpa [#allocation6], 1
    %7343 = vsyncpa [#allocation9], 1
    %7344 = vsyncpa [#allocation12], 1
    %7345 = vsyncpa [#allocation15], 1
    %7346 = vsyncpa [#allocation18], 1
    %7347 = vsyncpa [#allocation4], 1

</llo_original>
